<compile_context>
chip_gen: v6e
topology: v6e:2x2x1
jax: 0.10.0
libtpu: 0.0.40
codegen_flags: <defaults>
</compile_context>

<pallas_src>
import functools

import jax
import jax.numpy as jnp
from jax.experimental import pallas as pl
from jax.experimental.pallas import tpu as pltpu

LN_EPS = 1e-5                       # nn.LayerNorm default eps
_INV_SQRT2 = 0.7071067811865476
_RES_SCALE = 1.0 / 1.414            # module hardcodes `/ 1.414` (mul by recip, ~1 ulp)


def _gelu_exact(x):
    # PyTorch nn.GELU() default: exact erf-based GELU (kept in f32).
    return 0.5 * x * (1.0 + jax.lax.erf(x * _INV_SQRT2))


def _layernorm(h, gamma, beta):
    # Two-pass statistics (subtract the row mean first) -- numerically safer
    # than E[x^2]-E[x]^2. All f32.
    mu = jnp.mean(h, axis=-1, keepdims=True)
    d = h - mu
    var = jnp.mean(d * d, axis=-1, keepdims=True)
    return d * jax.lax.rsqrt(var + LN_EPS) * gamma + beta


# ---------------------------------------------------------------------------
# Fused kernel: both weights resident in VMEM, bf16 row tiles of x stream.
# Packed vector rows: 0=b1 1=g1 2=be1 3=b2 4=g2 5=be2 (rows 6,7 padding).
# ---------------------------------------------------------------------------
def _fused_kernel(x_ref, w1_ref, w2_ref, vec_ref, o_ref, *, is_res, same_features):
    x_bf = x_ref[...]                                          # (tile_n, in_f) bf16

    # linear1 -> LayerNorm -> GELU   (bf16 MXU inputs, f32 accumulation)
    h1 = jnp.dot(x_bf, w1_ref[...],
                 preferred_element_type=jnp.float32) + vec_ref[0:1, :]
    x1 = _gelu_exact(_layernorm(h1, vec_ref[1:2, :], vec_ref[2:3, :]))

    # linear2 -> LayerNorm -> GELU
    h2 = jnp.dot(x1.astype(jnp.bfloat16), w2_ref[...],
                 preferred_element_type=jnp.float32) + vec_ref[3:4, :]
    x2 = _gelu_exact(_layernorm(h2, vec_ref[4:5, :], vec_ref[5:6, :]))

    if is_res:
        base = x_bf.astype(jnp.float32) if same_features else x1
        out = (base + x2) * _RES_SCALE
    else:
        out = x2
    o_ref[...] = out.astype(o_ref.dtype)


# ---------------------------------------------------------------------------
# Fallback kernel (v7x, huge F): one linear + LayerNorm + GELU, K-tiled weight,
# f32 accumulator scratch over an "arbitrary" K grid axis.
# ---------------------------------------------------------------------------
def _lin_ln_gelu_kernel(x_ref, w_ref, vec_ref, o_ref, acc_ref, *, vec_row):
    k = pl.program_id(1)

    @pl.when(k == 0)
    def _():
        acc_ref[...] = jnp.zeros_like(acc_ref)

    acc_ref[...] += jnp.dot(x_ref[...], w_ref[...],
                            preferred_element_type=jnp.float32)

    @pl.when(k == pl.num_programs(1) - 1)
    def _():
        h = acc_ref[...] + vec_ref[vec_row:vec_row + 1, :]
        h = _layernorm(h, vec_ref[vec_row + 1:vec_row + 2, :],
                       vec_ref[vec_row + 2:vec_row + 3, :])
        o_ref[...] = _gelu_exact(h).astype(o_ref.dtype)


# ---------------------------------------------------------------------------
# Helpers
# ---------------------------------------------------------------------------
def _round_up(v, m):
    return (v + m - 1) // m * m


def _tpu_vmem_and_cores():
    """(per-core VMEM bytes, TensorCores per chip) -- generation aware."""
    kind = ""
    try:
        kind = jax.devices()[0].device_kind.lower()
    except Exception:
        pass
    is_v7 = "7" in kind
    num_tc = 2 if (is_v7 or "v4" in kind or "v5p" in kind) else 1
    vmem = (64 << 20) if is_v7 else (128 << 20)
    try:
        info = pltpu.get_tpu_info()
        vmem = int(getattr(info, "vmem_capacity_bytes", vmem)) or vmem
    except Exception:
        pass
    return vmem, num_tc


def _resident_spec(shape, index_map, single_buffer):
    """Constant-index (resident) BlockSpec; single-buffered when supported."""
    if single_buffer:
        return pl.BlockSpec(shape, index_map, pipeline_mode=pl.Buffered(1))
    return pl.BlockSpec(shape, index_map)


def _choose_tile_n(n, in_f, out_f, vmem_budget, resident_bytes, num_tc):
    """Largest row tile (up to 1024) whose streamed buffers fit the budget."""
    limit = max(8, _round_up(n, 8))
    tile = 128
    for cand in (1024, 512, 256, 128):
        act = cand * (2 * 2 * in_f                # bf16 x tile, double-buffered
                      + 2 * 4 * out_f             # f32 out tile, double-buffered
                      + 4 * (in_f + 4 * out_f))   # slack for in-kernel f32 temps
        if resident_bytes + act <= vmem_budget:
            tile = cand
            break
    tile = min(tile, limit)
    if num_tc > 1:
        # keep >= num_tc grid steps so every TensorCore gets work (v7x only)
        while tile > 8 and pl.cdiv(n, tile) < num_tc:
            tile = max(8, _round_up(tile // 2, 8))
    return tile


def _choose_tile_k(in_f):
    for cand in (512, 256, 128):
        if in_f % cand == 0:
            return cand
    return in_f


def _choose_split_tile_n(n, tile_k, out_f, vmem_budget, num_tc):
    limit = max(8, _round_up(n, 8))
    tile = 128
    for cand in (512, 256, 128):
        need = (2 * 2 * cand * tile_k       # bf16 x tile, 2 bufs
                + 2 * 2 * tile_k * out_f    # bf16 w tile, 2 bufs
                + 2 * 4 * cand * out_f      # out tile, 2 bufs (<= f32)
                + 4 * cand * out_f          # f32 accumulator scratch
                + 4 * 8 * out_f)            # packed vectors
        if need <= vmem_budget:
            tile = cand
            break
    tile = min(tile, limit)
    if num_tc > 1:
        while tile > 8 and pl.cdiv(n, tile) < num_tc:
            tile = max(8, _round_up(tile // 2, 8))
    return tile


def _lin_ln_gelu(x_bf, w_bf, vecs, vec_row, *, out_dtype, vmem_budget, vmem_limit,
                 num_tc, single_buffer):
    """One linear + LayerNorm + GELU with K-tiled weights (fallback path)."""
    n, in_f = x_bf.shape
    out_f = w_bf.shape[1]
    tile_k = _choose_tile_k(in_f)
    grid_k = in_f // tile_k
    tile_n = _choose_split_tile_n(n, tile_k, out_f, vmem_budget, num_tc)
    grid_n = pl.cdiv(n, tile_n)
    if num_tc > 1:
        grid_n = _round_up(grid_n, num_tc)
    n_pad = grid_n * tile_n
    x_in = x_bf if n_pad == n else jnp.pad(x_bf, ((0, n_pad - n), (0, 0)))

    out_bytes = 4 if out_dtype == jnp.float32 else 2
    cost = pl.CostEstimate(
        flops=2 * n_pad * in_f * out_f + 20 * n_pad * out_f,
        transcendentals=n_pad * out_f,
        bytes_accessed=2 * n_pad * in_f + 2 * grid_n * in_f * out_f
                       + out_bytes * n_pad * out_f + 4 * 8 * out_f,
    )

    out = pl.pallas_call(
        functools.partial(_lin_ln_gelu_kernel, vec_row=vec_row),
        out_shape=jax.ShapeDtypeStruct((n_pad, out_f), out_dtype),
        grid_spec=pltpu.PrefetchScalarGridSpec(
            num_scalar_prefetch=0,
            grid=(grid_n, grid_k),
            in_specs=[
                pl.BlockSpec((tile_n, tile_k), lambda i, k: (i, k)),   # x (bf16)
                pl.BlockSpec((tile_k, out_f), lambda i, k: (k, 0)),    # w (K-tiled)
                _resident_spec((8, out_f), lambda i, k: (0, 0), single_buffer),
            ],
            out_specs=pl.BlockSpec((tile_n, out_f), lambda i, k: (i, 0)),
            scratch_shapes=[pltpu.VMEM((tile_n, out_f), jnp.float32)],
        ),
        compiler_params=pltpu.CompilerParams(
            dimension_semantics=("parallel", "arbitrary"),
            vmem_limit_bytes=vmem_limit,
        ),
        cost_estimate=cost,
    )(x_in, w_bf, vecs)
    return out if n_pad == n else out[:n]


def _forward(x, params, *, is_res, force_split, single_buffer):
    n, in_f = x.shape
    out_f = params["w1"].shape[1]
    same_features = in_f == out_f
    out_dtype = x.dtype

    vmem_phys, num_tc = _tpu_vmem_and_cores()
    vmem_budget = int(0.85 * vmem_phys)       # headroom for Mosaic scratch/semaphores
    vmem_limit = vmem_budget

    # bf16 weights + activations feed the MXU natively and halve HBM/VMEM
    # traffic; LN / GELU / residual math stays f32 inside the kernels.
    w1 = params["w1"].astype(jnp.bfloat16)
    w2 = params["w2"].astype(jnp.bfloat16)
    x_bf = x.astype(jnp.bfloat16)

    # Pack the six (1,out_f) bias/gamma/beta vectors into one resident (8,out_f).
    vecs = jnp.concatenate(
        [params["b1"], params["g1"], params["be1"],
         params["b2"], params["g2"], params["be2"],
         jnp.zeros((2, out_f), jnp.float32)], axis=0)

    wbuf = 1 if single_buffer else 2
    resident_bytes = wbuf * (2 * (in_f * out_f + out_f * out_f) + 4 * 8 * out_f)
    weights_fit = resident_bytes <= vmem_budget // 2

    if weights_fit and not force_split:
        tile_n = _choose_tile_n(n, in_f, out_f, vmem_budget, resident_bytes, num_tc)
        grid_n = pl.cdiv(n, tile_n)
        if num_tc > 1:
            grid_n = _round_up(grid_n, num_tc)    # equal work on both v7x TCs
        n_pad = grid_n * tile_n
        x_in = x_bf if n_pad == n else jnp.pad(x_bf, ((0, n_pad - n), (0, 0)))

        cost = pl.CostEstimate(
            flops=2 * n_pad * out_f * (in_f + out_f) + 40 * n_pad * out_f,
            transcendentals=2 * n_pad * out_f,
            bytes_accessed=2 * n_pad * in_f + 4 * n_pad * out_f
                           + 2 * (in_f * out_f + out_f * out_f) + 4 * 8 * out_f,
        )

        out = pl.pallas_call(
            functools.partial(_fused_kernel, is_res=is_res,
                              same_features=same_features),
            out_shape=jax.ShapeDtypeStruct((n_pad, out_f), out_dtype),
            grid_spec=pltpu.PrefetchScalarGridSpec(
                num_scalar_prefetch=0,
                grid=(grid_n,),
                in_specs=[
                    pl.BlockSpec((tile_n, in_f), lambda i: (i, 0)),           # x rows
                    _resident_spec((in_f, out_f), lambda i: (0, 0), single_buffer),
                    _resident_spec((out_f, out_f), lambda i: (0, 0), single_buffer),
                    _resident_spec((8, out_f), lambda i: (0, 0), single_buffer),
                ],
                out_specs=pl.BlockSpec((tile_n, out_f), lambda i: (i, 0)),
            ),
            compiler_params=pltpu.CompilerParams(
                dimension_semantics=("parallel",),
                vmem_limit_bytes=vmem_limit,
            ),
            cost_estimate=cost,
        )(x_in, w1, w2, vecs)
        return out if n_pad == n else out[:n]

    # ---- fallback (e.g. v7x at F>=2048: resident weights would not fit) ----
    x1 = _lin_ln_gelu(x_bf, w1, vecs, 0, out_dtype=jnp.bfloat16,
                      vmem_budget=vmem_budget, vmem_limit=vmem_limit,
                      num_tc=num_tc, single_buffer=single_buffer)
    x2 = _lin_ln_gelu(x1, w2, vecs, 3, out_dtype=jnp.float32,
                      vmem_budget=vmem_budget, vmem_limit=vmem_limit,
                      num_tc=num_tc, single_buffer=single_buffer)
    if is_res:
        base = x_bf if same_features else x1
        out = (base.astype(jnp.float32) + x2) * _RES_SCALE
    else:
        out = x2
    return out.astype(out_dtype)


def residual_linear_block(x, params, *, is_res=False, force_split=False):
    """Pallas forward of ResidualLinearBlock. x: (N, in_features) float32."""
    try:
        return _forward(x, params, is_res=is_res, force_split=force_split,
                        single_buffer=True)
    except Exception:
        # pipeline_mode=pl.Buffered(1) not supported by this jax/Mosaic build:
        # retry with default (double-buffered) resident BlockSpecs.
        return _forward(x, params, is_res=is_res, force_split=force_split,
                        single_buffer=False)


def init_params(key, in_features, out_features):
    ks = jax.random.split(key, 8)
    s1 = 1.0 / jnp.sqrt(in_features)
    s2 = 1.0 / jnp.sqrt(out_features)
    return {
        "w1": jax.random.uniform(ks[0], (in_features, out_features), jnp.float32, -s1, s1),
        "b1": jax.random.uniform(ks[1], (1, out_features), jnp.float32, -s1, s1),
        "g1": 1.0 + 0.1 * jax.random.normal(ks[2], (1, out_features), jnp.float32),
        "be1": 0.1 * jax.random.normal(ks[3], (1, out_features), jnp.float32),
        "w2": jax.random.uniform(ks[4], (out_features, out_features), jnp.float32, -s2, s2),
        "b2": jax.random.uniform(ks[5], (1, out_features), jnp.float32, -s2, s2),
        "g2": 1.0 + 0.1 * jax.random.normal(ks[6], (1, out_features), jnp.float32),
        "be2": 0.1 * jax.random.normal(ks[7], (1, out_features), jnp.float32),
    }


def reference(x, p, *, is_res, same_features, matmul_dtype=jnp.float32):
    """Plain-JAX reference; matmul_dtype=bf16 mirrors the kernel's bf16 streaming."""
    if matmul_dtype == jnp.bfloat16:
        x = x.astype(jnp.bfloat16).astype(jnp.float32)   # kernel streams x as bf16

    def lin_ln_gelu(h_in, w, b, g, be):
        h = jnp.dot(h_in.astype(matmul_dtype), w.astype(matmul_dtype),
                    preferred_element_type=jnp.float32) + b
        mu = jnp.mean(h, axis=-1, keepdims=True)
        d = h - mu
        var = jnp.mean(d * d, axis=-1, keepdims=True)
        h = d / jnp.sqrt(var + LN_EPS) * g + be
        return 0.5 * h * (1.0 + jax.lax.erf(h / jnp.sqrt(2.0)))

    x1 = lin_ln_gelu(x, p["w1"], p["b1"], p["g1"], p["be1"])
    x2 = lin_ln_gelu(x1, p["w2"], p["b2"], p["g2"], p["be2"])
    if is_res:
        out = (x + x2) if same_features else (x1 + x2)
        return out / 1.414
    return x2


if __name__ == "__main__":
    key = jax.random.PRNGKey(0)
    kx1, kp1, kx2, kp2 = jax.random.split(key, 4)

    # Case 1: in==out features, residual -> fused resident-weight path.
    N, F = 256, 128
    x = jax.random.normal(kx1, (N, F), jnp.float32)
    params = init_params(kp1, F, F)

    out = jax.block_until_ready(residual_linear_block(x, params, is_res=True))
    assert out.shape == (N, F)

    ref_bf = reference(x, params, is_res=True, same_features=True,
                       matmul_dtype=jnp.bfloat16)
    ref_f32 = reference(x, params, is_res=True, same_features=True,
                        matmul_dtype=jnp.float32)
    assert jnp.allclose(out, ref_bf, atol=3e-3, rtol=3e-3), \
        "fused path mismatch vs bf16-matmul reference"
    assert jnp.allclose(out, ref_f32, atol=5e-2, rtol=5e-2), \
        "fused path mismatch vs f32 reference"

    # Case 2: in != out features (residual uses x1); rows not a tile multiple
    # so row padding is exercised.
    N2, IN2, OUT2 = 100, 256, 128
    x2 = jax.random.normal(kx2, (N2, IN2), jnp.float32)
    params2 = init_params(kp2, IN2, OUT2)
    out2 = jax.block_until_ready(residual_linear_block(x2, params2, is_res=True))
    ref2_bf = reference(x2, params2, is_res=True, same_features=False,
                        matmul_dtype=jnp.bfloat16)
    ref2_f32 = reference(x2, params2, is_res=True, same_features=False,
                         matmul_dtype=jnp.float32)
    assert out2.shape == (N2, OUT2)
    assert jnp.allclose(out2, ref2_bf, atol=5e-3, rtol=5e-3), \
        "asymmetric-feature path mismatch vs bf16-matmul reference"
    assert jnp.allclose(out2, ref2_f32, atol=7.5e-2, rtol=7.5e-2), \
        "asymmetric-feature path mismatch vs f32 reference"

    # Case 3: force the K-tiled split fallback (used on v7x when weights don't
    # fit resident in VMEM) and verify it as well.
    out3 = jax.block_until_ready(
        residual_linear_block(x, params, is_res=True, force_split=True))
    assert jnp.allclose(out3, ref_f32, atol=5e-2, rtol=5e-2), \
        "split fallback mismatch vs f32 reference"

    print("KERNEL_OK")
</pallas_src>

<mosaic_0001>
module attributes {stable_mosaic.version = 11 : i64} {
  func.func @_fused_kernel(%arg0: i32, %arg1: memref<256x128xbf16, #tpu.memory_space<vmem>>, %arg2: memref<128x128xbf16, #tpu.memory_space<vmem>>, %arg3: memref<128x128xbf16, #tpu.memory_space<vmem>>, %arg4: memref<8x128xf32, #tpu.memory_space<vmem>>, %arg5: memref<256x128xf32, #tpu.memory_space<vmem>>) attributes {dimension_semantics = [#tpu.dimension_semantics<parallel>], iteration_bounds = array<i64: 1>, scalar_prefetch = 0 : i64, scratch_operands = 0 : i64, tpu.core_type = #tpu.core_type<tc>, window_params = [{transform_indices = @transform_0, window_bounds = array<i64: 256, 128>}, {pipeline_mode = #tpu.pipeline_mode<synchronous>, transform_indices = @transform_1, window_bounds = array<i64: 128, 128>}, {pipeline_mode = #tpu.pipeline_mode<synchronous>, transform_indices = @transform_2, window_bounds = array<i64: 128, 128>}, {pipeline_mode = #tpu.pipeline_mode<synchronous>, transform_indices = @transform_3, window_bounds = array<i64: 8, 128>}, {transform_indices = @transform_4, window_bounds = array<i64: 256, 128>}]} {
    %c0 = arith.constant 0 : index
    %c0_0 = arith.constant 0 : index
    %0 = vector.load %arg1[%c0, %c0_0] : memref<256x128xbf16, #tpu.memory_space<vmem>>, vector<256x128xbf16>
    %c0_1 = arith.constant 0 : index
    %c0_2 = arith.constant 0 : index
    %1 = vector.load %arg2[%c0_1, %c0_2] : memref<128x128xbf16, #tpu.memory_space<vmem>>, vector<128x128xbf16>
    %cst = arith.constant dense<0.000000e+00> : vector<256x128xf32>
    %2 = tpu.matmul %0, %1, %cst {dimension_numbers = #tpu.dot_dimension_numbers<[1], [0], [0], [1], [0, 0, 1, 1], [], []>} : vector<256x128xbf16>, vector<128x128xbf16>, vector<256x128xf32> -> vector<256x128xf32>
    %c0_3 = arith.constant 0 : index
    %c0_4 = arith.constant 0 : index
    %3 = vector.load %arg4[%c0_3, %c0_4] : memref<8x128xf32, #tpu.memory_space<vmem>>, vector<1x128xf32>
    %4 = vector.broadcast %3 : vector<1x128xf32> to vector<256x128xf32>
    %5 = arith.addf %2, %4 : vector<256x128xf32>
    %c1 = arith.constant 1 : index
    %c0_5 = arith.constant 0 : index
    %6 = vector.load %arg4[%c1, %c0_5] : memref<8x128xf32, #tpu.memory_space<vmem>>, vector<1x128xf32>
    %c2 = arith.constant 2 : index
    %c0_6 = arith.constant 0 : index
    %7 = vector.load %arg4[%c2, %c0_6] : memref<8x128xf32, #tpu.memory_space<vmem>>, vector<1x128xf32>
    %cst_7 = arith.constant dense<0.000000e+00> : vector<256xf32>
    %8 = vector.multi_reduction <add>, %5, %cst_7 [1] : vector<256x128xf32> to vector<256xf32>
    %9 = vector.shape_cast %8 : vector<256xf32> to vector<256x1xf32>
    %cst_8 = arith.constant 1.280000e+02 : f32
    %10 = vector.broadcast %cst_8 : f32 to vector<256x1xf32>
    %11 = arith.divf %9, %10 : vector<256x1xf32>
    %12 = vector.broadcast %11 : vector<256x1xf32> to vector<256x128xf32>
    %13 = arith.subf %5, %12 : vector<256x128xf32>
    %14 = arith.mulf %13, %13 : vector<256x128xf32>
    %cst_9 = arith.constant dense<0.000000e+00> : vector<256xf32>
    %15 = vector.multi_reduction <add>, %14, %cst_9 [1] : vector<256x128xf32> to vector<256xf32>
    %16 = vector.shape_cast %15 : vector<256xf32> to vector<256x1xf32>
    %cst_10 = arith.constant 1.280000e+02 : f32
    %17 = vector.broadcast %cst_10 : f32 to vector<256x1xf32>
    %18 = arith.divf %16, %17 : vector<256x1xf32>
    %cst_11 = arith.constant 9.99999974E-6 : f32
    %19 = vector.broadcast %cst_11 : f32 to vector<256x1xf32>
    %20 = arith.addf %18, %19 : vector<256x1xf32>
    %21 = math.rsqrt %20 : vector<256x1xf32>
    %22 = vector.broadcast %21 : vector<256x1xf32> to vector<256x128xf32>
    %23 = arith.mulf %13, %22 : vector<256x128xf32>
    %24 = vector.broadcast %6 : vector<1x128xf32> to vector<256x128xf32>
    %25 = arith.mulf %23, %24 : vector<256x128xf32>
    %26 = vector.broadcast %7 : vector<1x128xf32> to vector<256x128xf32>
    %27 = arith.addf %25, %26 : vector<256x128xf32>
    %cst_12 = arith.constant 5.000000e-01 : f32
    %28 = vector.broadcast %cst_12 : f32 to vector<256x128xf32>
    %29 = arith.mulf %28, %27 : vector<256x128xf32>
    %cst_13 = arith.constant 0.707106769 : f32
    %30 = vector.broadcast %cst_13 : f32 to vector<256x128xf32>
    %31 = arith.mulf %27, %30 : vector<256x128xf32>
    %32 = math.erf %31 : vector<256x128xf32>
    %cst_14 = arith.constant 1.000000e+00 : f32
    %33 = vector.broadcast %cst_14 : f32 to vector<256x128xf32>
    %34 = arith.addf %33, %32 : vector<256x128xf32>
    %35 = arith.mulf %29, %34 : vector<256x128xf32>
    %36 = arith.truncf %35 : vector<256x128xf32> to vector<256x128xbf16>
    %c0_15 = arith.constant 0 : index
    %c0_16 = arith.constant 0 : index
    %37 = vector.load %arg3[%c0_15, %c0_16] : memref<128x128xbf16, #tpu.memory_space<vmem>>, vector<128x128xbf16>
    %cst_17 = arith.constant dense<0.000000e+00> : vector<256x128xf32>
    %38 = tpu.matmul %36, %37, %cst_17 {dimension_numbers = #tpu.dot_dimension_numbers<[1], [0], [0], [1], [0, 0, 1, 1], [], []>} : vector<256x128xbf16>, vector<128x128xbf16>, vector<256x128xf32> -> vector<256x128xf32>
    %c3 = arith.constant 3 : index
    %c0_18 = arith.constant 0 : index
    %39 = vector.load %arg4[%c3, %c0_18] : memref<8x128xf32, #tpu.memory_space<vmem>>, vector<1x128xf32>
    %40 = vector.broadcast %39 : vector<1x128xf32> to vector<256x128xf32>
    %41 = arith.addf %38, %40 : vector<256x128xf32>
    %c4 = arith.constant 4 : index
    %c0_19 = arith.constant 0 : index
    %42 = vector.load %arg4[%c4, %c0_19] : memref<8x128xf32, #tpu.memory_space<vmem>>, vector<1x128xf32>
    %c5 = arith.constant 5 : index
    %c0_20 = arith.constant 0 : index
    %43 = vector.load %arg4[%c5, %c0_20] : memref<8x128xf32, #tpu.memory_space<vmem>>, vector<1x128xf32>
    %cst_21 = arith.constant dense<0.000000e+00> : vector<256xf32>
    %44 = vector.multi_reduction <add>, %41, %cst_21 [1] : vector<256x128xf32> to vector<256xf32>
    %45 = vector.shape_cast %44 : vector<256xf32> to vector<256x1xf32>
    %cst_22 = arith.constant 1.280000e+02 : f32
    %46 = vector.broadcast %cst_22 : f32 to vector<256x1xf32>
    %47 = arith.divf %45, %46 : vector<256x1xf32>
    %48 = vector.broadcast %47 : vector<256x1xf32> to vector<256x128xf32>
    %49 = arith.subf %41, %48 : vector<256x128xf32>
    %50 = arith.mulf %49, %49 : vector<256x128xf32>
    %cst_23 = arith.constant dense<0.000000e+00> : vector<256xf32>
    %51 = vector.multi_reduction <add>, %50, %cst_23 [1] : vector<256x128xf32> to vector<256xf32>
    %52 = vector.shape_cast %51 : vector<256xf32> to vector<256x1xf32>
    %cst_24 = arith.constant 1.280000e+02 : f32
    %53 = vector.broadcast %cst_24 : f32 to vector<256x1xf32>
    %54 = arith.divf %52, %53 : vector<256x1xf32>
    %cst_25 = arith.constant 9.99999974E-6 : f32
    %55 = vector.broadcast %cst_25 : f32 to vector<256x1xf32>
    %56 = arith.addf %54, %55 : vector<256x1xf32>
    %57 = math.rsqrt %56 : vector<256x1xf32>
    %58 = vector.broadcast %57 : vector<256x1xf32> to vector<256x128xf32>
    %59 = arith.mulf %49, %58 : vector<256x128xf32>
    %60 = vector.broadcast %42 : vector<1x128xf32> to vector<256x128xf32>
    %61 = arith.mulf %59, %60 : vector<256x128xf32>
    %62 = vector.broadcast %43 : vector<1x128xf32> to vector<256x128xf32>
    %63 = arith.addf %61, %62 : vector<256x128xf32>
    %cst_26 = arith.constant 5.000000e-01 : f32
    %64 = vector.broadcast %cst_26 : f32 to vector<256x128xf32>
    %65 = arith.mulf %64, %63 : vector<256x128xf32>
    %cst_27 = arith.constant 0.707106769 : f32
    %66 = vector.broadcast %cst_27 : f32 to vector<256x128xf32>
    %67 = arith.mulf %63, %66 : vector<256x128xf32>
    %68 = math.erf %67 : vector<256x128xf32>
    %cst_28 = arith.constant 1.000000e+00 : f32
    %69 = vector.broadcast %cst_28 : f32 to vector<256x128xf32>
    %70 = arith.addf %69, %68 : vector<256x128xf32>
    %71 = arith.mulf %65, %70 : vector<256x128xf32>
    %72 = arith.extf %0 : vector<256x128xbf16> to vector<256x128xf32>
    %73 = arith.addf %72, %71 : vector<256x128xf32>
    %cst_29 = arith.constant 0.70721358 : f32
    %74 = vector.broadcast %cst_29 : f32 to vector<256x128xf32>
    %75 = arith.mulf %73, %74 : vector<256x128xf32>
    %c0_30 = arith.constant 0 : index
    %c0_31 = arith.constant 0 : index
    %76 = vector.load %arg5[%c0_30, %c0_31] : memref<256x128xf32, #tpu.memory_space<vmem>>, vector<256x128xf32>
    tpu.vector_store %arg5[%c0_30, %c0_31], %75 {strides = array<i32>} : memref<256x128xf32, #tpu.memory_space<vmem>>, vector<256x128xf32>,
    return
  }
  func.func @transform_0(%arg0: i32) -> (i32, i32) {
    %c0_i32 = arith.constant 0 : i32
    %c0_i32_0 = arith.constant 0 : i32
    return %arg0, %c0_i32 : i32, i32
  }
  func.func @transform_1(%arg0: i32) -> (i32, i32) {
    %c0_i32 = arith.constant 0 : i32
    %c0_i32_0 = arith.constant 0 : i32
    %c0_i32_1 = arith.constant 0 : i32
    return %c0_i32, %c0_i32_0 : i32, i32
  }
  func.func @transform_2(%arg0: i32) -> (i32, i32) {
    %c0_i32 = arith.constant 0 : i32
    %c0_i32_0 = arith.constant 0 : i32
    %c0_i32_1 = arith.constant 0 : i32
    return %c0_i32, %c0_i32_0 : i32, i32
  }
  func.func @transform_3(%arg0: i32) -> (i32, i32) {
    %c0_i32 = arith.constant 0 : i32
    %c0_i32_0 = arith.constant 0 : i32
    %c0_i32_1 = arith.constant 0 : i32
    return %c0_i32, %c0_i32_0 : i32, i32
  }
  func.func @transform_4(%arg0: i32) -> (i32, i32) {
    %c0_i32 = arith.constant 0 : i32
    %c0_i32_0 = arith.constant 0 : i32
    return %arg0, %c0_i32 : i32, i32
  }
}

module attributes {stable_mosaic.version = 11 : i64} {
  func.func @_fused_kernel(%arg0: i32, %arg1: memref<256x128xbf16, #tpu.memory_space<vmem>>, %arg2: memref<128x128xbf16, #tpu.memory_space<vmem>>, %arg3: memref<128x128xbf16, #tpu.memory_space<vmem>>, %arg4: memref<8x128xf32, #tpu.memory_space<vmem>>, %arg5: memref<256x128xf32, #tpu.memory_space<vmem>>) attributes {dimension_semantics = [#tpu.dimension_semantics<parallel>], iteration_bounds = array<i64: 1>, scalar_prefetch = 0 : i64, scratch_operands = 0 : i64, tpu.core_type = #tpu.core_type<tc>, window_params = [{transform_indices = @transform_0, window_bounds = array<i64: 256, 128>}, {pipeline_mode = #tpu.pipeline_mode<synchronous>, transform_indices = @transform_1, window_bounds = array<i64: 128, 128>}, {pipeline_mode = #tpu.pipeline_mode<synchronous>, transform_indices = @transform_2, window_bounds = array<i64: 128, 128>}, {pipeline_mode = #tpu.pipeline_mode<synchronous>, transform_indices = @transform_3, window_bounds = array<i64: 8, 128>}, {transform_indices = @transform_4, window_bounds = array<i64: 256, 128>}]} {
    %c0 = arith.constant 0 : index
    %c0_0 = arith.constant 0 : index
    %0 = vector.load %arg1[%c0, %c0_0] : memref<256x128xbf16, #tpu.memory_space<vmem>>, vector<256x128xbf16>
    %c0_1 = arith.constant 0 : index
    %c0_2 = arith.constant 0 : index
    %1 = vector.load %arg2[%c0_1, %c0_2] : memref<128x128xbf16, #tpu.memory_space<vmem>>, vector<128x128xbf16>
    %cst = arith.constant dense<0.000000e+00> : vector<256x128xf32>
    %2 = tpu.matmul %0, %1, %cst {dimension_numbers = #tpu.dot_dimension_numbers<[1], [0], [0], [1], [0, 0, 1, 1], [], []>} : vector<256x128xbf16>, vector<128x128xbf16>, vector<256x128xf32> -> vector<256x128xf32>
    %c0_3 = arith.constant 0 : index
    %c0_4 = arith.constant 0 : index
    %3 = vector.load %arg4[%c0_3, %c0_4] : memref<8x128xf32, #tpu.memory_space<vmem>>, vector<1x128xf32>
    %4 = vector.broadcast %3 : vector<1x128xf32> to vector<256x128xf32>
    %5 = arith.addf %2, %4 : vector<256x128xf32>
    %c1 = arith.constant 1 : index
    %c0_5 = arith.constant 0 : index
    %6 = vector.load %arg4[%c1, %c0_5] : memref<8x128xf32, #tpu.memory_space<vmem>>, vector<1x128xf32>
    %c2 = arith.constant 2 : index
    %c0_6 = arith.constant 0 : index
    %7 = vector.load %arg4[%c2, %c0_6] : memref<8x128xf32, #tpu.memory_space<vmem>>, vector<1x128xf32>
    %cst_7 = arith.constant dense<0.000000e+00> : vector<256xf32>
    %8 = vector.multi_reduction <add>, %5, %cst_7 [1] : vector<256x128xf32> to vector<256xf32>
    %9 = vector.shape_cast %8 : vector<256xf32> to vector<256x1xf32>
    %cst_8 = arith.constant 1.280000e+02 : f32
    %10 = vector.broadcast %cst_8 : f32 to vector<256x1xf32>
    %11 = arith.divf %9, %10 : vector<256x1xf32>
    %12 = vector.broadcast %11 : vector<256x1xf32> to vector<256x128xf32>
    %13 = arith.subf %5, %12 : vector<256x128xf32>
    %14 = arith.mulf %13, %13 : vector<256x128xf32>
    %cst_9 = arith.constant dense<0.000000e+00> : vector<256xf32>
    %15 = vector.multi_reduction <add>, %14, %cst_9 [1] : vector<256x128xf32> to vector<256xf32>
    %16 = vector.shape_cast %15 : vector<256xf32> to vector<256x1xf32>
    %cst_10 = arith.constant 1.280000e+02 : f32
    %17 = vector.broadcast %cst_10 : f32 to vector<256x1xf32>
    %18 = arith.divf %16, %17 : vector<256x1xf32>
    %cst_11 = arith.constant 9.99999974E-6 : f32
    %19 = vector.broadcast %cst_11 : f32 to vector<256x1xf32>
    %20 = arith.addf %18, %19 : vector<256x1xf32>
    %21 = math.rsqrt %20 : vector<256x1xf32>
    %22 = vector.broadcast %21 : vector<256x1xf32> to vector<256x128xf32>
    %23 = arith.mulf %13, %22 : vector<256x128xf32>
    %24 = vector.broadcast %6 : vector<1x128xf32> to vector<256x128xf32>
    %25 = arith.mulf %23, %24 : vector<256x128xf32>
    %26 = vector.broadcast %7 : vector<1x128xf32> to vector<256x128xf32>
    %27 = arith.addf %25, %26 : vector<256x128xf32>
    %cst_12 = arith.constant 5.000000e-01 : f32
    %28 = vector.broadcast %cst_12 : f32 to vector<256x128xf32>
    %29 = arith.mulf %28, %27 : vector<256x128xf32>
    %cst_13 = arith.constant 0.707106769 : f32
    %30 = vector.broadcast %cst_13 : f32 to vector<256x128xf32>
    %31 = arith.mulf %27, %30 : vector<256x128xf32>
    %32 = math.erf %31 : vector<256x128xf32>
    %cst_14 = arith.constant 1.000000e+00 : f32
    %33 = vector.broadcast %cst_14 : f32 to vector<256x128xf32>
    %34 = arith.addf %33, %32 : vector<256x128xf32>
    %35 = arith.mulf %29, %34 : vector<256x128xf32>
    %36 = arith.truncf %35 : vector<256x128xf32> to vector<256x128xbf16>
    %c0_15 = arith.constant 0 : index
    %c0_16 = arith.constant 0 : index
    %37 = vector.load %arg3[%c0_15, %c0_16] : memref<128x128xbf16, #tpu.memory_space<vmem>>, vector<128x128xbf16>
    %cst_17 = arith.constant dense<0.000000e+00> : vector<256x128xf32>
    %38 = tpu.matmul %36, %37, %cst_17 {dimension_numbers = #tpu.dot_dimension_numbers<[1], [0], [0], [1], [0, 0, 1, 1], [], []>} : vector<256x128xbf16>, vector<128x128xbf16>, vector<256x128xf32> -> vector<256x128xf32>
    %c3 = arith.constant 3 : index
    %c0_18 = arith.constant 0 : index
    %39 = vector.load %arg4[%c3, %c0_18] : memref<8x128xf32, #tpu.memory_space<vmem>>, vector<1x128xf32>
    %40 = vector.broadcast %39 : vector<1x128xf32> to vector<256x128xf32>
    %41 = arith.addf %38, %40 : vector<256x128xf32>
    %c4 = arith.constant 4 : index
    %c0_19 = arith.constant 0 : index
    %42 = vector.load %arg4[%c4, %c0_19] : memref<8x128xf32, #tpu.memory_space<vmem>>, vector<1x128xf32>
    %c5 = arith.constant 5 : index
    %c0_20 = arith.constant 0 : index
    %43 = vector.load %arg4[%c5, %c0_20] : memref<8x128xf32, #tpu.memory_space<vmem>>, vector<1x128xf32>
    %cst_21 = arith.constant dense<0.000000e+00> : vector<256xf32>
    %44 = vector.multi_reduction <add>, %41, %cst_21 [1] : vector<256x128xf32> to vector<256xf32>
    %45 = vector.shape_cast %44 : vector<256xf32> to vector<256x1xf32>
    %cst_22 = arith.constant 1.280000e+02 : f32
    %46 = vector.broadcast %cst_22 : f32 to vector<256x1xf32>
    %47 = arith.divf %45, %46 : vector<256x1xf32>
    %48 = vector.broadcast %47 : vector<256x1xf32> to vector<256x128xf32>
    %49 = arith.subf %41, %48 : vector<256x128xf32>
    %50 = arith.mulf %49, %49 : vector<256x128xf32>
    %cst_23 = arith.constant dense<0.000000e+00> : vector<256xf32>
    %51 = vector.multi_reduction <add>, %50, %cst_23 [1] : vector<256x128xf32> to vector<256xf32>
    %52 = vector.shape_cast %51 : vector<256xf32> to vector<256x1xf32>
    %cst_24 = arith.constant 1.280000e+02 : f32
    %53 = vector.broadcast %cst_24 : f32 to vector<256x1xf32>
    %54 = arith.divf %52, %53 : vector<256x1xf32>
    %cst_25 = arith.constant 9.99999974E-6 : f32
    %55 = vector.broadcast %cst_25 : f32 to vector<256x1xf32>
    %56 = arith.addf %54, %55 : vector<256x1xf32>
    %57 = math.rsqrt %56 : vector<256x1xf32>
    %58 = vector.broadcast %57 : vector<256x1xf32> to vector<256x128xf32>
    %59 = arith.mulf %49, %58 : vector<256x128xf32>
    %60 = vector.broadcast %42 : vector<1x128xf32> to vector<256x128xf32>
    %61 = arith.mulf %59, %60 : vector<256x128xf32>
    %62 = vector.broadcast %43 : vector<1x128xf32> to vector<256x128xf32>
    %63 = arith.addf %61, %62 : vector<256x128xf32>
    %cst_26 = arith.constant 5.000000e-01 : f32
    %64 = vector.broadcast %cst_26 : f32 to vector<256x128xf32>
    %65 = arith.mulf %64, %63 : vector<256x128xf32>
    %cst_27 = arith.constant 0.707106769 : f32
    %66 = vector.broadcast %cst_27 : f32 to vector<256x128xf32>
    %67 = arith.mulf %63, %66 : vector<256x128xf32>
    %68 = math.erf %67 : vector<256x128xf32>
    %cst_28 = arith.constant 1.000000e+00 : f32
    %69 = vector.broadcast %cst_28 : f32 to vector<256x128xf32>
    %70 = arith.addf %69, %68 : vector<256x128xf32>
    %71 = arith.mulf %65, %70 : vector<256x128xf32>
    %72 = arith.extf %0 : vector<256x128xbf16> to vector<256x128xf32>
    %73 = arith.addf %72, %71 : vector<256x128xf32>
    %cst_29 = arith.constant 0.70721358 : f32
    %74 = vector.broadcast %cst_29 : f32 to vector<256x128xf32>
    %75 = arith.mulf %73, %74 : vector<256x128xf32>
    %c0_30 = arith.constant 0 : index
    %c0_31 = arith.constant 0 : index
    %76 = vector.load %arg5[%c0_30, %c0_31] : memref<256x128xf32, #tpu.memory_space<vmem>>, vector<256x128xf32>
    tpu.vector_store %arg5[%c0_30, %c0_31], %75 {strides = array<i32>} : memref<256x128xf32, #tpu.memory_space<vmem>>, vector<256x128xf32>,
    return
  }
  func.func @transform_0(%arg0: i32) -> (i32, i32) {
    %c0_i32 = arith.constant 0 : i32
    %c0_i32_0 = arith.constant 0 : i32
    return %arg0, %c0_i32 : i32, i32
  }
  func.func @transform_1(%arg0: i32) -> (i32, i32) {
    %c0_i32 = arith.constant 0 : i32
    %c0_i32_0 = arith.constant 0 : i32
    %c0_i32_1 = arith.constant 0 : i32
    return %c0_i32, %c0_i32_0 : i32, i32
  }
  func.func @transform_2(%arg0: i32) -> (i32, i32) {
    %c0_i32 = arith.constant 0 : i32
    %c0_i32_0 = arith.constant 0 : i32
    %c0_i32_1 = arith.constant 0 : i32
    return %c0_i32, %c0_i32_0 : i32, i32
  }
  func.func @transform_3(%arg0: i32) -> (i32, i32) {
    %c0_i32 = arith.constant 0 : i32
    %c0_i32_0 = arith.constant 0 : i32
    %c0_i32_1 = arith.constant 0 : i32
    return %c0_i32, %c0_i32_0 : i32, i32
  }
  func.func @transform_4(%arg0: i32) -> (i32, i32) {
    %c0_i32 = arith.constant 0 : i32
    %c0_i32_0 = arith.constant 0 : i32
    return %arg0, %c0_i32 : i32, i32
  }
}

</mosaic_0001>

<llo_original>
// kernel: tpu_custom_call.1
$region0: #{tpu_custom_call.1}
  #allocation0 [shape = 'u32[]', space=smem, size = 0x4, offset = 0x4, fixed_abs, tag = 'smem constant byte address 0x4 - core index']
  #allocation1 [shape = 'u32[144,128]{1,0:T(1,128)}', space=vmem, size = 0x12000, scoped, tag = 'internal scratch']
  %s0 = inlined_call_operand.hbm [shape: bf16[256,128], index: 0, kind: input, shape index: {}]
  %s1 = inlined_call_operand.hbm [shape: bf16[128,128], index: 1, kind: input, shape index: {}]
  %s2 = inlined_call_operand.hbm [shape: bf16[128,128], index: 2, kind: input, shape index: {}]
  %s3 = inlined_call_operand.hbm [shape: f32[8,128], index: 3, kind: input, shape index: {}]
  %s4 = inlined_call_operand.hbm [shape: f32[256,128], index: 4, kind: output, shape index: {}]
  %s5 = sld [smem:[#allocation0]]
  $region42: #{tpu_custom_call.1} parent=0
    _
  %s7 = ssub.s32 1, %s5
  %s8 = scalar_select 0, %s7, %s5
  $region1: #{tpu_custom_call.1} parent=0
    #allocation2 [shape = 'u8[65536]{0}', space=vmem, size = 0x10000, scoped, tag = 'input window, operand 0, single buffered']
    #allocation3 [shape = 's32[1]{0}', space=sflag, size = 0x4, scoped, tag = 'scoped memory for tpu_custom_call.1']
    #allocation4 [shape = 's32[1]{0}', space=sflag, size = 0x4, scoped, tag = 'scoped memory for tpu_custom_call.1']
    #allocation5 [shape = 'u8[32768]{0}', space=vmem, size = 0x8000, scoped, tag = 'input window, operand 1, single buffered']
    #allocation6 [shape = 's32[1]{0}', space=sflag, size = 0x4, scoped, tag = 'scoped memory for tpu_custom_call.1']
    #allocation7 [shape = 'u8[32768]{0}', space=vmem, size = 0x8000, scoped, tag = 'input window, operand 2, single buffered']
    #allocation8 [shape = 'u8[4096]{0}', space=vmem, size = 0x1000, scoped, tag = 'input window, operand 3, single buffered']
    #allocation9 [shape = 's32[1]{0}', space=sflag, size = 0x4, scoped, tag = 'scoped memory for tpu_custom_call.1']
    #allocation10 [shape = 'u8[131072]{0}', space=vmem, size = 0x20000, scoped, tag = 'output window, operand 0, single buffered']
    %9 = vsyncpa [#allocation3], 0
    %10 = vsyncpa [#allocation6], 0
    %11 = vsyncpa [#allocation9], 0
    %12 = vsyncpa [#allocation4], 0
    // Predicated region
    $region2: #{tpu_custom_call.1} parent=1 // pred_check
      _
    $region3: #{tpu_custom_call.1} parent=1 // pred_check_branch
      %14 = sbr.rel (0) target = $region5
    $region4: #{tpu_custom_call.1} parent=1 // pred_region
      %s16 = ssub.s32 2048, 2048
      %17 = vsyncadd [#allocation3], %s16
      %s18 = sshll.u32 [#allocation2], 4
      %s19 = int_to_ptr.vmem [resolvable:$true] %s18
      %24 = dma.hbm_to_vmem [thread:$0]  %s0, 2048, %s19, [#allocation3], 64, 64, 4
    $region5: #{tpu_custom_call.1} parent=1 // pred_fallthru
      _
    // Predicated region
    $region6: #{tpu_custom_call.1} parent=1 // pred_check
      _
    $region7: #{tpu_custom_call.1} parent=1 // pred_check_branch
      %26 = sbr.rel (0) target = $region9
    $region8: #{tpu_custom_call.1} parent=1 // pred_region
      %s28 = ssub.s32 1024, 1024
      %29 = vsyncadd [#allocation6], %s28
      %s30 = sshll.u32 [#allocation5], 4
      %s31 = int_to_ptr.vmem [resolvable:$true] %s30
      %36 = dma.hbm_to_vmem [thread:$0]  %s1, 1024, %s31, [#allocation6], 64, 64, 4
    $region9: #{tpu_custom_call.1} parent=1 // pred_fallthru
      _
    // Predicated region
    $region10: #{tpu_custom_call.1} parent=1 // pred_check
      _
    $region11: #{tpu_custom_call.1} parent=1 // pred_check_branch
      %38 = sbr.rel (0) target = $region13
    $region12: #{tpu_custom_call.1} parent=1 // pred_region
      %s40 = ssub.s32 1024, 1024
      %41 = vsyncadd [#allocation6], %s40
      %s42 = sshll.u32 [#allocation7], 4
      %s43 = int_to_ptr.vmem [resolvable:$true] %s42
      %48 = dma.hbm_to_vmem [thread:$0]  %s2, 1024, %s43, [#allocation6], 64, 64, 4
    $region13: #{tpu_custom_call.1} parent=1 // pred_fallthru
      _
    // Predicated region
    $region14: #{tpu_custom_call.1} parent=1 // pred_check
      _
    $region15: #{tpu_custom_call.1} parent=1 // pred_check_branch
      %50 = sbr.rel (0) target = $region17
    $region16: #{tpu_custom_call.1} parent=1 // pred_region
      %s52 = ssub.s32 128, 128
      %53 = vsyncadd [#allocation9], %s52
      %s55 = sshll.u32 [#allocation8], 4
      %s56 = int_to_ptr.vmem [resolvable:$true] %s55
      %58 = dma.hbm_to_vmem [thread:$0]  %s3, 128, %s56, [#allocation9]
    $region17: #{tpu_custom_call.1} parent=1 // pred_fallthru
      _
    // Predicated region
    $region18: #{tpu_custom_call.1} parent=1 // pred_check
      _
    $region19: #{tpu_custom_call.1} parent=1 // pred_check_branch
      %60 = sbr.rel (0) target = $region21
    $region20: #{tpu_custom_call.1} parent=1 // pred_region
      %61 = dma.done [#allocation3], 2048
    $region21: #{tpu_custom_call.1} parent=1 // pred_fallthru
      _
    // Predicated region
    $region22: #{tpu_custom_call.1} parent=1 // pred_check
      _
    $region23: #{tpu_custom_call.1} parent=1 // pred_check_branch
      %63 = sbr.rel (0) target = $region25
    $region24: #{tpu_custom_call.1} parent=1 // pred_region
      %64 = dma.done [#allocation6], 1024
    $region25: #{tpu_custom_call.1} parent=1 // pred_fallthru
      _
    // Predicated region
    $region26: #{tpu_custom_call.1} parent=1 // pred_check
      _
    $region27: #{tpu_custom_call.1} parent=1 // pred_check_branch
      %66 = sbr.rel (0) target = $region29
    $region28: #{tpu_custom_call.1} parent=1 // pred_region
      %67 = dma.done [#allocation6], 1024
    $region29: #{tpu_custom_call.1} parent=1 // pred_fallthru
      _
    // Predicated region
    $region30: #{tpu_custom_call.1} parent=1 // pred_check
      _
    $region31: #{tpu_custom_call.1} parent=1 // pred_check_branch
      %69 = sbr.rel (0) target = $region33
    $region32: #{tpu_custom_call.1} parent=1 // pred_region
      %70 = dma.done [#allocation9], 128
    $region33: #{tpu_custom_call.1} parent=1 // pred_fallthru
      _
    %v72 = vld [vmem:[#allocation2] sm:$0xf]
    %v73 = vld [vmem:[#allocation2 + $0x4] sm:$0xf]
    %v74 = vld [vmem:[#allocation2 + $0x8] sm:$0xf]
    %v75 = vld [vmem:[#allocation2 + $0xc] sm:$0xf]
    %v76 = vld [vmem:[#allocation2 + $0x10] sm:$0xf]
    %v77 = vld [vmem:[#allocation2 + $0x14] sm:$0xf]
    %v78 = vld [vmem:[#allocation2 + $0x18] sm:$0xf]
    %v79 = vld [vmem:[#allocation2 + $0x1c] sm:$0xf]
    %v80 = vld [vmem:[#allocation2 + $0x20] sm:$0xf]
    %v81 = vld [vmem:[#allocation2 + $0x24] sm:$0xf]
    %v82 = vld [vmem:[#allocation2 + $0x28] sm:$0xf]
    %v83 = vld [vmem:[#allocation2 + $0x2c] sm:$0xf]
    %v84 = vld [vmem:[#allocation2 + $0x30] sm:$0xf]
    %v85 = vld [vmem:[#allocation2 + $0x34] sm:$0xf]
    %v86 = vld [vmem:[#allocation2 + $0x38] sm:$0xf]
    %v87 = vld [vmem:[#allocation2 + $0x3c] sm:$0xf]
    %v88 = vld [vmem:[#allocation2 + $0x40] sm:$0xf]
    %v89 = vld [vmem:[#allocation2 + $0x44] sm:$0xf]
    %v90 = vld [vmem:[#allocation2 + $0x48] sm:$0xf]
    %v91 = vld [vmem:[#allocation2 + $0x4c] sm:$0xf]
    %v92 = vld [vmem:[#allocation2 + $0x50] sm:$0xf]
    %v93 = vld [vmem:[#allocation2 + $0x54] sm:$0xf]
    %v94 = vld [vmem:[#allocation2 + $0x58] sm:$0xf]
    %v95 = vld [vmem:[#allocation2 + $0x5c] sm:$0xf]
    %v96 = vld [vmem:[#allocation2 + $0x60] sm:$0xf]
    %v97 = vld [vmem:[#allocation2 + $0x64] sm:$0xf]
    %v98 = vld [vmem:[#allocation2 + $0x68] sm:$0xf]
    %v99 = vld [vmem:[#allocation2 + $0x6c] sm:$0xf]
    %v100 = vld [vmem:[#allocation2 + $0x70] sm:$0xf]
    %v101 = vld [vmem:[#allocation2 + $0x74] sm:$0xf]
    %v102 = vld [vmem:[#allocation2 + $0x78] sm:$0xf]
    %v103 = vld [vmem:[#allocation2 + $0x7c] sm:$0xf]
    %v104 = vld [vmem:[#allocation5] sm:$0xf]
    %v105 = vld [vmem:[#allocation5 + $0x4] sm:$0xf]
    %v106 = vld [vmem:[#allocation5 + $0x8] sm:$0xf]
    %v107 = vld [vmem:[#allocation5 + $0xc] sm:$0xf]
    %v108 = vld [vmem:[#allocation5 + $0x10] sm:$0xf]
    %v109 = vld [vmem:[#allocation5 + $0x14] sm:$0xf]
    %v110 = vld [vmem:[#allocation5 + $0x18] sm:$0xf]
    %v111 = vld [vmem:[#allocation5 + $0x1c] sm:$0xf]
    %v112 = vld [vmem:[#allocation5 + $0x20] sm:$0xf]
    %v113 = vld [vmem:[#allocation5 + $0x24] sm:$0xf]
    %v114 = vld [vmem:[#allocation5 + $0x28] sm:$0xf]
    %v115 = vld [vmem:[#allocation5 + $0x2c] sm:$0xf]
    %v116 = vld [vmem:[#allocation5 + $0x30] sm:$0xf]
    %v117 = vld [vmem:[#allocation5 + $0x34] sm:$0xf]
    %v118 = vld [vmem:[#allocation5 + $0x38] sm:$0xf]
    %v119 = vld [vmem:[#allocation5 + $0x3c] sm:$0xf]
    %v120 = vld [vmem:[#allocation8] sm:$0x1]
    %v121 = vlaneseq
    %v122 = vshrl.u32 %v121, 7
    %v123 = vsub.s32 0, %v122
    %v124 = vrot.slane %v120, %v123
    %v157 = vunpack.c.l.b16 %v72
    %v158 = vunpack.c.l.b16 %v73
    %v159 = vunpack.c.l.b16 %v74
    %v160 = vunpack.c.l.b16 %v75
    %v161 = vunpack.c.l.b16 %v76
    %v162 = vunpack.c.l.b16 %v77
    %v163 = vunpack.c.l.b16 %v78
    %v164 = vunpack.c.l.b16 %v79
    %v165 = vunpack.c.l.b16 %v80
    %v166 = vunpack.c.l.b16 %v81
    %v167 = vunpack.c.l.b16 %v82
    %v168 = vunpack.c.l.b16 %v83
    %v169 = vunpack.c.l.b16 %v84
    %v170 = vunpack.c.l.b16 %v85
    %v171 = vunpack.c.l.b16 %v86
    %v172 = vunpack.c.l.b16 %v87
    %v173 = vunpack.c.l.b16 %v88
    %v174 = vunpack.c.l.b16 %v89
    %v175 = vunpack.c.l.b16 %v90
    %v176 = vunpack.c.l.b16 %v91
    %v177 = vunpack.c.l.b16 %v92
    %v178 = vunpack.c.l.b16 %v93
    %v179 = vunpack.c.l.b16 %v94
    %v180 = vunpack.c.l.b16 %v95
    %v181 = vunpack.c.l.b16 %v96
    %v182 = vunpack.c.l.b16 %v97
    %v183 = vunpack.c.l.b16 %v98
    %v184 = vunpack.c.l.b16 %v99
    %v185 = vunpack.c.l.b16 %v100
    %v186 = vunpack.c.l.b16 %v101
    %v187 = vunpack.c.l.b16 %v102
    %v188 = vunpack.c.l.b16 %v103
    %v189 = vpack.c.b16 %v158, %v157
    %v190 = vpack.c.b16 %v160, %v159
    %v191 = vpack.c.b16 %v162, %v161
    %v192 = vpack.c.b16 %v164, %v163
    %v193 = vpack.c.b16 %v166, %v165
    %v194 = vpack.c.b16 %v168, %v167
    %v195 = vpack.c.b16 %v170, %v169
    %v196 = vpack.c.b16 %v172, %v171
    %v197 = vpack.c.b16 %v174, %v173
    %v198 = vpack.c.b16 %v176, %v175
    %v199 = vpack.c.b16 %v178, %v177
    %v200 = vpack.c.b16 %v180, %v179
    %v201 = vpack.c.b16 %v182, %v181
    %v202 = vpack.c.b16 %v184, %v183
    %v203 = vpack.c.b16 %v186, %v185
    %v204 = vpack.c.b16 %v188, %v187
    %v237 = vunpack.c.l.b16 %v104
    %v238 = vunpack.c.l.b16 %v105
    %v239 = vunpack.c.l.b16 %v106
    %v240 = vunpack.c.l.b16 %v107
    %v241 = vunpack.c.l.b16 %v108
    %v242 = vunpack.c.l.b16 %v109
    %v243 = vunpack.c.l.b16 %v110
    %v244 = vunpack.c.l.b16 %v111
    %v245 = vunpack.c.l.b16 %v112
    %v246 = vunpack.c.l.b16 %v113
    %v247 = vunpack.c.l.b16 %v114
    %v248 = vunpack.c.l.b16 %v115
    %v249 = vunpack.c.l.b16 %v116
    %v250 = vunpack.c.l.b16 %v117
    %v251 = vunpack.c.l.b16 %v118
    %v252 = vunpack.c.l.b16 %v119
    %v253 = vpack.c.b16 %v238, %v237
    %v254 = vpack.c.b16 %v240, %v239
    %v255 = vpack.c.b16 %v242, %v241
    %v256 = vpack.c.b16 %v244, %v243
    %v257 = vpack.c.b16 %v246, %v245
    %v258 = vpack.c.b16 %v248, %v247
    %v259 = vpack.c.b16 %v250, %v249
    %v260 = vpack.c.b16 %v252, %v251
    %269 = vmatprep.subr.bf16.mxu0 0
    %270 = vmatpush1.bf16.msra.mxu0 %v260
    %271 = vmatprep.subr.bf16.mxu0 0
    %272 = vmatpush1.bf16.msra.mxu0 %v259
    %273 = vmatprep.subr.bf16.mxu0 0
    %274 = vmatpush1.bf16.msra.mxu0 %v258
    %275 = vmatprep.subr.bf16.mxu0 0
    %276 = vmatpush1.bf16.msra.mxu0 %v257
    %277 = vmatprep.subr.bf16.mxu0 0
    %278 = vmatpush1.bf16.msra.mxu0 %v256
    %279 = vmatprep.subr.bf16.mxu0 0
    %280 = vmatpush1.bf16.msra.mxu0 %v255
    %281 = vmatprep.subr.bf16.mxu0 0
    %282 = vmatpush1.bf16.msra.mxu0 %v254
    %283 = vmatprep.subr.bf16.mxu0 0
    %284 = vmatpush1.bf16.msra.mxu0 %v253
    %285 = vmatprep.subr.bf16.mxu0 0
    %286 = vmatpush2.bf16.msra.mxu0 0
    %287 = vmatprep.subr.bf16.mxu0 0
    %288 = vmatpush2.bf16.msra.mxu0 0
    %289 = vmatprep.subr.bf16.mxu0 0
    %290 = vmatpush2.bf16.msra.mxu0 0
    %291 = vmatprep.subr.bf16.mxu0 0
    %292 = vmatpush2.bf16.msra.mxu0 0
    %293 = vmatprep.subr.bf16.mxu0 0
    %294 = vmatpush2.bf16.msra.mxu0 0
    %295 = vmatprep.subr.bf16.mxu0 0
    %296 = vmatpush2.bf16.msra.mxu0 0
    %297 = vmatprep.subr.bf16.mxu0 0
    %298 = vmatpush2.bf16.msra.mxu0 0
    %299 = vmatprep.subr.bf16.mxu0 0
    %300 = vmatpush2.bf16.msra.mxu0 0
    %301 = vmatprep.mubr.bf16.mxu0 0
    %302 = vmatmul.mubr.bf16.gmra.mxu0 %v189
    %v303 = vpop.f32.mrf.mxu0
    %v304 = vadd.f32 %v124, %v303
    %v305 = vpop.f32.mrf.mxu0
    %v306 = vpop.f32.mrf.mxu0
    %v307 = vadd.f32 %v124, %v306
    %v308 = vpop.f32.mrf.mxu0
    %309 = vmatprep.mubr.bf16.mxu0 0
    %310 = vmatmul.mubr.bf16.gmra.mxu0 %v190
    %v311 = vpop.f32.mrf.mxu0
    %v312 = vadd.f32 %v124, %v311
    %v313 = vpop.f32.mrf.mxu0
    %v314 = vpop.f32.mrf.mxu0
    %v315 = vadd.f32 %v124, %v314
    %v316 = vpop.f32.mrf.mxu0
    %317 = vmatprep.mubr.bf16.mxu0 0
    %318 = vmatmul.mubr.bf16.gmra.mxu0 %v191
    %v319 = vpop.f32.mrf.mxu0
    %v320 = vadd.f32 %v124, %v319
    %v321 = vpop.f32.mrf.mxu0
    %v322 = vpop.f32.mrf.mxu0
    %v323 = vadd.f32 %v124, %v322
    %v324 = vpop.f32.mrf.mxu0
    %325 = vmatprep.mubr.bf16.mxu0 0
    %326 = vmatmul.mubr.bf16.gmra.mxu0 %v192
    %v327 = vpop.f32.mrf.mxu0
    %v328 = vadd.f32 %v124, %v327
    %v329 = vpop.f32.mrf.mxu0
    %v330 = vpop.f32.mrf.mxu0
    %v331 = vadd.f32 %v124, %v330
    %v332 = vpop.f32.mrf.mxu0
    %333 = vmatprep.mubr.bf16.mxu0 0
    %334 = vmatmul.mubr.bf16.gmra.mxu0 %v193
    %v335 = vpop.f32.mrf.mxu0
    %v336 = vadd.f32 %v124, %v335
    %v337 = vpop.f32.mrf.mxu0
    %v338 = vpop.f32.mrf.mxu0
    %v339 = vadd.f32 %v124, %v338
    %v340 = vpop.f32.mrf.mxu0
    %341 = vmatprep.mubr.bf16.mxu0 0
    %342 = vmatmul.mubr.bf16.gmra.mxu0 %v194
    %v343 = vpop.f32.mrf.mxu0
    %v344 = vadd.f32 %v124, %v343
    %v345 = vpop.f32.mrf.mxu0
    %v346 = vpop.f32.mrf.mxu0
    %v347 = vadd.f32 %v124, %v346
    %v348 = vpop.f32.mrf.mxu0
    %349 = vmatprep.mubr.bf16.mxu0 0
    %350 = vmatmul.mubr.bf16.gmra.mxu0 %v195
    %v351 = vpop.f32.mrf.mxu0
    %v352 = vadd.f32 %v124, %v351
    %v353 = vpop.f32.mrf.mxu0
    %v354 = vpop.f32.mrf.mxu0
    %v355 = vadd.f32 %v124, %v354
    %v356 = vpop.f32.mrf.mxu0
    %357 = vmatprep.mubr.bf16.mxu0 0
    %358 = vmatmul.mubr.bf16.gmra.mxu0 %v196
    %v359 = vpop.f32.mrf.mxu0
    %v360 = vadd.f32 %v124, %v359
    %v361 = vpop.f32.mrf.mxu0
    %v362 = vpop.f32.mrf.mxu0
    %v363 = vadd.f32 %v124, %v362
    %v364 = vpop.f32.mrf.mxu0
    %365 = vmatprep.mubr.bf16.mxu0 0
    %366 = vmatmul.mubr.bf16.gmra.mxu0 %v197
    %v367 = vpop.f32.mrf.mxu0
    %v368 = vadd.f32 %v124, %v367
    %v369 = vpop.f32.mrf.mxu0
    %v370 = vpop.f32.mrf.mxu0
    %v371 = vadd.f32 %v124, %v370
    %v372 = vpop.f32.mrf.mxu0
    %373 = vmatprep.mubr.bf16.mxu0 0
    %374 = vmatmul.mubr.bf16.gmra.mxu0 %v198
    %v375 = vpop.f32.mrf.mxu0
    %v376 = vadd.f32 %v124, %v375
    %v377 = vpop.f32.mrf.mxu0
    %v378 = vpop.f32.mrf.mxu0
    %v379 = vadd.f32 %v124, %v378
    %v380 = vpop.f32.mrf.mxu0
    %381 = vmatprep.mubr.bf16.mxu0 0
    %382 = vmatmul.mubr.bf16.gmra.mxu0 %v199
    %v383 = vpop.f32.mrf.mxu0
    %v384 = vadd.f32 %v124, %v383
    %v385 = vpop.f32.mrf.mxu0
    %v386 = vpop.f32.mrf.mxu0
    %v387 = vadd.f32 %v124, %v386
    %v388 = vpop.f32.mrf.mxu0
    %389 = vmatprep.mubr.bf16.mxu0 0
    %390 = vmatmul.mubr.bf16.gmra.mxu0 %v200
    %v391 = vpop.f32.mrf.mxu0
    %v392 = vadd.f32 %v124, %v391
    %v393 = vpop.f32.mrf.mxu0
    %v394 = vpop.f32.mrf.mxu0
    %v395 = vadd.f32 %v124, %v394
    %v396 = vpop.f32.mrf.mxu0
    %397 = vmatprep.mubr.bf16.mxu0 0
    %398 = vmatmul.mubr.bf16.gmra.mxu0 %v201
    %v399 = vpop.f32.mrf.mxu0
    %v400 = vadd.f32 %v124, %v399
    %v401 = vpop.f32.mrf.mxu0
    %v402 = vpop.f32.mrf.mxu0
    %v403 = vadd.f32 %v124, %v402
    %v404 = vpop.f32.mrf.mxu0
    %405 = vmatprep.mubr.bf16.mxu0 0
    %406 = vmatmul.mubr.bf16.gmra.mxu0 %v202
    %v407 = vpop.f32.mrf.mxu0
    %v408 = vadd.f32 %v124, %v407
    %v409 = vpop.f32.mrf.mxu0
    %v410 = vpop.f32.mrf.mxu0
    %v411 = vadd.f32 %v124, %v410
    %v412 = vpop.f32.mrf.mxu0
    %413 = vmatprep.mubr.bf16.mxu0 0
    %414 = vmatmul.mubr.bf16.gmra.mxu0 %v203
    %v415 = vpop.f32.mrf.mxu0
    %v416 = vadd.f32 %v124, %v415
    %v417 = vpop.f32.mrf.mxu0
    %v418 = vpop.f32.mrf.mxu0
    %v419 = vadd.f32 %v124, %v418
    %v420 = vpop.f32.mrf.mxu0
    %421 = vmatprep.mubr.bf16.mxu0 0
    %422 = vmatmul.mubr.bf16.gmra.mxu0 %v204
    %v423 = vpop.f32.mrf.mxu0
    %v424 = vadd.f32 %v124, %v423
    %v425 = vpop.f32.mrf.mxu0
    %v426 = vpop.f32.mrf.mxu0
    %v427 = vadd.f32 %v124, %v426
    %v428 = vpop.f32.mrf.mxu0
    %429 = vdwg.mxu0
    %v430 = vld [vmem:[#allocation8 + $0x1] sm:$0x1]
    %v431 = vld [vmem:[#allocation8 + $0x2] sm:$0x1]
    %432 = vadd.xlane.f32.xlu0 %v304
    %v433 = vpop.xlane.xlu0 %432
    %434 = vadd.xlane.f32.xlu0 %v307
    %v435 = vpop.xlane.xlu0 %434
    %436 = vadd.xlane.f32.xlu0 %v312
    %v437 = vpop.xlane.xlu0 %436
    %438 = vadd.xlane.f32.xlu0 %v315
    %v439 = vpop.xlane.xlu0 %438
    %440 = vadd.xlane.f32.xlu0 %v320
    %v441 = vpop.xlane.xlu0 %440
    %442 = vadd.xlane.f32.xlu0 %v323
    %v443 = vpop.xlane.xlu0 %442
    %444 = vadd.xlane.f32.xlu0 %v328
    %v445 = vpop.xlane.xlu0 %444
    %446 = vadd.xlane.f32.xlu0 %v331
    %v447 = vpop.xlane.xlu0 %446
    %448 = vadd.xlane.f32.xlu0 %v336
    %v449 = vpop.xlane.xlu0 %448
    %450 = vadd.xlane.f32.xlu0 %v339
    %v451 = vpop.xlane.xlu0 %450
    %452 = vadd.xlane.f32.xlu0 %v344
    %v453 = vpop.xlane.xlu0 %452
    %454 = vadd.xlane.f32.xlu0 %v347
    %v455 = vpop.xlane.xlu0 %454
    %456 = vadd.xlane.f32.xlu0 %v352
    %v457 = vpop.xlane.xlu0 %456
    %458 = vadd.xlane.f32.xlu0 %v355
    %v459 = vpop.xlane.xlu0 %458
    %460 = vadd.xlane.f32.xlu0 %v360
    %v461 = vpop.xlane.xlu0 %460
    %462 = vadd.xlane.f32.xlu0 %v363
    %v463 = vpop.xlane.xlu0 %462
    %464 = vadd.xlane.f32.xlu0 %v368
    %v465 = vpop.xlane.xlu0 %464
    %466 = vadd.xlane.f32.xlu0 %v371
    %v467 = vpop.xlane.xlu0 %466
    %468 = vadd.xlane.f32.xlu0 %v376
    %v469 = vpop.xlane.xlu0 %468
    %470 = vadd.xlane.f32.xlu0 %v379
    %v471 = vpop.xlane.xlu0 %470
    %472 = vadd.xlane.f32.xlu0 %v384
    %v473 = vpop.xlane.xlu0 %472
    %474 = vadd.xlane.f32.xlu0 %v387
    %v475 = vpop.xlane.xlu0 %474
    %476 = vadd.xlane.f32.xlu0 %v392
    %v477 = vpop.xlane.xlu0 %476
    %478 = vadd.xlane.f32.xlu0 %v395
    %v479 = vpop.xlane.xlu0 %478
    %480 = vadd.xlane.f32.xlu0 %v400
    %v481 = vpop.xlane.xlu0 %480
    %482 = vadd.xlane.f32.xlu0 %v403
    %v483 = vpop.xlane.xlu0 %482
    %484 = vadd.xlane.f32.xlu0 %v408
    %v485 = vpop.xlane.xlu0 %484
    %486 = vadd.xlane.f32.xlu0 %v411
    %v487 = vpop.xlane.xlu0 %486
    %488 = vadd.xlane.f32.xlu0 %v416
    %v489 = vpop.xlane.xlu0 %488
    %490 = vadd.xlane.f32.xlu0 %v419
    %v491 = vpop.xlane.xlu0 %490
    %492 = vadd.xlane.f32.xlu0 %v424
    %v493 = vpop.xlane.xlu0 %492
    %494 = vadd.xlane.f32.xlu0 %v427
    %v495 = vpop.xlane.xlu0 %494
    %v496 = vrcp.pop 128.0
    %v497 = vmul.f32 %v433, %v496
    %v498 = vmul.f32 %v435, %v496
    %v499 = vmul.f32 %v437, %v496
    %v500 = vmul.f32 %v439, %v496
    %v501 = vmul.f32 %v441, %v496
    %v502 = vmul.f32 %v443, %v496
    %v503 = vmul.f32 %v445, %v496
    %v504 = vmul.f32 %v447, %v496
    %v505 = vmul.f32 %v449, %v496
    %v506 = vmul.f32 %v451, %v496
    %v507 = vmul.f32 %v453, %v496
    %v508 = vmul.f32 %v455, %v496
    %v509 = vmul.f32 %v457, %v496
    %v510 = vmul.f32 %v459, %v496
    %v511 = vmul.f32 %v461, %v496
    %v512 = vmul.f32 %v463, %v496
    %v513 = vmul.f32 %v465, %v496
    %v514 = vmul.f32 %v467, %v496
    %v515 = vmul.f32 %v469, %v496
    %v516 = vmul.f32 %v471, %v496
    %v517 = vmul.f32 %v473, %v496
    %v518 = vmul.f32 %v475, %v496
    %v519 = vmul.f32 %v477, %v496
    %v520 = vmul.f32 %v479, %v496
    %v521 = vmul.f32 %v481, %v496
    %v522 = vmul.f32 %v483, %v496
    %v523 = vmul.f32 %v485, %v496
    %v524 = vmul.f32 %v487, %v496
    %v525 = vmul.f32 %v489, %v496
    %v526 = vmul.f32 %v491, %v496
    %v527 = vmul.f32 %v493, %v496
    %v528 = vmul.f32 %v495, %v496
    %v529 = vsub.f32 %v304, %v497
    %v530 = vsub.f32 %v307, %v498
    %v531 = vsub.f32 %v312, %v499
    %v532 = vsub.f32 %v315, %v500
    %v533 = vsub.f32 %v320, %v501
    %v534 = vsub.f32 %v323, %v502
    %v535 = vsub.f32 %v328, %v503
    %v536 = vsub.f32 %v331, %v504
    %v537 = vsub.f32 %v336, %v505
    %v538 = vsub.f32 %v339, %v506
    %v539 = vsub.f32 %v344, %v507
    %v540 = vsub.f32 %v347, %v508
    %v541 = vsub.f32 %v352, %v509
    %v542 = vsub.f32 %v355, %v510
    %v543 = vsub.f32 %v360, %v511
    %v544 = vsub.f32 %v363, %v512
    %v545 = vsub.f32 %v368, %v513
    %v546 = vsub.f32 %v371, %v514
    %v547 = vsub.f32 %v376, %v515
    %v548 = vsub.f32 %v379, %v516
    %v549 = vsub.f32 %v384, %v517
    %v550 = vsub.f32 %v387, %v518
    %v551 = vsub.f32 %v392, %v519
    %v552 = vsub.f32 %v395, %v520
    %v553 = vsub.f32 %v400, %v521
    %v554 = vsub.f32 %v403, %v522
    %v555 = vsub.f32 %v408, %v523
    %v556 = vsub.f32 %v411, %v524
    %v557 = vsub.f32 %v416, %v525
    %v558 = vsub.f32 %v419, %v526
    %v559 = vsub.f32 %v424, %v527
    %v560 = vsub.f32 %v427, %v528
    %v561 = vmul.f32 %v529, %v529
    %v562 = vmul.f32 %v530, %v530
    %v563 = vmul.f32 %v531, %v531
    %v564 = vmul.f32 %v532, %v532
    %v565 = vmul.f32 %v533, %v533
    %v566 = vmul.f32 %v534, %v534
    %v567 = vmul.f32 %v535, %v535
    %v568 = vmul.f32 %v536, %v536
    %v569 = vmul.f32 %v537, %v537
    %v570 = vmul.f32 %v538, %v538
    %v571 = vmul.f32 %v539, %v539
    %v572 = vmul.f32 %v540, %v540
    %v573 = vmul.f32 %v541, %v541
    %v574 = vmul.f32 %v542, %v542
    %v575 = vmul.f32 %v543, %v543
    %v576 = vmul.f32 %v544, %v544
    %v577 = vmul.f32 %v545, %v545
    %v578 = vmul.f32 %v546, %v546
    %v579 = vmul.f32 %v547, %v547
    %v580 = vmul.f32 %v548, %v548
    %v581 = vmul.f32 %v549, %v549
    %v582 = vmul.f32 %v550, %v550
    %v583 = vmul.f32 %v551, %v551
    %v584 = vmul.f32 %v552, %v552
    %v585 = vmul.f32 %v553, %v553
    %v586 = vmul.f32 %v554, %v554
    %v587 = vmul.f32 %v555, %v555
    %v588 = vmul.f32 %v556, %v556
    %v589 = vmul.f32 %v557, %v557
    %v590 = vmul.f32 %v558, %v558
    %v591 = vmul.f32 %v559, %v559
    %v592 = vmul.f32 %v560, %v560
    %593 = vadd.xlane.f32.xlu0 %v561
    %v594 = vpop.xlane.xlu0 %593
    %595 = vadd.xlane.f32.xlu0 %v562
    %v596 = vpop.xlane.xlu0 %595
    %597 = vadd.xlane.f32.xlu0 %v563
    %v598 = vpop.xlane.xlu0 %597
    %599 = vadd.xlane.f32.xlu0 %v564
    %v600 = vpop.xlane.xlu0 %599
    %601 = vadd.xlane.f32.xlu0 %v565
    %v602 = vpop.xlane.xlu0 %601
    %603 = vadd.xlane.f32.xlu0 %v566
    %v604 = vpop.xlane.xlu0 %603
    %605 = vadd.xlane.f32.xlu0 %v567
    %v606 = vpop.xlane.xlu0 %605
    %607 = vadd.xlane.f32.xlu0 %v568
    %v608 = vpop.xlane.xlu0 %607
    %609 = vadd.xlane.f32.xlu0 %v569
    %v610 = vpop.xlane.xlu0 %609
    %611 = vadd.xlane.f32.xlu0 %v570
    %v612 = vpop.xlane.xlu0 %611
    %613 = vadd.xlane.f32.xlu0 %v571
    %v614 = vpop.xlane.xlu0 %613
    %615 = vadd.xlane.f32.xlu0 %v572
    %v616 = vpop.xlane.xlu0 %615
    %617 = vadd.xlane.f32.xlu0 %v573
    %v618 = vpop.xlane.xlu0 %617
    %619 = vadd.xlane.f32.xlu0 %v574
    %v620 = vpop.xlane.xlu0 %619
    %621 = vadd.xlane.f32.xlu0 %v575
    %v622 = vpop.xlane.xlu0 %621
    %623 = vadd.xlane.f32.xlu0 %v576
    %v624 = vpop.xlane.xlu0 %623
    %625 = vadd.xlane.f32.xlu0 %v577
    %v626 = vpop.xlane.xlu0 %625
    %627 = vadd.xlane.f32.xlu0 %v578
    %v628 = vpop.xlane.xlu0 %627
    %629 = vadd.xlane.f32.xlu0 %v579
    %v630 = vpop.xlane.xlu0 %629
    %631 = vadd.xlane.f32.xlu0 %v580
    %v632 = vpop.xlane.xlu0 %631
    %633 = vadd.xlane.f32.xlu0 %v581
    %v634 = vpop.xlane.xlu0 %633
    %635 = vadd.xlane.f32.xlu0 %v582
    %v636 = vpop.xlane.xlu0 %635
    %637 = vadd.xlane.f32.xlu0 %v583
    %v638 = vpop.xlane.xlu0 %637
    %639 = vadd.xlane.f32.xlu0 %v584
    %v640 = vpop.xlane.xlu0 %639
    %641 = vadd.xlane.f32.xlu0 %v585
    %v642 = vpop.xlane.xlu0 %641
    %643 = vadd.xlane.f32.xlu0 %v586
    %v644 = vpop.xlane.xlu0 %643
    %645 = vadd.xlane.f32.xlu0 %v587
    %v646 = vpop.xlane.xlu0 %645
    %647 = vadd.xlane.f32.xlu0 %v588
    %v648 = vpop.xlane.xlu0 %647
    %649 = vadd.xlane.f32.xlu0 %v589
    %v650 = vpop.xlane.xlu0 %649
    %651 = vadd.xlane.f32.xlu0 %v590
    %v652 = vpop.xlane.xlu0 %651
    %653 = vadd.xlane.f32.xlu0 %v591
    %v654 = vpop.xlane.xlu0 %653
    %655 = vadd.xlane.f32.xlu0 %v592
    %v656 = vpop.xlane.xlu0 %655
    %v657 = vmul.f32 %v594, %v496
    %v658 = vmul.f32 %v596, %v496
    %v659 = vmul.f32 %v598, %v496
    %v660 = vmul.f32 %v600, %v496
    %v661 = vmul.f32 %v602, %v496
    %v662 = vmul.f32 %v604, %v496
    %v663 = vmul.f32 %v606, %v496
    %v664 = vmul.f32 %v608, %v496
    %v665 = vmul.f32 %v610, %v496
    %v666 = vmul.f32 %v612, %v496
    %v667 = vmul.f32 %v614, %v496
    %v668 = vmul.f32 %v616, %v496
    %v669 = vmul.f32 %v618, %v496
    %v670 = vmul.f32 %v620, %v496
    %v671 = vmul.f32 %v622, %v496
    %v672 = vmul.f32 %v624, %v496
    %v673 = vmul.f32 %v626, %v496
    %v674 = vmul.f32 %v628, %v496
    %v675 = vmul.f32 %v630, %v496
    %v676 = vmul.f32 %v632, %v496
    %v677 = vmul.f32 %v634, %v496
    %v678 = vmul.f32 %v636, %v496
    %v679 = vmul.f32 %v638, %v496
    %v680 = vmul.f32 %v640, %v496
    %v681 = vmul.f32 %v642, %v496
    %v682 = vmul.f32 %v644, %v496
    %v683 = vmul.f32 %v646, %v496
    %v684 = vmul.f32 %v648, %v496
    %v685 = vmul.f32 %v650, %v496
    %v686 = vmul.f32 %v652, %v496
    %v687 = vmul.f32 %v654, %v496
    %v688 = vmul.f32 %v656, %v496
    %v689 = vadd.f32 %v657, 1e-05
    %v690 = vadd.f32 %v658, 1e-05
    %v691 = vadd.f32 %v659, 1e-05
    %v692 = vadd.f32 %v660, 1e-05
    %v693 = vadd.f32 %v661, 1e-05
    %v694 = vadd.f32 %v662, 1e-05
    %v695 = vadd.f32 %v663, 1e-05
    %v696 = vadd.f32 %v664, 1e-05
    %v697 = vadd.f32 %v665, 1e-05
    %v698 = vadd.f32 %v666, 1e-05
    %v699 = vadd.f32 %v667, 1e-05
    %v700 = vadd.f32 %v668, 1e-05
    %v701 = vadd.f32 %v669, 1e-05
    %v702 = vadd.f32 %v670, 1e-05
    %v703 = vadd.f32 %v671, 1e-05
    %v704 = vadd.f32 %v672, 1e-05
    %v705 = vadd.f32 %v673, 1e-05
    %v706 = vadd.f32 %v674, 1e-05
    %v707 = vadd.f32 %v675, 1e-05
    %v708 = vadd.f32 %v676, 1e-05
    %v709 = vadd.f32 %v677, 1e-05
    %v710 = vadd.f32 %v678, 1e-05
    %v711 = vadd.f32 %v679, 1e-05
    %v712 = vadd.f32 %v680, 1e-05
    %v713 = vadd.f32 %v681, 1e-05
    %v714 = vadd.f32 %v682, 1e-05
    %v715 = vadd.f32 %v683, 1e-05
    %v716 = vadd.f32 %v684, 1e-05
    %v717 = vadd.f32 %v685, 1e-05
    %v718 = vadd.f32 %v686, 1e-05
    %v719 = vadd.f32 %v687, 1e-05
    %v720 = vadd.f32 %v688, 1e-05
    %v721 = vrsqrt.pop %v689
    %v722 = vrsqrt.pop %v690
    %v723 = vrsqrt.pop %v691
    %v724 = vrsqrt.pop %v692
    %v725 = vrsqrt.pop %v693
    %v726 = vrsqrt.pop %v694
    %v727 = vrsqrt.pop %v695
    %v728 = vrsqrt.pop %v696
    %v729 = vrsqrt.pop %v697
    %v730 = vrsqrt.pop %v698
    %v731 = vrsqrt.pop %v699
    %v732 = vrsqrt.pop %v700
    %v733 = vrsqrt.pop %v701
    %v734 = vrsqrt.pop %v702
    %v735 = vrsqrt.pop %v703
    %v736 = vrsqrt.pop %v704
    %v737 = vrsqrt.pop %v705
    %v738 = vrsqrt.pop %v706
    %v739 = vrsqrt.pop %v707
    %v740 = vrsqrt.pop %v708
    %v741 = vrsqrt.pop %v709
    %v742 = vrsqrt.pop %v710
    %v743 = vrsqrt.pop %v711
    %v744 = vrsqrt.pop %v712
    %v745 = vrsqrt.pop %v713
    %v746 = vrsqrt.pop %v714
    %v747 = vrsqrt.pop %v715
    %v748 = vrsqrt.pop %v716
    %v749 = vrsqrt.pop %v717
    %v750 = vrsqrt.pop %v718
    %v751 = vrsqrt.pop %v719
    %v752 = vrsqrt.pop %v720
    %v753 = vmul.f32 %v529, %v721
    %v754 = vmul.f32 %v530, %v722
    %v755 = vmul.f32 %v531, %v723
    %v756 = vmul.f32 %v532, %v724
    %v757 = vmul.f32 %v533, %v725
    %v758 = vmul.f32 %v534, %v726
    %v759 = vmul.f32 %v535, %v727
    %v760 = vmul.f32 %v536, %v728
    %v761 = vmul.f32 %v537, %v729
    %v762 = vmul.f32 %v538, %v730
    %v763 = vmul.f32 %v539, %v731
    %v764 = vmul.f32 %v540, %v732
    %v765 = vmul.f32 %v541, %v733
    %v766 = vmul.f32 %v542, %v734
    %v767 = vmul.f32 %v543, %v735
    %v768 = vmul.f32 %v544, %v736
    %v769 = vmul.f32 %v545, %v737
    %v770 = vmul.f32 %v546, %v738
    %v771 = vmul.f32 %v547, %v739
    %v772 = vmul.f32 %v548, %v740
    %v773 = vmul.f32 %v549, %v741
    %v774 = vmul.f32 %v550, %v742
    %v775 = vmul.f32 %v551, %v743
    %v776 = vmul.f32 %v552, %v744
    %v777 = vmul.f32 %v553, %v745
    %v778 = vmul.f32 %v554, %v746
    %v779 = vmul.f32 %v555, %v747
    %v780 = vmul.f32 %v556, %v748
    %v781 = vmul.f32 %v557, %v749
    %v782 = vmul.f32 %v558, %v750
    %v783 = vmul.f32 %v559, %v751
    %v784 = vmul.f32 %v560, %v752
    %v785 = vlaneseq
    %v786 = vshrl.u32 %v785, 7
    %v787 = vsub.s32 0, %v786
    %v788 = vrot.slane %v430, %v787
    %v789 = vmul.f32 %v753, %v788
    %v790 = vmul.f32 %v754, %v788
    %v791 = vmul.f32 %v755, %v788
    %v792 = vmul.f32 %v756, %v788
    %v793 = vmul.f32 %v757, %v788
    %v794 = vmul.f32 %v758, %v788
    %v795 = vmul.f32 %v759, %v788
    %v796 = vmul.f32 %v760, %v788
    %v797 = vmul.f32 %v761, %v788
    %v798 = vmul.f32 %v762, %v788
    %v799 = vmul.f32 %v763, %v788
    %v800 = vmul.f32 %v764, %v788
    %v801 = vmul.f32 %v765, %v788
    %v802 = vmul.f32 %v766, %v788
    %v803 = vmul.f32 %v767, %v788
    %v804 = vmul.f32 %v768, %v788
    %v805 = vmul.f32 %v769, %v788
    %v806 = vmul.f32 %v770, %v788
    %v807 = vmul.f32 %v771, %v788
    %v808 = vmul.f32 %v772, %v788
    %v809 = vmul.f32 %v773, %v788
    %v810 = vmul.f32 %v774, %v788
    %v811 = vmul.f32 %v775, %v788
    %v812 = vmul.f32 %v776, %v788
    %v813 = vmul.f32 %v777, %v788
    %v814 = vmul.f32 %v778, %v788
    %v815 = vmul.f32 %v779, %v788
    %v816 = vmul.f32 %v780, %v788
    %v817 = vmul.f32 %v781, %v788
    %v818 = vmul.f32 %v782, %v788
    %v819 = vmul.f32 %v783, %v788
    %v820 = vmul.f32 %v784, %v788
    %v821 = vlaneseq
    %v822 = vshrl.u32 %v821, 7
    %v823 = vsub.s32 0, %v822
    %v824 = vrot.slane %v431, %v823
    %v825 = vadd.f32 %v789, %v824
    %v826 = vadd.f32 %v790, %v824
    %v827 = vadd.f32 %v791, %v824
    %v828 = vadd.f32 %v792, %v824
    %v829 = vadd.f32 %v793, %v824
    %v830 = vadd.f32 %v794, %v824
    %v831 = vadd.f32 %v795, %v824
    %v832 = vadd.f32 %v796, %v824
    %v833 = vadd.f32 %v797, %v824
    %v834 = vadd.f32 %v798, %v824
    %v835 = vadd.f32 %v799, %v824
    %v836 = vadd.f32 %v800, %v824
    %v837 = vadd.f32 %v801, %v824
    %v838 = vadd.f32 %v802, %v824
    %v839 = vadd.f32 %v803, %v824
    %v840 = vadd.f32 %v804, %v824
    %v841 = vadd.f32 %v805, %v824
    %v842 = vadd.f32 %v806, %v824
    %v843 = vadd.f32 %v807, %v824
    %v844 = vadd.f32 %v808, %v824
    %v845 = vadd.f32 %v809, %v824
    %v846 = vadd.f32 %v810, %v824
    %v847 = vadd.f32 %v811, %v824
    %v848 = vadd.f32 %v812, %v824
    %v849 = vadd.f32 %v813, %v824
    %v850 = vadd.f32 %v814, %v824
    %v851 = vadd.f32 %v815, %v824
    %v852 = vadd.f32 %v816, %v824
    %v853 = vadd.f32 %v817, %v824
    %v854 = vadd.f32 %v818, %v824
    %v855 = vadd.f32 %v819, %v824
    %v856 = vadd.f32 %v820, %v824
    %v857 = vmul.f32 %v825, 0.5
    %v858 = vmul.f32 %v826, 0.5
    %v859 = vmul.f32 %v827, 0.5
    %v860 = vmul.f32 %v828, 0.5
    %v861 = vmul.f32 %v829, 0.5
    %v862 = vmul.f32 %v830, 0.5
    %v863 = vmul.f32 %v831, 0.5
    %v864 = vmul.f32 %v832, 0.5
    %v865 = vmul.f32 %v833, 0.5
    %v866 = vmul.f32 %v834, 0.5
    %v867 = vmul.f32 %v835, 0.5
    %v868 = vmul.f32 %v836, 0.5
    %v869 = vmul.f32 %v837, 0.5
    %v870 = vmul.f32 %v838, 0.5
    %v871 = vmul.f32 %v839, 0.5
    %v872 = vmul.f32 %v840, 0.5
    %v873 = vmul.f32 %v841, 0.5
    %v874 = vmul.f32 %v842, 0.5
    %v875 = vmul.f32 %v843, 0.5
    %v876 = vmul.f32 %v844, 0.5
    %v877 = vmul.f32 %v845, 0.5
    %v878 = vmul.f32 %v846, 0.5
    %v879 = vmul.f32 %v847, 0.5
    %v880 = vmul.f32 %v848, 0.5
    %v881 = vmul.f32 %v849, 0.5
    %v882 = vmul.f32 %v850, 0.5
    %v883 = vmul.f32 %v851, 0.5
    %v884 = vmul.f32 %v852, 0.5
    %v885 = vmul.f32 %v853, 0.5
    %v886 = vmul.f32 %v854, 0.5
    %v887 = vmul.f32 %v855, 0.5
    %v888 = vmul.f32 %v856, 0.5
    %v889 = vmul.f32 %v825, 0.70710677
    %v890 = vmul.f32 %v826, 0.70710677
    %v891 = vmul.f32 %v827, 0.70710677
    %v892 = vmul.f32 %v828, 0.70710677
    %v893 = vmul.f32 %v829, 0.70710677
    %v894 = vmul.f32 %v830, 0.70710677
    %v895 = vmul.f32 %v831, 0.70710677
    %v896 = vmul.f32 %v832, 0.70710677
    %v897 = vmul.f32 %v833, 0.70710677
    %v898 = vmul.f32 %v834, 0.70710677
    %v899 = vmul.f32 %v835, 0.70710677
    %v900 = vmul.f32 %v836, 0.70710677
    %v901 = vmul.f32 %v837, 0.70710677
    %v902 = vmul.f32 %v838, 0.70710677
    %v903 = vmul.f32 %v839, 0.70710677
    %v904 = vmul.f32 %v840, 0.70710677
    %v905 = vmul.f32 %v841, 0.70710677
    %v906 = vmul.f32 %v842, 0.70710677
    %v907 = vmul.f32 %v843, 0.70710677
    %v908 = vmul.f32 %v844, 0.70710677
    %v909 = vmul.f32 %v845, 0.70710677
    %v910 = vmul.f32 %v846, 0.70710677
    %v911 = vmul.f32 %v847, 0.70710677
    %v912 = vmul.f32 %v848, 0.70710677
    %v913 = vmul.f32 %v849, 0.70710677
    %v914 = vmul.f32 %v850, 0.70710677
    %v915 = vmul.f32 %v851, 0.70710677
    %v916 = vmul.f32 %v852, 0.70710677
    %v917 = vmul.f32 %v853, 0.70710677
    %v918 = vmul.f32 %v854, 0.70710677
    %v919 = vmul.f32 %v855, 0.70710677
    %v920 = vmul.f32 %v856, 0.70710677
    %v921 = verf.f32.pop %v889
    %v922 = verf.f32.pop %v890
    %v923 = verf.f32.pop %v891
    %v924 = verf.f32.pop %v892
    %v925 = verf.f32.pop %v893
    %v926 = verf.f32.pop %v894
    %v927 = verf.f32.pop %v895
    %v928 = verf.f32.pop %v896
    %v929 = verf.f32.pop %v897
    %v930 = verf.f32.pop %v898
    %v931 = verf.f32.pop %v899
    %v932 = verf.f32.pop %v900
    %v933 = verf.f32.pop %v901
    %v934 = verf.f32.pop %v902
    %v935 = verf.f32.pop %v903
    %v936 = verf.f32.pop %v904
    %v937 = verf.f32.pop %v905
    %v938 = verf.f32.pop %v906
    %v939 = verf.f32.pop %v907
    %v940 = verf.f32.pop %v908
    %v941 = verf.f32.pop %v909
    %v942 = verf.f32.pop %v910
    %v943 = verf.f32.pop %v911
    %v944 = verf.f32.pop %v912
    %v945 = verf.f32.pop %v913
    %v946 = verf.f32.pop %v914
    %v947 = verf.f32.pop %v915
    %v948 = verf.f32.pop %v916
    %v949 = verf.f32.pop %v917
    %v950 = verf.f32.pop %v918
    %v951 = verf.f32.pop %v919
    %v952 = verf.f32.pop %v920
    %v953 = vadd.f32 %v921, 1.0
    %v954 = vadd.f32 %v922, 1.0
    %v955 = vadd.f32 %v923, 1.0
    %v956 = vadd.f32 %v924, 1.0
    %v957 = vadd.f32 %v925, 1.0
    %v958 = vadd.f32 %v926, 1.0
    %v959 = vadd.f32 %v927, 1.0
    %v960 = vadd.f32 %v928, 1.0
    %v961 = vadd.f32 %v929, 1.0
    %v962 = vadd.f32 %v930, 1.0
    %v963 = vadd.f32 %v931, 1.0
    %v964 = vadd.f32 %v932, 1.0
    %v965 = vadd.f32 %v933, 1.0
    %v966 = vadd.f32 %v934, 1.0
    %v967 = vadd.f32 %v935, 1.0
    %v968 = vadd.f32 %v936, 1.0
    %v969 = vadd.f32 %v937, 1.0
    %v970 = vadd.f32 %v938, 1.0
    %v971 = vadd.f32 %v939, 1.0
    %v972 = vadd.f32 %v940, 1.0
    %v973 = vadd.f32 %v941, 1.0
    %v974 = vadd.f32 %v942, 1.0
    %v975 = vadd.f32 %v943, 1.0
    %v976 = vadd.f32 %v944, 1.0
    %v977 = vadd.f32 %v945, 1.0
    %v978 = vadd.f32 %v946, 1.0
    %v979 = vadd.f32 %v947, 1.0
    %v980 = vadd.f32 %v948, 1.0
    %v981 = vadd.f32 %v949, 1.0
    %v982 = vadd.f32 %v950, 1.0
    %v983 = vadd.f32 %v951, 1.0
    %v984 = vadd.f32 %v952, 1.0
    %v985 = vmul.f32 %v857, %v953
    %v986 = vmul.f32 %v858, %v954
    %v987 = vmul.f32 %v859, %v955
    %v988 = vmul.f32 %v860, %v956
    %v989 = vmul.f32 %v861, %v957
    %v990 = vmul.f32 %v862, %v958
    %v991 = vmul.f32 %v863, %v959
    %v992 = vmul.f32 %v864, %v960
    %v993 = vmul.f32 %v865, %v961
    %v994 = vmul.f32 %v866, %v962
    %v995 = vmul.f32 %v867, %v963
    %v996 = vmul.f32 %v868, %v964
    %v997 = vmul.f32 %v869, %v965
    %v998 = vmul.f32 %v870, %v966
    %v999 = vmul.f32 %v871, %v967
    %v1000 = vmul.f32 %v872, %v968
    %v1001 = vmul.f32 %v873, %v969
    %v1002 = vmul.f32 %v874, %v970
    %v1003 = vmul.f32 %v875, %v971
    %v1004 = vmul.f32 %v876, %v972
    %v1005 = vmul.f32 %v877, %v973
    %v1006 = vmul.f32 %v878, %v974
    %v1007 = vmul.f32 %v879, %v975
    %v1008 = vmul.f32 %v880, %v976
    %v1009 = vmul.f32 %v881, %v977
    %v1010 = vmul.f32 %v882, %v978
    %v1011 = vmul.f32 %v883, %v979
    %v1012 = vmul.f32 %v884, %v980
    %v1013 = vmul.f32 %v885, %v981
    %v1014 = vmul.f32 %v886, %v982
    %v1015 = vmul.f32 %v887, %v983
    %v1016 = vmul.f32 %v888, %v984
    %v1017 = vpack.c.bf16 %v986, %v985
    %v1018 = vpack.c.bf16 %v988, %v987
    %v1019 = vpack.c.bf16 %v990, %v989
    %v1020 = vpack.c.bf16 %v992, %v991
    %v1021 = vpack.c.bf16 %v994, %v993
    %v1022 = vpack.c.bf16 %v996, %v995
    %v1023 = vpack.c.bf16 %v998, %v997
    %v1024 = vpack.c.bf16 %v1000, %v999
    %v1025 = vpack.c.bf16 %v1002, %v1001
    %v1026 = vpack.c.bf16 %v1004, %v1003
    %v1027 = vpack.c.bf16 %v1006, %v1005
    %v1028 = vpack.c.bf16 %v1008, %v1007
    %v1029 = vpack.c.bf16 %v1010, %v1009
    %v1030 = vpack.c.bf16 %v1012, %v1011
    %v1031 = vpack.c.bf16 %v1014, %v1013
    %v1032 = vpack.c.bf16 %v1016, %v1015
    %v1033 = vld [vmem:[#allocation7] sm:$0xf]
    %v1034 = vld [vmem:[#allocation7 + $0x4] sm:$0xf]
    %v1035 = vld [vmem:[#allocation7 + $0x8] sm:$0xf]
    %v1036 = vld [vmem:[#allocation7 + $0xc] sm:$0xf]
    %v1037 = vld [vmem:[#allocation7 + $0x10] sm:$0xf]
    %v1038 = vld [vmem:[#allocation7 + $0x14] sm:$0xf]
    %v1039 = vld [vmem:[#allocation7 + $0x18] sm:$0xf]
    %v1040 = vld [vmem:[#allocation7 + $0x1c] sm:$0xf]
    %v1041 = vld [vmem:[#allocation7 + $0x20] sm:$0xf]
    %v1042 = vld [vmem:[#allocation7 + $0x24] sm:$0xf]
    %v1043 = vld [vmem:[#allocation7 + $0x28] sm:$0xf]
    %v1044 = vld [vmem:[#allocation7 + $0x2c] sm:$0xf]
    %v1045 = vld [vmem:[#allocation7 + $0x30] sm:$0xf]
    %v1046 = vld [vmem:[#allocation7 + $0x34] sm:$0xf]
    %v1047 = vld [vmem:[#allocation7 + $0x38] sm:$0xf]
    %v1048 = vld [vmem:[#allocation7 + $0x3c] sm:$0xf]
    %v1049 = vld [vmem:[#allocation8 + $0x3] sm:$0x1]
    %v1050 = vlaneseq
    %v1051 = vshrl.u32 %v1050, 7
    %v1052 = vsub.s32 0, %v1051
    %v1053 = vrot.slane %v1049, %v1052
    %v1070 = vunpack.c.l.b16 %v1033
    %v1071 = vunpack.c.l.b16 %v1034
    %v1072 = vunpack.c.l.b16 %v1035
    %v1073 = vunpack.c.l.b16 %v1036
    %v1074 = vunpack.c.l.b16 %v1037
    %v1075 = vunpack.c.l.b16 %v1038
    %v1076 = vunpack.c.l.b16 %v1039
    %v1077 = vunpack.c.l.b16 %v1040
    %v1078 = vunpack.c.l.b16 %v1041
    %v1079 = vunpack.c.l.b16 %v1042
    %v1080 = vunpack.c.l.b16 %v1043
    %v1081 = vunpack.c.l.b16 %v1044
    %v1082 = vunpack.c.l.b16 %v1045
    %v1083 = vunpack.c.l.b16 %v1046
    %v1084 = vunpack.c.l.b16 %v1047
    %v1085 = vunpack.c.l.b16 %v1048
    %v1086 = vpack.c.b16 %v1071, %v1070
    %v1087 = vpack.c.b16 %v1073, %v1072
    %v1088 = vpack.c.b16 %v1075, %v1074
    %v1089 = vpack.c.b16 %v1077, %v1076
    %v1090 = vpack.c.b16 %v1079, %v1078
    %v1091 = vpack.c.b16 %v1081, %v1080
    %v1092 = vpack.c.b16 %v1083, %v1082
    %v1093 = vpack.c.b16 %v1085, %v1084
    %1102 = vmatprep.subr.bf16.mxu0 0
    %1103 = vmatpush1.bf16.msra.mxu0 %v1093
    %1104 = vmatprep.subr.bf16.mxu0 0
    %1105 = vmatpush1.bf16.msra.mxu0 %v1092
    %1106 = vmatprep.subr.bf16.mxu0 0
    %1107 = vmatpush1.bf16.msra.mxu0 %v1091
    %1108 = vmatprep.subr.bf16.mxu0 0
    %1109 = vmatpush1.bf16.msra.mxu0 %v1090
    %1110 = vmatprep.subr.bf16.mxu0 0
    %1111 = vmatpush1.bf16.msra.mxu0 %v1089
    %1112 = vmatprep.subr.bf16.mxu0 0
    %1113 = vmatpush1.bf16.msra.mxu0 %v1088
    %1114 = vmatprep.subr.bf16.mxu0 0
    %1115 = vmatpush1.bf16.msra.mxu0 %v1087
    %1116 = vmatprep.subr.bf16.mxu0 0
    %1117 = vmatpush1.bf16.msra.mxu0 %v1086
    %1118 = vmatprep.subr.bf16.mxu0 0
    %1119 = vmatpush2.bf16.msra.mxu0 0
    %1120 = vmatprep.subr.bf16.mxu0 0
    %1121 = vmatpush2.bf16.msra.mxu0 0
    %1122 = vmatprep.subr.bf16.mxu0 0
    %1123 = vmatpush2.bf16.msra.mxu0 0
    %1124 = vmatprep.subr.bf16.mxu0 0
    %1125 = vmatpush2.bf16.msra.mxu0 0
    %1126 = vmatprep.subr.bf16.mxu0 0
    %1127 = vmatpush2.bf16.msra.mxu0 0
    %1128 = vmatprep.subr.bf16.mxu0 0
    %1129 = vmatpush2.bf16.msra.mxu0 0
    %1130 = vmatprep.subr.bf16.mxu0 0
    %1131 = vmatpush2.bf16.msra.mxu0 0
    %1132 = vmatprep.subr.bf16.mxu0 0
    %1133 = vmatpush2.bf16.msra.mxu0 0
    %1134 = vmatprep.mubr.bf16.mxu0 0
    %1135 = vmatmul.mubr.bf16.gmra.mxu0 %v1017
    %v1136 = vpop.f32.mrf.mxu0
    %v1137 = vadd.f32 %v1053, %v1136
    %v1138 = vpop.f32.mrf.mxu0
    %v1139 = vpop.f32.mrf.mxu0
    %v1140 = vadd.f32 %v1053, %v1139
    %v1141 = vpop.f32.mrf.mxu0
    %1142 = vmatprep.mubr.bf16.mxu0 0
    %1143 = vmatmul.mubr.bf16.gmra.mxu0 %v1018
    %v1144 = vpop.f32.mrf.mxu0
    %v1145 = vadd.f32 %v1053, %v1144
    %v1146 = vpop.f32.mrf.mxu0
    %v1147 = vpop.f32.mrf.mxu0
    %v1148 = vadd.f32 %v1053, %v1147
    %v1149 = vpop.f32.mrf.mxu0
    %1150 = vmatprep.mubr.bf16.mxu0 0
    %1151 = vmatmul.mubr.bf16.gmra.mxu0 %v1019
    %v1152 = vpop.f32.mrf.mxu0
    %v1153 = vadd.f32 %v1053, %v1152
    %v1154 = vpop.f32.mrf.mxu0
    %v1155 = vpop.f32.mrf.mxu0
    %v1156 = vadd.f32 %v1053, %v1155
    %v1157 = vpop.f32.mrf.mxu0
    %1158 = vmatprep.mubr.bf16.mxu0 0
    %1159 = vmatmul.mubr.bf16.gmra.mxu0 %v1020
    %v1160 = vpop.f32.mrf.mxu0
    %v1161 = vadd.f32 %v1053, %v1160
    %v1162 = vpop.f32.mrf.mxu0
    %v1163 = vpop.f32.mrf.mxu0
    %v1164 = vadd.f32 %v1053, %v1163
    %v1165 = vpop.f32.mrf.mxu0
    %1166 = vmatprep.mubr.bf16.mxu0 0
    %1167 = vmatmul.mubr.bf16.gmra.mxu0 %v1021
    %v1168 = vpop.f32.mrf.mxu0
    %v1169 = vadd.f32 %v1053, %v1168
    %v1170 = vpop.f32.mrf.mxu0
    %v1171 = vpop.f32.mrf.mxu0
    %v1172 = vadd.f32 %v1053, %v1171
    %v1173 = vpop.f32.mrf.mxu0
    %1174 = vmatprep.mubr.bf16.mxu0 0
    %1175 = vmatmul.mubr.bf16.gmra.mxu0 %v1022
    %v1176 = vpop.f32.mrf.mxu0
    %v1177 = vadd.f32 %v1053, %v1176
    %v1178 = vpop.f32.mrf.mxu0
    %v1179 = vpop.f32.mrf.mxu0
    %v1180 = vadd.f32 %v1053, %v1179
    %v1181 = vpop.f32.mrf.mxu0
    %1182 = vmatprep.mubr.bf16.mxu0 0
    %1183 = vmatmul.mubr.bf16.gmra.mxu0 %v1023
    %v1184 = vpop.f32.mrf.mxu0
    %v1185 = vadd.f32 %v1053, %v1184
    %v1186 = vpop.f32.mrf.mxu0
    %v1187 = vpop.f32.mrf.mxu0
    %v1188 = vadd.f32 %v1053, %v1187
    %v1189 = vpop.f32.mrf.mxu0
    %1190 = vmatprep.mubr.bf16.mxu0 0
    %1191 = vmatmul.mubr.bf16.gmra.mxu0 %v1024
    %v1192 = vpop.f32.mrf.mxu0
    %v1193 = vadd.f32 %v1053, %v1192
    %v1194 = vpop.f32.mrf.mxu0
    %v1195 = vpop.f32.mrf.mxu0
    %v1196 = vadd.f32 %v1053, %v1195
    %v1197 = vpop.f32.mrf.mxu0
    %1198 = vmatprep.mubr.bf16.mxu0 0
    %1199 = vmatmul.mubr.bf16.gmra.mxu0 %v1025
    %v1200 = vpop.f32.mrf.mxu0
    %v1201 = vadd.f32 %v1053, %v1200
    %v1202 = vpop.f32.mrf.mxu0
    %v1203 = vpop.f32.mrf.mxu0
    %v1204 = vadd.f32 %v1053, %v1203
    %v1205 = vpop.f32.mrf.mxu0
    %1206 = vmatprep.mubr.bf16.mxu0 0
    %1207 = vmatmul.mubr.bf16.gmra.mxu0 %v1026
    %v1208 = vpop.f32.mrf.mxu0
    %v1209 = vadd.f32 %v1053, %v1208
    %v1210 = vpop.f32.mrf.mxu0
    %v1211 = vpop.f32.mrf.mxu0
    %v1212 = vadd.f32 %v1053, %v1211
    %v1213 = vpop.f32.mrf.mxu0
    %1214 = vmatprep.mubr.bf16.mxu0 0
    %1215 = vmatmul.mubr.bf16.gmra.mxu0 %v1027
    %v1216 = vpop.f32.mrf.mxu0
    %v1217 = vadd.f32 %v1053, %v1216
    %v1218 = vpop.f32.mrf.mxu0
    %v1219 = vpop.f32.mrf.mxu0
    %v1220 = vadd.f32 %v1053, %v1219
    %v1221 = vpop.f32.mrf.mxu0
    %1222 = vmatprep.mubr.bf16.mxu0 0
    %1223 = vmatmul.mubr.bf16.gmra.mxu0 %v1028
    %v1224 = vpop.f32.mrf.mxu0
    %v1225 = vadd.f32 %v1053, %v1224
    %v1226 = vpop.f32.mrf.mxu0
    %v1227 = vpop.f32.mrf.mxu0
    %v1228 = vadd.f32 %v1053, %v1227
    %v1229 = vpop.f32.mrf.mxu0
    %1230 = vmatprep.mubr.bf16.mxu0 0
    %1231 = vmatmul.mubr.bf16.gmra.mxu0 %v1029
    %v1232 = vpop.f32.mrf.mxu0
    %v1233 = vadd.f32 %v1053, %v1232
    %v1234 = vpop.f32.mrf.mxu0
    %v1235 = vpop.f32.mrf.mxu0
    %v1236 = vadd.f32 %v1053, %v1235
    %v1237 = vpop.f32.mrf.mxu0
    %1238 = vmatprep.mubr.bf16.mxu0 0
    %1239 = vmatmul.mubr.bf16.gmra.mxu0 %v1030
    %v1240 = vpop.f32.mrf.mxu0
    %v1241 = vadd.f32 %v1053, %v1240
    %v1242 = vpop.f32.mrf.mxu0
    %v1243 = vpop.f32.mrf.mxu0
    %v1244 = vadd.f32 %v1053, %v1243
    %v1245 = vpop.f32.mrf.mxu0
    %1246 = vmatprep.mubr.bf16.mxu0 0
    %1247 = vmatmul.mubr.bf16.gmra.mxu0 %v1031
    %v1248 = vpop.f32.mrf.mxu0
    %v1249 = vadd.f32 %v1053, %v1248
    %v1250 = vpop.f32.mrf.mxu0
    %v1251 = vpop.f32.mrf.mxu0
    %v1252 = vadd.f32 %v1053, %v1251
    %v1253 = vpop.f32.mrf.mxu0
    %1254 = vmatprep.mubr.bf16.mxu0 0
    %1255 = vmatmul.mubr.bf16.gmra.mxu0 %v1032
    %v1256 = vpop.f32.mrf.mxu0
    %v1257 = vadd.f32 %v1053, %v1256
    %v1258 = vpop.f32.mrf.mxu0
    %v1259 = vpop.f32.mrf.mxu0
    %v1260 = vadd.f32 %v1053, %v1259
    %v1261 = vpop.f32.mrf.mxu0
    %1262 = vdwg.mxu0
    %v1263 = vld [vmem:[#allocation8 + $0x4] sm:$0x1]
    %v1264 = vld [vmem:[#allocation8 + $0x5] sm:$0x1]
    %1265 = vadd.xlane.f32.xlu0 %v1137
    %v1266 = vpop.xlane.xlu0 %1265
    %1267 = vadd.xlane.f32.xlu0 %v1140
    %v1268 = vpop.xlane.xlu0 %1267
    %1269 = vadd.xlane.f32.xlu0 %v1145
    %v1270 = vpop.xlane.xlu0 %1269
    %1271 = vadd.xlane.f32.xlu0 %v1148
    %v1272 = vpop.xlane.xlu0 %1271
    %1273 = vadd.xlane.f32.xlu0 %v1153
    %v1274 = vpop.xlane.xlu0 %1273
    %1275 = vadd.xlane.f32.xlu0 %v1156
    %v1276 = vpop.xlane.xlu0 %1275
    %1277 = vadd.xlane.f32.xlu0 %v1161
    %v1278 = vpop.xlane.xlu0 %1277
    %1279 = vadd.xlane.f32.xlu0 %v1164
    %v1280 = vpop.xlane.xlu0 %1279
    %1281 = vadd.xlane.f32.xlu0 %v1169
    %v1282 = vpop.xlane.xlu0 %1281
    %1283 = vadd.xlane.f32.xlu0 %v1172
    %v1284 = vpop.xlane.xlu0 %1283
    %1285 = vadd.xlane.f32.xlu0 %v1177
    %v1286 = vpop.xlane.xlu0 %1285
    %1287 = vadd.xlane.f32.xlu0 %v1180
    %v1288 = vpop.xlane.xlu0 %1287
    %1289 = vadd.xlane.f32.xlu0 %v1185
    %v1290 = vpop.xlane.xlu0 %1289
    %1291 = vadd.xlane.f32.xlu0 %v1188
    %v1292 = vpop.xlane.xlu0 %1291
    %1293 = vadd.xlane.f32.xlu0 %v1193
    %v1294 = vpop.xlane.xlu0 %1293
    %1295 = vadd.xlane.f32.xlu0 %v1196
    %v1296 = vpop.xlane.xlu0 %1295
    %1297 = vadd.xlane.f32.xlu0 %v1201
    %v1298 = vpop.xlane.xlu0 %1297
    %1299 = vadd.xlane.f32.xlu0 %v1204
    %v1300 = vpop.xlane.xlu0 %1299
    %1301 = vadd.xlane.f32.xlu0 %v1209
    %v1302 = vpop.xlane.xlu0 %1301
    %1303 = vadd.xlane.f32.xlu0 %v1212
    %v1304 = vpop.xlane.xlu0 %1303
    %1305 = vadd.xlane.f32.xlu0 %v1217
    %v1306 = vpop.xlane.xlu0 %1305
    %1307 = vadd.xlane.f32.xlu0 %v1220
    %v1308 = vpop.xlane.xlu0 %1307
    %1309 = vadd.xlane.f32.xlu0 %v1225
    %v1310 = vpop.xlane.xlu0 %1309
    %1311 = vadd.xlane.f32.xlu0 %v1228
    %v1312 = vpop.xlane.xlu0 %1311
    %1313 = vadd.xlane.f32.xlu0 %v1233
    %v1314 = vpop.xlane.xlu0 %1313
    %1315 = vadd.xlane.f32.xlu0 %v1236
    %v1316 = vpop.xlane.xlu0 %1315
    %1317 = vadd.xlane.f32.xlu0 %v1241
    %v1318 = vpop.xlane.xlu0 %1317
    %1319 = vadd.xlane.f32.xlu0 %v1244
    %v1320 = vpop.xlane.xlu0 %1319
    %1321 = vadd.xlane.f32.xlu0 %v1249
    %v1322 = vpop.xlane.xlu0 %1321
    %1323 = vadd.xlane.f32.xlu0 %v1252
    %v1324 = vpop.xlane.xlu0 %1323
    %1325 = vadd.xlane.f32.xlu0 %v1257
    %v1326 = vpop.xlane.xlu0 %1325
    %1327 = vadd.xlane.f32.xlu0 %v1260
    %v1328 = vpop.xlane.xlu0 %1327
    %v1329 = vmul.f32 %v1266, %v496
    %v1330 = vmul.f32 %v1268, %v496
    %v1331 = vmul.f32 %v1270, %v496
    %v1332 = vmul.f32 %v1272, %v496
    %v1333 = vmul.f32 %v1274, %v496
    %v1334 = vmul.f32 %v1276, %v496
    %v1335 = vmul.f32 %v1278, %v496
    %v1336 = vmul.f32 %v1280, %v496
    %v1337 = vmul.f32 %v1282, %v496
    %v1338 = vmul.f32 %v1284, %v496
    %v1339 = vmul.f32 %v1286, %v496
    %v1340 = vmul.f32 %v1288, %v496
    %v1341 = vmul.f32 %v1290, %v496
    %v1342 = vmul.f32 %v1292, %v496
    %v1343 = vmul.f32 %v1294, %v496
    %v1344 = vmul.f32 %v1296, %v496
    %v1345 = vmul.f32 %v1298, %v496
    %v1346 = vmul.f32 %v1300, %v496
    %v1347 = vmul.f32 %v1302, %v496
    %v1348 = vmul.f32 %v1304, %v496
    %v1349 = vmul.f32 %v1306, %v496
    %v1350 = vmul.f32 %v1308, %v496
    %v1351 = vmul.f32 %v1310, %v496
    %v1352 = vmul.f32 %v1312, %v496
    %v1353 = vmul.f32 %v1314, %v496
    %v1354 = vmul.f32 %v1316, %v496
    %v1355 = vmul.f32 %v1318, %v496
    %v1356 = vmul.f32 %v1320, %v496
    %v1357 = vmul.f32 %v1322, %v496
    %v1358 = vmul.f32 %v1324, %v496
    %v1359 = vmul.f32 %v1326, %v496
    %v1360 = vmul.f32 %v1328, %v496
    %v1361 = vsub.f32 %v1137, %v1329
    %v1362 = vsub.f32 %v1140, %v1330
    %v1363 = vsub.f32 %v1145, %v1331
    %v1364 = vsub.f32 %v1148, %v1332
    %v1365 = vsub.f32 %v1153, %v1333
    %v1366 = vsub.f32 %v1156, %v1334
    %v1367 = vsub.f32 %v1161, %v1335
    %v1368 = vsub.f32 %v1164, %v1336
    %v1369 = vsub.f32 %v1169, %v1337
    %v1370 = vsub.f32 %v1172, %v1338
    %v1371 = vsub.f32 %v1177, %v1339
    %v1372 = vsub.f32 %v1180, %v1340
    %v1373 = vsub.f32 %v1185, %v1341
    %v1374 = vsub.f32 %v1188, %v1342
    %v1375 = vsub.f32 %v1193, %v1343
    %v1376 = vsub.f32 %v1196, %v1344
    %v1377 = vsub.f32 %v1201, %v1345
    %v1378 = vsub.f32 %v1204, %v1346
    %v1379 = vsub.f32 %v1209, %v1347
    %v1380 = vsub.f32 %v1212, %v1348
    %v1381 = vsub.f32 %v1217, %v1349
    %v1382 = vsub.f32 %v1220, %v1350
    %v1383 = vsub.f32 %v1225, %v1351
    %v1384 = vsub.f32 %v1228, %v1352
    %v1385 = vsub.f32 %v1233, %v1353
    %v1386 = vsub.f32 %v1236, %v1354
    %v1387 = vsub.f32 %v1241, %v1355
    %v1388 = vsub.f32 %v1244, %v1356
    %v1389 = vsub.f32 %v1249, %v1357
    %v1390 = vsub.f32 %v1252, %v1358
    %v1391 = vsub.f32 %v1257, %v1359
    %v1392 = vsub.f32 %v1260, %v1360
    %v1393 = vmul.f32 %v1361, %v1361
    %v1394 = vmul.f32 %v1362, %v1362
    %v1395 = vmul.f32 %v1363, %v1363
    %v1396 = vmul.f32 %v1364, %v1364
    %v1397 = vmul.f32 %v1365, %v1365
    %v1398 = vmul.f32 %v1366, %v1366
    %v1399 = vmul.f32 %v1367, %v1367
    %v1400 = vmul.f32 %v1368, %v1368
    %v1401 = vmul.f32 %v1369, %v1369
    %v1402 = vmul.f32 %v1370, %v1370
    %v1403 = vmul.f32 %v1371, %v1371
    %v1404 = vmul.f32 %v1372, %v1372
    %v1405 = vmul.f32 %v1373, %v1373
    %v1406 = vmul.f32 %v1374, %v1374
    %v1407 = vmul.f32 %v1375, %v1375
    %v1408 = vmul.f32 %v1376, %v1376
    %v1409 = vmul.f32 %v1377, %v1377
    %v1410 = vmul.f32 %v1378, %v1378
    %v1411 = vmul.f32 %v1379, %v1379
    %v1412 = vmul.f32 %v1380, %v1380
    %v1413 = vmul.f32 %v1381, %v1381
    %v1414 = vmul.f32 %v1382, %v1382
    %v1415 = vmul.f32 %v1383, %v1383
    %v1416 = vmul.f32 %v1384, %v1384
    %v1417 = vmul.f32 %v1385, %v1385
    %v1418 = vmul.f32 %v1386, %v1386
    %v1419 = vmul.f32 %v1387, %v1387
    %v1420 = vmul.f32 %v1388, %v1388
    %v1421 = vmul.f32 %v1389, %v1389
    %v1422 = vmul.f32 %v1390, %v1390
    %v1423 = vmul.f32 %v1391, %v1391
    %v1424 = vmul.f32 %v1392, %v1392
    %1425 = vadd.xlane.f32.xlu0 %v1393
    %v1426 = vpop.xlane.xlu0 %1425
    %1427 = vadd.xlane.f32.xlu0 %v1394
    %v1428 = vpop.xlane.xlu0 %1427
    %1429 = vadd.xlane.f32.xlu0 %v1395
    %v1430 = vpop.xlane.xlu0 %1429
    %1431 = vadd.xlane.f32.xlu0 %v1396
    %v1432 = vpop.xlane.xlu0 %1431
    %1433 = vadd.xlane.f32.xlu0 %v1397
    %v1434 = vpop.xlane.xlu0 %1433
    %1435 = vadd.xlane.f32.xlu0 %v1398
    %v1436 = vpop.xlane.xlu0 %1435
    %1437 = vadd.xlane.f32.xlu0 %v1399
    %v1438 = vpop.xlane.xlu0 %1437
    %1439 = vadd.xlane.f32.xlu0 %v1400
    %v1440 = vpop.xlane.xlu0 %1439
    %1441 = vadd.xlane.f32.xlu0 %v1401
    %v1442 = vpop.xlane.xlu0 %1441
    %1443 = vadd.xlane.f32.xlu0 %v1402
    %v1444 = vpop.xlane.xlu0 %1443
    %1445 = vadd.xlane.f32.xlu0 %v1403
    %v1446 = vpop.xlane.xlu0 %1445
    %1447 = vadd.xlane.f32.xlu0 %v1404
    %v1448 = vpop.xlane.xlu0 %1447
    %1449 = vadd.xlane.f32.xlu0 %v1405
    %v1450 = vpop.xlane.xlu0 %1449
    %1451 = vadd.xlane.f32.xlu0 %v1406
    %v1452 = vpop.xlane.xlu0 %1451
    %1453 = vadd.xlane.f32.xlu0 %v1407
    %v1454 = vpop.xlane.xlu0 %1453
    %1455 = vadd.xlane.f32.xlu0 %v1408
    %v1456 = vpop.xlane.xlu0 %1455
    %1457 = vadd.xlane.f32.xlu0 %v1409
    %v1458 = vpop.xlane.xlu0 %1457
    %1459 = vadd.xlane.f32.xlu0 %v1410
    %v1460 = vpop.xlane.xlu0 %1459
    %1461 = vadd.xlane.f32.xlu0 %v1411
    %v1462 = vpop.xlane.xlu0 %1461
    %1463 = vadd.xlane.f32.xlu0 %v1412
    %v1464 = vpop.xlane.xlu0 %1463
    %1465 = vadd.xlane.f32.xlu0 %v1413
    %v1466 = vpop.xlane.xlu0 %1465
    %1467 = vadd.xlane.f32.xlu0 %v1414
    %v1468 = vpop.xlane.xlu0 %1467
    %1469 = vadd.xlane.f32.xlu0 %v1415
    %v1470 = vpop.xlane.xlu0 %1469
    %1471 = vadd.xlane.f32.xlu0 %v1416
    %v1472 = vpop.xlane.xlu0 %1471
    %1473 = vadd.xlane.f32.xlu0 %v1417
    %v1474 = vpop.xlane.xlu0 %1473
    %1475 = vadd.xlane.f32.xlu0 %v1418
    %v1476 = vpop.xlane.xlu0 %1475
    %1477 = vadd.xlane.f32.xlu0 %v1419
    %v1478 = vpop.xlane.xlu0 %1477
    %1479 = vadd.xlane.f32.xlu0 %v1420
    %v1480 = vpop.xlane.xlu0 %1479
    %1481 = vadd.xlane.f32.xlu0 %v1421
    %v1482 = vpop.xlane.xlu0 %1481
    %1483 = vadd.xlane.f32.xlu0 %v1422
    %v1484 = vpop.xlane.xlu0 %1483
    %1485 = vadd.xlane.f32.xlu0 %v1423
    %v1486 = vpop.xlane.xlu0 %1485
    %1487 = vadd.xlane.f32.xlu0 %v1424
    %v1488 = vpop.xlane.xlu0 %1487
    %v1489 = vmul.f32 %v1426, %v496
    %v1490 = vmul.f32 %v1428, %v496
    %v1491 = vmul.f32 %v1430, %v496
    %v1492 = vmul.f32 %v1432, %v496
    %v1493 = vmul.f32 %v1434, %v496
    %v1494 = vmul.f32 %v1436, %v496
    %v1495 = vmul.f32 %v1438, %v496
    %v1496 = vmul.f32 %v1440, %v496
    %v1497 = vmul.f32 %v1442, %v496
    %v1498 = vmul.f32 %v1444, %v496
    %v1499 = vmul.f32 %v1446, %v496
    %v1500 = vmul.f32 %v1448, %v496
    %v1501 = vmul.f32 %v1450, %v496
    %v1502 = vmul.f32 %v1452, %v496
    %v1503 = vmul.f32 %v1454, %v496
    %v1504 = vmul.f32 %v1456, %v496
    %v1505 = vmul.f32 %v1458, %v496
    %v1506 = vmul.f32 %v1460, %v496
    %v1507 = vmul.f32 %v1462, %v496
    %v1508 = vmul.f32 %v1464, %v496
    %v1509 = vmul.f32 %v1466, %v496
    %v1510 = vmul.f32 %v1468, %v496
    %v1511 = vmul.f32 %v1470, %v496
    %v1512 = vmul.f32 %v1472, %v496
    %v1513 = vmul.f32 %v1474, %v496
    %v1514 = vmul.f32 %v1476, %v496
    %v1515 = vmul.f32 %v1478, %v496
    %v1516 = vmul.f32 %v1480, %v496
    %v1517 = vmul.f32 %v1482, %v496
    %v1518 = vmul.f32 %v1484, %v496
    %v1519 = vmul.f32 %v1486, %v496
    %v1520 = vmul.f32 %v1488, %v496
    %v1521 = vadd.f32 %v1489, 1e-05
    %v1522 = vadd.f32 %v1490, 1e-05
    %v1523 = vadd.f32 %v1491, 1e-05
    %v1524 = vadd.f32 %v1492, 1e-05
    %v1525 = vadd.f32 %v1493, 1e-05
    %v1526 = vadd.f32 %v1494, 1e-05
    %v1527 = vadd.f32 %v1495, 1e-05
    %v1528 = vadd.f32 %v1496, 1e-05
    %v1529 = vadd.f32 %v1497, 1e-05
    %v1530 = vadd.f32 %v1498, 1e-05
    %v1531 = vadd.f32 %v1499, 1e-05
    %v1532 = vadd.f32 %v1500, 1e-05
    %v1533 = vadd.f32 %v1501, 1e-05
    %v1534 = vadd.f32 %v1502, 1e-05
    %v1535 = vadd.f32 %v1503, 1e-05
    %v1536 = vadd.f32 %v1504, 1e-05
    %v1537 = vadd.f32 %v1505, 1e-05
    %v1538 = vadd.f32 %v1506, 1e-05
    %v1539 = vadd.f32 %v1507, 1e-05
    %v1540 = vadd.f32 %v1508, 1e-05
    %v1541 = vadd.f32 %v1509, 1e-05
    %v1542 = vadd.f32 %v1510, 1e-05
    %v1543 = vadd.f32 %v1511, 1e-05
    %v1544 = vadd.f32 %v1512, 1e-05
    %v1545 = vadd.f32 %v1513, 1e-05
    %v1546 = vadd.f32 %v1514, 1e-05
    %v1547 = vadd.f32 %v1515, 1e-05
    %v1548 = vadd.f32 %v1516, 1e-05
    %v1549 = vadd.f32 %v1517, 1e-05
    %v1550 = vadd.f32 %v1518, 1e-05
    %v1551 = vadd.f32 %v1519, 1e-05
    %v1552 = vadd.f32 %v1520, 1e-05
    %v1553 = vrsqrt.pop %v1521
    %v1554 = vrsqrt.pop %v1522
    %v1555 = vrsqrt.pop %v1523
    %v1556 = vrsqrt.pop %v1524
    %v1557 = vrsqrt.pop %v1525
    %v1558 = vrsqrt.pop %v1526
    %v1559 = vrsqrt.pop %v1527
    %v1560 = vrsqrt.pop %v1528
    %v1561 = vrsqrt.pop %v1529
    %v1562 = vrsqrt.pop %v1530
    %v1563 = vrsqrt.pop %v1531
    %v1564 = vrsqrt.pop %v1532
    %v1565 = vrsqrt.pop %v1533
    %v1566 = vrsqrt.pop %v1534
    %v1567 = vrsqrt.pop %v1535
    %v1568 = vrsqrt.pop %v1536
    %v1569 = vrsqrt.pop %v1537
    %v1570 = vrsqrt.pop %v1538
    %v1571 = vrsqrt.pop %v1539
    %v1572 = vrsqrt.pop %v1540
    %v1573 = vrsqrt.pop %v1541
    %v1574 = vrsqrt.pop %v1542
    %v1575 = vrsqrt.pop %v1543
    %v1576 = vrsqrt.pop %v1544
    %v1577 = vrsqrt.pop %v1545
    %v1578 = vrsqrt.pop %v1546
    %v1579 = vrsqrt.pop %v1547
    %v1580 = vrsqrt.pop %v1548
    %v1581 = vrsqrt.pop %v1549
    %v1582 = vrsqrt.pop %v1550
    %v1583 = vrsqrt.pop %v1551
    %v1584 = vrsqrt.pop %v1552
    %v1585 = vmul.f32 %v1361, %v1553
    %v1586 = vmul.f32 %v1362, %v1554
    %v1587 = vmul.f32 %v1363, %v1555
    %v1588 = vmul.f32 %v1364, %v1556
    %v1589 = vmul.f32 %v1365, %v1557
    %v1590 = vmul.f32 %v1366, %v1558
    %v1591 = vmul.f32 %v1367, %v1559
    %v1592 = vmul.f32 %v1368, %v1560
    %v1593 = vmul.f32 %v1369, %v1561
    %v1594 = vmul.f32 %v1370, %v1562
    %v1595 = vmul.f32 %v1371, %v1563
    %v1596 = vmul.f32 %v1372, %v1564
    %v1597 = vmul.f32 %v1373, %v1565
    %v1598 = vmul.f32 %v1374, %v1566
    %v1599 = vmul.f32 %v1375, %v1567
    %v1600 = vmul.f32 %v1376, %v1568
    %v1601 = vmul.f32 %v1377, %v1569
    %v1602 = vmul.f32 %v1378, %v1570
    %v1603 = vmul.f32 %v1379, %v1571
    %v1604 = vmul.f32 %v1380, %v1572
    %v1605 = vmul.f32 %v1381, %v1573
    %v1606 = vmul.f32 %v1382, %v1574
    %v1607 = vmul.f32 %v1383, %v1575
    %v1608 = vmul.f32 %v1384, %v1576
    %v1609 = vmul.f32 %v1385, %v1577
    %v1610 = vmul.f32 %v1386, %v1578
    %v1611 = vmul.f32 %v1387, %v1579
    %v1612 = vmul.f32 %v1388, %v1580
    %v1613 = vmul.f32 %v1389, %v1581
    %v1614 = vmul.f32 %v1390, %v1582
    %v1615 = vmul.f32 %v1391, %v1583
    %v1616 = vmul.f32 %v1392, %v1584
    %v1617 = vlaneseq
    %v1618 = vshrl.u32 %v1617, 7
    %v1619 = vsub.s32 0, %v1618
    %v1620 = vrot.slane %v1263, %v1619
    %v1621 = vmul.f32 %v1585, %v1620
    %v1622 = vmul.f32 %v1586, %v1620
    %v1623 = vmul.f32 %v1587, %v1620
    %v1624 = vmul.f32 %v1588, %v1620
    %v1625 = vmul.f32 %v1589, %v1620
    %v1626 = vmul.f32 %v1590, %v1620
    %v1627 = vmul.f32 %v1591, %v1620
    %v1628 = vmul.f32 %v1592, %v1620
    %v1629 = vmul.f32 %v1593, %v1620
    %v1630 = vmul.f32 %v1594, %v1620
    %v1631 = vmul.f32 %v1595, %v1620
    %v1632 = vmul.f32 %v1596, %v1620
    %v1633 = vmul.f32 %v1597, %v1620
    %v1634 = vmul.f32 %v1598, %v1620
    %v1635 = vmul.f32 %v1599, %v1620
    %v1636 = vmul.f32 %v1600, %v1620
    %v1637 = vmul.f32 %v1601, %v1620
    %v1638 = vmul.f32 %v1602, %v1620
    %v1639 = vmul.f32 %v1603, %v1620
    %v1640 = vmul.f32 %v1604, %v1620
    %v1641 = vmul.f32 %v1605, %v1620
    %v1642 = vmul.f32 %v1606, %v1620
    %v1643 = vmul.f32 %v1607, %v1620
    %v1644 = vmul.f32 %v1608, %v1620
    %v1645 = vmul.f32 %v1609, %v1620
    %v1646 = vmul.f32 %v1610, %v1620
    %v1647 = vmul.f32 %v1611, %v1620
    %v1648 = vmul.f32 %v1612, %v1620
    %v1649 = vmul.f32 %v1613, %v1620
    %v1650 = vmul.f32 %v1614, %v1620
    %v1651 = vmul.f32 %v1615, %v1620
    %v1652 = vmul.f32 %v1616, %v1620
    %v1653 = vlaneseq
    %v1654 = vshrl.u32 %v1653, 7
    %v1655 = vsub.s32 0, %v1654
    %v1656 = vrot.slane %v1264, %v1655
    %v1657 = vadd.f32 %v1621, %v1656
    %v1658 = vadd.f32 %v1622, %v1656
    %v1659 = vadd.f32 %v1623, %v1656
    %v1660 = vadd.f32 %v1624, %v1656
    %v1661 = vadd.f32 %v1625, %v1656
    %v1662 = vadd.f32 %v1626, %v1656
    %v1663 = vadd.f32 %v1627, %v1656
    %v1664 = vadd.f32 %v1628, %v1656
    %v1665 = vadd.f32 %v1629, %v1656
    %v1666 = vadd.f32 %v1630, %v1656
    %v1667 = vadd.f32 %v1631, %v1656
    %v1668 = vadd.f32 %v1632, %v1656
    %v1669 = vadd.f32 %v1633, %v1656
    %v1670 = vadd.f32 %v1634, %v1656
    %v1671 = vadd.f32 %v1635, %v1656
    %v1672 = vadd.f32 %v1636, %v1656
    %v1673 = vadd.f32 %v1637, %v1656
    %v1674 = vadd.f32 %v1638, %v1656
    %v1675 = vadd.f32 %v1639, %v1656
    %v1676 = vadd.f32 %v1640, %v1656
    %v1677 = vadd.f32 %v1641, %v1656
    %v1678 = vadd.f32 %v1642, %v1656
    %v1679 = vadd.f32 %v1643, %v1656
    %v1680 = vadd.f32 %v1644, %v1656
    %v1681 = vadd.f32 %v1645, %v1656
    %v1682 = vadd.f32 %v1646, %v1656
    %v1683 = vadd.f32 %v1647, %v1656
    %v1684 = vadd.f32 %v1648, %v1656
    %v1685 = vadd.f32 %v1649, %v1656
    %v1686 = vadd.f32 %v1650, %v1656
    %v1687 = vadd.f32 %v1651, %v1656
    %v1688 = vadd.f32 %v1652, %v1656
    %v1689 = vmul.f32 %v1657, 0.5
    %v1690 = vmul.f32 %v1658, 0.5
    %v1691 = vmul.f32 %v1659, 0.5
    %v1692 = vmul.f32 %v1660, 0.5
    %v1693 = vmul.f32 %v1661, 0.5
    %v1694 = vmul.f32 %v1662, 0.5
    %v1695 = vmul.f32 %v1663, 0.5
    %v1696 = vmul.f32 %v1664, 0.5
    %v1697 = vmul.f32 %v1665, 0.5
    %v1698 = vmul.f32 %v1666, 0.5
    %v1699 = vmul.f32 %v1667, 0.5
    %v1700 = vmul.f32 %v1668, 0.5
    %v1701 = vmul.f32 %v1669, 0.5
    %v1702 = vmul.f32 %v1670, 0.5
    %v1703 = vmul.f32 %v1671, 0.5
    %v1704 = vmul.f32 %v1672, 0.5
    %v1705 = vmul.f32 %v1673, 0.5
    %v1706 = vmul.f32 %v1674, 0.5
    %v1707 = vmul.f32 %v1675, 0.5
    %v1708 = vmul.f32 %v1676, 0.5
    %v1709 = vmul.f32 %v1677, 0.5
    %v1710 = vmul.f32 %v1678, 0.5
    %v1711 = vmul.f32 %v1679, 0.5
    %v1712 = vmul.f32 %v1680, 0.5
    %v1713 = vmul.f32 %v1681, 0.5
    %v1714 = vmul.f32 %v1682, 0.5
    %v1715 = vmul.f32 %v1683, 0.5
    %v1716 = vmul.f32 %v1684, 0.5
    %v1717 = vmul.f32 %v1685, 0.5
    %v1718 = vmul.f32 %v1686, 0.5
    %v1719 = vmul.f32 %v1687, 0.5
    %v1720 = vmul.f32 %v1688, 0.5
    %v1721 = vmul.f32 %v1657, 0.70710677
    %v1722 = vmul.f32 %v1658, 0.70710677
    %v1723 = vmul.f32 %v1659, 0.70710677
    %v1724 = vmul.f32 %v1660, 0.70710677
    %v1725 = vmul.f32 %v1661, 0.70710677
    %v1726 = vmul.f32 %v1662, 0.70710677
    %v1727 = vmul.f32 %v1663, 0.70710677
    %v1728 = vmul.f32 %v1664, 0.70710677
    %v1729 = vmul.f32 %v1665, 0.70710677
    %v1730 = vmul.f32 %v1666, 0.70710677
    %v1731 = vmul.f32 %v1667, 0.70710677
    %v1732 = vmul.f32 %v1668, 0.70710677
    %v1733 = vmul.f32 %v1669, 0.70710677
    %v1734 = vmul.f32 %v1670, 0.70710677
    %v1735 = vmul.f32 %v1671, 0.70710677
    %v1736 = vmul.f32 %v1672, 0.70710677
    %v1737 = vmul.f32 %v1673, 0.70710677
    %v1738 = vmul.f32 %v1674, 0.70710677
    %v1739 = vmul.f32 %v1675, 0.70710677
    %v1740 = vmul.f32 %v1676, 0.70710677
    %v1741 = vmul.f32 %v1677, 0.70710677
    %v1742 = vmul.f32 %v1678, 0.70710677
    %v1743 = vmul.f32 %v1679, 0.70710677
    %v1744 = vmul.f32 %v1680, 0.70710677
    %v1745 = vmul.f32 %v1681, 0.70710677
    %v1746 = vmul.f32 %v1682, 0.70710677
    %v1747 = vmul.f32 %v1683, 0.70710677
    %v1748 = vmul.f32 %v1684, 0.70710677
    %v1749 = vmul.f32 %v1685, 0.70710677
    %v1750 = vmul.f32 %v1686, 0.70710677
    %v1751 = vmul.f32 %v1687, 0.70710677
    %v1752 = vmul.f32 %v1688, 0.70710677
    %v1753 = verf.f32.pop %v1721
    %v1754 = verf.f32.pop %v1722
    %v1755 = verf.f32.pop %v1723
    %v1756 = verf.f32.pop %v1724
    %v1757 = verf.f32.pop %v1725
    %v1758 = verf.f32.pop %v1726
    %v1759 = verf.f32.pop %v1727
    %v1760 = verf.f32.pop %v1728
    %v1761 = verf.f32.pop %v1729
    %v1762 = verf.f32.pop %v1730
    %v1763 = verf.f32.pop %v1731
    %v1764 = verf.f32.pop %v1732
    %v1765 = verf.f32.pop %v1733
    %v1766 = verf.f32.pop %v1734
    %v1767 = verf.f32.pop %v1735
    %v1768 = verf.f32.pop %v1736
    %v1769 = verf.f32.pop %v1737
    %v1770 = verf.f32.pop %v1738
    %v1771 = verf.f32.pop %v1739
    %v1772 = verf.f32.pop %v1740
    %v1773 = verf.f32.pop %v1741
    %v1774 = verf.f32.pop %v1742
    %v1775 = verf.f32.pop %v1743
    %v1776 = verf.f32.pop %v1744
    %v1777 = verf.f32.pop %v1745
    %v1778 = verf.f32.pop %v1746
    %v1779 = verf.f32.pop %v1747
    %v1780 = verf.f32.pop %v1748
    %v1781 = verf.f32.pop %v1749
    %v1782 = verf.f32.pop %v1750
    %v1783 = verf.f32.pop %v1751
    %v1784 = verf.f32.pop %v1752
    %v1785 = vadd.f32 %v1753, 1.0
    %v1786 = vadd.f32 %v1754, 1.0
    %v1787 = vadd.f32 %v1755, 1.0
    %v1788 = vadd.f32 %v1756, 1.0
    %v1789 = vadd.f32 %v1757, 1.0
    %v1790 = vadd.f32 %v1758, 1.0
    %v1791 = vadd.f32 %v1759, 1.0
    %v1792 = vadd.f32 %v1760, 1.0
    %v1793 = vadd.f32 %v1761, 1.0
    %v1794 = vadd.f32 %v1762, 1.0
    %v1795 = vadd.f32 %v1763, 1.0
    %v1796 = vadd.f32 %v1764, 1.0
    %v1797 = vadd.f32 %v1765, 1.0
    %v1798 = vadd.f32 %v1766, 1.0
    %v1799 = vadd.f32 %v1767, 1.0
    %v1800 = vadd.f32 %v1768, 1.0
    %v1801 = vadd.f32 %v1769, 1.0
    %v1802 = vadd.f32 %v1770, 1.0
    %v1803 = vadd.f32 %v1771, 1.0
    %v1804 = vadd.f32 %v1772, 1.0
    %v1805 = vadd.f32 %v1773, 1.0
    %v1806 = vadd.f32 %v1774, 1.0
    %v1807 = vadd.f32 %v1775, 1.0
    %v1808 = vadd.f32 %v1776, 1.0
    %v1809 = vadd.f32 %v1777, 1.0
    %v1810 = vadd.f32 %v1778, 1.0
    %v1811 = vadd.f32 %v1779, 1.0
    %v1812 = vadd.f32 %v1780, 1.0
    %v1813 = vadd.f32 %v1781, 1.0
    %v1814 = vadd.f32 %v1782, 1.0
    %v1815 = vadd.f32 %v1783, 1.0
    %v1816 = vadd.f32 %v1784, 1.0
    %v1817 = vmul.f32 %v1689, %v1785
    %v1818 = vmul.f32 %v1690, %v1786
    %v1819 = vmul.f32 %v1691, %v1787
    %v1820 = vmul.f32 %v1692, %v1788
    %v1821 = vmul.f32 %v1693, %v1789
    %v1822 = vmul.f32 %v1694, %v1790
    %v1823 = vmul.f32 %v1695, %v1791
    %v1824 = vmul.f32 %v1696, %v1792
    %v1825 = vmul.f32 %v1697, %v1793
    %v1826 = vmul.f32 %v1698, %v1794
    %v1827 = vmul.f32 %v1699, %v1795
    %v1828 = vmul.f32 %v1700, %v1796
    %v1829 = vmul.f32 %v1701, %v1797
    %v1830 = vmul.f32 %v1702, %v1798
    %v1831 = vmul.f32 %v1703, %v1799
    %v1832 = vmul.f32 %v1704, %v1800
    %v1833 = vmul.f32 %v1705, %v1801
    %v1834 = vmul.f32 %v1706, %v1802
    %v1835 = vmul.f32 %v1707, %v1803
    %v1836 = vmul.f32 %v1708, %v1804
    %v1837 = vmul.f32 %v1709, %v1805
    %v1838 = vmul.f32 %v1710, %v1806
    %v1839 = vmul.f32 %v1711, %v1807
    %v1840 = vmul.f32 %v1712, %v1808
    %v1841 = vmul.f32 %v1713, %v1809
    %v1842 = vmul.f32 %v1714, %v1810
    %v1843 = vmul.f32 %v1715, %v1811
    %v1844 = vmul.f32 %v1716, %v1812
    %v1845 = vmul.f32 %v1717, %v1813
    %v1846 = vmul.f32 %v1718, %v1814
    %v1847 = vmul.f32 %v1719, %v1815
    %v1848 = vmul.f32 %v1720, %v1816
    %v1849 = vunpack.c.l.bf16 %v72
    %v1850 = vunpack.c.l.bf16 %v73
    %v1851 = vunpack.c.l.bf16 %v74
    %v1852 = vunpack.c.l.bf16 %v75
    %v1853 = vunpack.c.l.bf16 %v76
    %v1854 = vunpack.c.l.bf16 %v77
    %v1855 = vunpack.c.l.bf16 %v78
    %v1856 = vunpack.c.l.bf16 %v79
    %v1857 = vunpack.c.l.bf16 %v80
    %v1858 = vunpack.c.l.bf16 %v81
    %v1859 = vunpack.c.l.bf16 %v82
    %v1860 = vunpack.c.l.bf16 %v83
    %v1861 = vunpack.c.l.bf16 %v84
    %v1862 = vunpack.c.l.bf16 %v85
    %v1863 = vunpack.c.l.bf16 %v86
    %v1864 = vunpack.c.l.bf16 %v87
    %v1865 = vunpack.c.l.bf16 %v88
    %v1866 = vunpack.c.l.bf16 %v89
    %v1867 = vunpack.c.l.bf16 %v90
    %v1868 = vunpack.c.l.bf16 %v91
    %v1869 = vunpack.c.l.bf16 %v92
    %v1870 = vunpack.c.l.bf16 %v93
    %v1871 = vunpack.c.l.bf16 %v94
    %v1872 = vunpack.c.l.bf16 %v95
    %v1873 = vunpack.c.l.bf16 %v96
    %v1874 = vunpack.c.l.bf16 %v97
    %v1875 = vunpack.c.l.bf16 %v98
    %v1876 = vunpack.c.l.bf16 %v99
    %v1877 = vunpack.c.l.bf16 %v100
    %v1878 = vunpack.c.l.bf16 %v101
    %v1879 = vunpack.c.l.bf16 %v102
    %v1880 = vunpack.c.l.bf16 %v103
    %v1881 = vadd.f32 %v1849, %v1817
    %v1882 = vadd.f32 %v1850, %v1818
    %v1883 = vadd.f32 %v1851, %v1819
    %v1884 = vadd.f32 %v1852, %v1820
    %v1885 = vadd.f32 %v1853, %v1821
    %v1886 = vadd.f32 %v1854, %v1822
    %v1887 = vadd.f32 %v1855, %v1823
    %v1888 = vadd.f32 %v1856, %v1824
    %v1889 = vadd.f32 %v1857, %v1825
    %v1890 = vadd.f32 %v1858, %v1826
    %v1891 = vadd.f32 %v1859, %v1827
    %v1892 = vadd.f32 %v1860, %v1828
    %v1893 = vadd.f32 %v1861, %v1829
    %v1894 = vadd.f32 %v1862, %v1830
    %v1895 = vadd.f32 %v1863, %v1831
    %v1896 = vadd.f32 %v1864, %v1832
    %v1897 = vadd.f32 %v1865, %v1833
    %v1898 = vadd.f32 %v1866, %v1834
    %v1899 = vadd.f32 %v1867, %v1835
    %v1900 = vadd.f32 %v1868, %v1836
    %v1901 = vadd.f32 %v1869, %v1837
    %v1902 = vadd.f32 %v1870, %v1838
    %v1903 = vadd.f32 %v1871, %v1839
    %v1904 = vadd.f32 %v1872, %v1840
    %v1905 = vadd.f32 %v1873, %v1841
    %v1906 = vadd.f32 %v1874, %v1842
    %v1907 = vadd.f32 %v1875, %v1843
    %v1908 = vadd.f32 %v1876, %v1844
    %v1909 = vadd.f32 %v1877, %v1845
    %v1910 = vadd.f32 %v1878, %v1846
    %v1911 = vadd.f32 %v1879, %v1847
    %v1912 = vadd.f32 %v1880, %v1848
    %v1913 = vmul.f32 %v1881, 0.7072136
    %v1914 = vmul.f32 %v1882, 0.7072136
    %v1915 = vmul.f32 %v1883, 0.7072136
    %v1916 = vmul.f32 %v1884, 0.7072136
    %v1917 = vmul.f32 %v1885, 0.7072136
    %v1918 = vmul.f32 %v1886, 0.7072136
    %v1919 = vmul.f32 %v1887, 0.7072136
    %v1920 = vmul.f32 %v1888, 0.7072136
    %v1921 = vmul.f32 %v1889, 0.7072136
    %v1922 = vmul.f32 %v1890, 0.7072136
    %v1923 = vmul.f32 %v1891, 0.7072136
    %v1924 = vmul.f32 %v1892, 0.7072136
    %v1925 = vmul.f32 %v1893, 0.7072136
    %v1926 = vmul.f32 %v1894, 0.7072136
    %v1927 = vmul.f32 %v1895, 0.7072136
    %v1928 = vmul.f32 %v1896, 0.7072136
    %v1929 = vmul.f32 %v1897, 0.7072136
    %v1930 = vmul.f32 %v1898, 0.7072136
    %v1931 = vmul.f32 %v1899, 0.7072136
    %v1932 = vmul.f32 %v1900, 0.7072136
    %v1933 = vmul.f32 %v1901, 0.7072136
    %v1934 = vmul.f32 %v1902, 0.7072136
    %v1935 = vmul.f32 %v1903, 0.7072136
    %v1936 = vmul.f32 %v1904, 0.7072136
    %v1937 = vmul.f32 %v1905, 0.7072136
    %v1938 = vmul.f32 %v1906, 0.7072136
    %v1939 = vmul.f32 %v1907, 0.7072136
    %v1940 = vmul.f32 %v1908, 0.7072136
    %v1941 = vmul.f32 %v1909, 0.7072136
    %v1942 = vmul.f32 %v1910, 0.7072136
    %v1943 = vmul.f32 %v1911, 0.7072136
    %v1944 = vmul.f32 %v1912, 0.7072136
    %1945 = vst [vmem:[#allocation10] sm:$0xff] %v1913
    %1946 = vst [vmem:[#allocation10 + $0x8] sm:$0xff] %v1914
    %1947 = vst [vmem:[#allocation10 + $0x10] sm:$0xff] %v1915
    %1948 = vst [vmem:[#allocation10 + $0x18] sm:$0xff] %v1916
    %1949 = vst [vmem:[#allocation10 + $0x20] sm:$0xff] %v1917
    %1950 = vst [vmem:[#allocation10 + $0x28] sm:$0xff] %v1918
    %1951 = vst [vmem:[#allocation10 + $0x30] sm:$0xff] %v1919
    %1952 = vst [vmem:[#allocation10 + $0x38] sm:$0xff] %v1920
    %1953 = vst [vmem:[#allocation10 + $0x40] sm:$0xff] %v1921
    %1954 = vst [vmem:[#allocation10 + $0x48] sm:$0xff] %v1922
    %1955 = vst [vmem:[#allocation10 + $0x50] sm:$0xff] %v1923
    %1956 = vst [vmem:[#allocation10 + $0x58] sm:$0xff] %v1924
    %1957 = vst [vmem:[#allocation10 + $0x60] sm:$0xff] %v1925
    %1958 = vst [vmem:[#allocation10 + $0x68] sm:$0xff] %v1926
    %1959 = vst [vmem:[#allocation10 + $0x70] sm:$0xff] %v1927
    %1960 = vst [vmem:[#allocation10 + $0x78] sm:$0xff] %v1928
    %1961 = vst [vmem:[#allocation10 + $0x80] sm:$0xff] %v1929
    %1962 = vst [vmem:[#allocation10 + $0x88] sm:$0xff] %v1930
    %1963 = vst [vmem:[#allocation10 + $0x90] sm:$0xff] %v1931
    %1964 = vst [vmem:[#allocation10 + $0x98] sm:$0xff] %v1932
    %1965 = vst [vmem:[#allocation10 + $0xa0] sm:$0xff] %v1933
    %1966 = vst [vmem:[#allocation10 + $0xa8] sm:$0xff] %v1934
    %1967 = vst [vmem:[#allocation10 + $0xb0] sm:$0xff] %v1935
    %1968 = vst [vmem:[#allocation10 + $0xb8] sm:$0xff] %v1936
    %1969 = vst [vmem:[#allocation10 + $0xc0] sm:$0xff] %v1937
    %1970 = vst [vmem:[#allocation10 + $0xc8] sm:$0xff] %v1938
    %1971 = vst [vmem:[#allocation10 + $0xd0] sm:$0xff] %v1939
    %1972 = vst [vmem:[#allocation10 + $0xd8] sm:$0xff] %v1940
    %1973 = vst [vmem:[#allocation10 + $0xe0] sm:$0xff] %v1941
    %1974 = vst [vmem:[#allocation10 + $0xe8] sm:$0xff] %v1942
    %1975 = vst [vmem:[#allocation10 + $0xf0] sm:$0xff] %v1943
    %1976 = vst [vmem:[#allocation10 + $0xf8] sm:$0xff] %v1944
    // Predicated region
    $region34: #{tpu_custom_call.1} parent=1 // pred_check
      _
    $region35: #{tpu_custom_call.1} parent=1 // pred_check_branch
      %1978 = sbr.rel (0) target = $region37
    $region36: #{tpu_custom_call.1} parent=1 // pred_region
      %s1980 = ssub.s32 4096, 4096
      %1981 = vsyncadd [#allocation4], %s1980
      %s1982 = sshll.u32 [#allocation10], 4
      %s1983 = int_to_ptr.vmem [resolvable:$true] %s1982
      %1988 = dma.vmem_to_hbm [thread:$0]  %s1983, 4096, %s4, [#allocation4], 128, 128, 8
    $region37: #{tpu_custom_call.1} parent=1 // pred_fallthru
      _
    // Predicated region
    $region38: #{tpu_custom_call.1} parent=1 // pred_check
      _
    $region39: #{tpu_custom_call.1} parent=1 // pred_check_branch
      %1990 = sbr.rel (0) target = $region41
    $region40: #{tpu_custom_call.1} parent=1 // pred_region
      %1991 = dma.done [#allocation4], 4096
    $region41: #{tpu_custom_call.1} parent=1 // pred_fallthru
      _
    %1992 = vsyncpa [#allocation3], 1
    %1993 = vsyncpa [#allocation6], 1
    %1994 = vsyncpa [#allocation9], 1
    %1995 = vsyncpa [#allocation4], 1

// kernel: tpu_custom_call.1
$region0: #{tpu_custom_call.1}
  #allocation0 [shape = 'u32[]', space=smem, size = 0x4, offset = 0x4, fixed_abs, tag = 'smem constant byte address 0x4 - core index']
  #allocation1 [shape = 'u32[144,128]{1,0:T(1,128)}', space=vmem, size = 0x12000, scoped, tag = 'internal scratch']
  %s0 = inlined_call_operand.hbm [shape: bf16[256,128], index: 0, kind: input, shape index: {}]
  %s1 = inlined_call_operand.hbm [shape: bf16[128,128], index: 1, kind: input, shape index: {}]
  %s2 = inlined_call_operand.hbm [shape: bf16[128,128], index: 2, kind: input, shape index: {}]
  %s3 = inlined_call_operand.hbm [shape: f32[8,128], index: 3, kind: input, shape index: {}]
  %s4 = inlined_call_operand.hbm [shape: f32[256,128], index: 4, kind: output, shape index: {}]
  %s5 = sld [smem:[#allocation0]]
  $region42: #{tpu_custom_call.1} parent=0
    _
  %s7 = ssub.s32 1, %s5
  %s8 = scalar_select 0, %s7, %s5
  $region1: #{tpu_custom_call.1} parent=0
    #allocation2 [shape = 'u8[65536]{0}', space=vmem, size = 0x10000, scoped, tag = 'input window, operand 0, single buffered']
    #allocation3 [shape = 's32[1]{0}', space=sflag, size = 0x4, scoped, tag = 'scoped memory for tpu_custom_call.1']
    #allocation4 [shape = 's32[1]{0}', space=sflag, size = 0x4, scoped, tag = 'scoped memory for tpu_custom_call.1']
    #allocation5 [shape = 'u8[32768]{0}', space=vmem, size = 0x8000, scoped, tag = 'input window, operand 1, single buffered']
    #allocation6 [shape = 's32[1]{0}', space=sflag, size = 0x4, scoped, tag = 'scoped memory for tpu_custom_call.1']
    #allocation7 [shape = 'u8[32768]{0}', space=vmem, size = 0x8000, scoped, tag = 'input window, operand 2, single buffered']
    #allocation8 [shape = 'u8[4096]{0}', space=vmem, size = 0x1000, scoped, tag = 'input window, operand 3, single buffered']
    #allocation9 [shape = 's32[1]{0}', space=sflag, size = 0x4, scoped, tag = 'scoped memory for tpu_custom_call.1']
    #allocation10 [shape = 'u8[131072]{0}', space=vmem, size = 0x20000, scoped, tag = 'output window, operand 0, single buffered']
    %9 = vsyncpa [#allocation3], 0
    %10 = vsyncpa [#allocation6], 0
    %11 = vsyncpa [#allocation9], 0
    %12 = vsyncpa [#allocation4], 0
    // Predicated region
    $region2: #{tpu_custom_call.1} parent=1 // pred_check
      _
    $region3: #{tpu_custom_call.1} parent=1 // pred_check_branch
      %14 = sbr.rel (0) target = $region5
    $region4: #{tpu_custom_call.1} parent=1 // pred_region
      %s16 = ssub.s32 2048, 2048
      %17 = vsyncadd [#allocation3], %s16
      %s18 = sshll.u32 [#allocation2], 4
      %s19 = int_to_ptr.vmem [resolvable:$true] %s18
      %24 = dma.hbm_to_vmem [thread:$0]  %s0, 2048, %s19, [#allocation3], 64, 64, 4
    $region5: #{tpu_custom_call.1} parent=1 // pred_fallthru
      _
    // Predicated region
    $region6: #{tpu_custom_call.1} parent=1 // pred_check
      _
    $region7: #{tpu_custom_call.1} parent=1 // pred_check_branch
      %26 = sbr.rel (0) target = $region9
    $region8: #{tpu_custom_call.1} parent=1 // pred_region
      %s28 = ssub.s32 1024, 1024
      %29 = vsyncadd [#allocation6], %s28
      %s30 = sshll.u32 [#allocation5], 4
      %s31 = int_to_ptr.vmem [resolvable:$true] %s30
      %36 = dma.hbm_to_vmem [thread:$0]  %s1, 1024, %s31, [#allocation6], 64, 64, 4
    $region9: #{tpu_custom_call.1} parent=1 // pred_fallthru
      _
    // Predicated region
    $region10: #{tpu_custom_call.1} parent=1 // pred_check
      _
    $region11: #{tpu_custom_call.1} parent=1 // pred_check_branch
      %38 = sbr.rel (0) target = $region13
    $region12: #{tpu_custom_call.1} parent=1 // pred_region
      %s40 = ssub.s32 1024, 1024
      %41 = vsyncadd [#allocation6], %s40
      %s42 = sshll.u32 [#allocation7], 4
      %s43 = int_to_ptr.vmem [resolvable:$true] %s42
      %48 = dma.hbm_to_vmem [thread:$0]  %s2, 1024, %s43, [#allocation6], 64, 64, 4
    $region13: #{tpu_custom_call.1} parent=1 // pred_fallthru
      _
    // Predicated region
    $region14: #{tpu_custom_call.1} parent=1 // pred_check
      _
    $region15: #{tpu_custom_call.1} parent=1 // pred_check_branch
      %50 = sbr.rel (0) target = $region17
    $region16: #{tpu_custom_call.1} parent=1 // pred_region
      %s52 = ssub.s32 128, 128
      %53 = vsyncadd [#allocation9], %s52
      %s55 = sshll.u32 [#allocation8], 4
      %s56 = int_to_ptr.vmem [resolvable:$true] %s55
      %58 = dma.hbm_to_vmem [thread:$0]  %s3, 128, %s56, [#allocation9]
    $region17: #{tpu_custom_call.1} parent=1 // pred_fallthru
      _
    // Predicated region
    $region18: #{tpu_custom_call.1} parent=1 // pred_check
      _
    $region19: #{tpu_custom_call.1} parent=1 // pred_check_branch
      %60 = sbr.rel (0) target = $region21
    $region20: #{tpu_custom_call.1} parent=1 // pred_region
      %61 = dma.done [#allocation3], 2048
    $region21: #{tpu_custom_call.1} parent=1 // pred_fallthru
      _
    // Predicated region
    $region22: #{tpu_custom_call.1} parent=1 // pred_check
      _
    $region23: #{tpu_custom_call.1} parent=1 // pred_check_branch
      %63 = sbr.rel (0) target = $region25
    $region24: #{tpu_custom_call.1} parent=1 // pred_region
      %64 = dma.done [#allocation6], 1024
    $region25: #{tpu_custom_call.1} parent=1 // pred_fallthru
      _
    // Predicated region
    $region26: #{tpu_custom_call.1} parent=1 // pred_check
      _
    $region27: #{tpu_custom_call.1} parent=1 // pred_check_branch
      %66 = sbr.rel (0) target = $region29
    $region28: #{tpu_custom_call.1} parent=1 // pred_region
      %67 = dma.done [#allocation6], 1024
    $region29: #{tpu_custom_call.1} parent=1 // pred_fallthru
      _
    // Predicated region
    $region30: #{tpu_custom_call.1} parent=1 // pred_check
      _
    $region31: #{tpu_custom_call.1} parent=1 // pred_check_branch
      %69 = sbr.rel (0) target = $region33
    $region32: #{tpu_custom_call.1} parent=1 // pred_region
      %70 = dma.done [#allocation9], 128
    $region33: #{tpu_custom_call.1} parent=1 // pred_fallthru
      _
    %v72 = vld [vmem:[#allocation2] sm:$0xf]
    %v73 = vld [vmem:[#allocation2 + $0x4] sm:$0xf]
    %v74 = vld [vmem:[#allocation2 + $0x8] sm:$0xf]
    %v75 = vld [vmem:[#allocation2 + $0xc] sm:$0xf]
    %v76 = vld [vmem:[#allocation2 + $0x10] sm:$0xf]
    %v77 = vld [vmem:[#allocation2 + $0x14] sm:$0xf]
    %v78 = vld [vmem:[#allocation2 + $0x18] sm:$0xf]
    %v79 = vld [vmem:[#allocation2 + $0x1c] sm:$0xf]
    %v80 = vld [vmem:[#allocation2 + $0x20] sm:$0xf]
    %v81 = vld [vmem:[#allocation2 + $0x24] sm:$0xf]
    %v82 = vld [vmem:[#allocation2 + $0x28] sm:$0xf]
    %v83 = vld [vmem:[#allocation2 + $0x2c] sm:$0xf]
    %v84 = vld [vmem:[#allocation2 + $0x30] sm:$0xf]
    %v85 = vld [vmem:[#allocation2 + $0x34] sm:$0xf]
    %v86 = vld [vmem:[#allocation2 + $0x38] sm:$0xf]
    %v87 = vld [vmem:[#allocation2 + $0x3c] sm:$0xf]
    %v88 = vld [vmem:[#allocation2 + $0x40] sm:$0xf]
    %v89 = vld [vmem:[#allocation2 + $0x44] sm:$0xf]
    %v90 = vld [vmem:[#allocation2 + $0x48] sm:$0xf]
    %v91 = vld [vmem:[#allocation2 + $0x4c] sm:$0xf]
    %v92 = vld [vmem:[#allocation2 + $0x50] sm:$0xf]
    %v93 = vld [vmem:[#allocation2 + $0x54] sm:$0xf]
    %v94 = vld [vmem:[#allocation2 + $0x58] sm:$0xf]
    %v95 = vld [vmem:[#allocation2 + $0x5c] sm:$0xf]
    %v96 = vld [vmem:[#allocation2 + $0x60] sm:$0xf]
    %v97 = vld [vmem:[#allocation2 + $0x64] sm:$0xf]
    %v98 = vld [vmem:[#allocation2 + $0x68] sm:$0xf]
    %v99 = vld [vmem:[#allocation2 + $0x6c] sm:$0xf]
    %v100 = vld [vmem:[#allocation2 + $0x70] sm:$0xf]
    %v101 = vld [vmem:[#allocation2 + $0x74] sm:$0xf]
    %v102 = vld [vmem:[#allocation2 + $0x78] sm:$0xf]
    %v103 = vld [vmem:[#allocation2 + $0x7c] sm:$0xf]
    %v104 = vld [vmem:[#allocation5] sm:$0xf]
    %v105 = vld [vmem:[#allocation5 + $0x4] sm:$0xf]
    %v106 = vld [vmem:[#allocation5 + $0x8] sm:$0xf]
    %v107 = vld [vmem:[#allocation5 + $0xc] sm:$0xf]
    %v108 = vld [vmem:[#allocation5 + $0x10] sm:$0xf]
    %v109 = vld [vmem:[#allocation5 + $0x14] sm:$0xf]
    %v110 = vld [vmem:[#allocation5 + $0x18] sm:$0xf]
    %v111 = vld [vmem:[#allocation5 + $0x1c] sm:$0xf]
    %v112 = vld [vmem:[#allocation5 + $0x20] sm:$0xf]
    %v113 = vld [vmem:[#allocation5 + $0x24] sm:$0xf]
    %v114 = vld [vmem:[#allocation5 + $0x28] sm:$0xf]
    %v115 = vld [vmem:[#allocation5 + $0x2c] sm:$0xf]
    %v116 = vld [vmem:[#allocation5 + $0x30] sm:$0xf]
    %v117 = vld [vmem:[#allocation5 + $0x34] sm:$0xf]
    %v118 = vld [vmem:[#allocation5 + $0x38] sm:$0xf]
    %v119 = vld [vmem:[#allocation5 + $0x3c] sm:$0xf]
    %v120 = vld [vmem:[#allocation8] sm:$0x1]
    %v121 = vlaneseq
    %v122 = vshrl.u32 %v121, 7
    %v123 = vsub.s32 0, %v122
    %v124 = vrot.slane %v120, %v123
    %v157 = vunpack.c.l.b16 %v72
    %v158 = vunpack.c.l.b16 %v73
    %v159 = vunpack.c.l.b16 %v74
    %v160 = vunpack.c.l.b16 %v75
    %v161 = vunpack.c.l.b16 %v76
    %v162 = vunpack.c.l.b16 %v77
    %v163 = vunpack.c.l.b16 %v78
    %v164 = vunpack.c.l.b16 %v79
    %v165 = vunpack.c.l.b16 %v80
    %v166 = vunpack.c.l.b16 %v81
    %v167 = vunpack.c.l.b16 %v82
    %v168 = vunpack.c.l.b16 %v83
    %v169 = vunpack.c.l.b16 %v84
    %v170 = vunpack.c.l.b16 %v85
    %v171 = vunpack.c.l.b16 %v86
    %v172 = vunpack.c.l.b16 %v87
    %v173 = vunpack.c.l.b16 %v88
    %v174 = vunpack.c.l.b16 %v89
    %v175 = vunpack.c.l.b16 %v90
    %v176 = vunpack.c.l.b16 %v91
    %v177 = vunpack.c.l.b16 %v92
    %v178 = vunpack.c.l.b16 %v93
    %v179 = vunpack.c.l.b16 %v94
    %v180 = vunpack.c.l.b16 %v95
    %v181 = vunpack.c.l.b16 %v96
    %v182 = vunpack.c.l.b16 %v97
    %v183 = vunpack.c.l.b16 %v98
    %v184 = vunpack.c.l.b16 %v99
    %v185 = vunpack.c.l.b16 %v100
    %v186 = vunpack.c.l.b16 %v101
    %v187 = vunpack.c.l.b16 %v102
    %v188 = vunpack.c.l.b16 %v103
    %v189 = vpack.c.b16 %v158, %v157
    %v190 = vpack.c.b16 %v160, %v159
    %v191 = vpack.c.b16 %v162, %v161
    %v192 = vpack.c.b16 %v164, %v163
    %v193 = vpack.c.b16 %v166, %v165
    %v194 = vpack.c.b16 %v168, %v167
    %v195 = vpack.c.b16 %v170, %v169
    %v196 = vpack.c.b16 %v172, %v171
    %v197 = vpack.c.b16 %v174, %v173
    %v198 = vpack.c.b16 %v176, %v175
    %v199 = vpack.c.b16 %v178, %v177
    %v200 = vpack.c.b16 %v180, %v179
    %v201 = vpack.c.b16 %v182, %v181
    %v202 = vpack.c.b16 %v184, %v183
    %v203 = vpack.c.b16 %v186, %v185
    %v204 = vpack.c.b16 %v188, %v187
    %v237 = vunpack.c.l.b16 %v104
    %v238 = vunpack.c.l.b16 %v105
    %v239 = vunpack.c.l.b16 %v106
    %v240 = vunpack.c.l.b16 %v107
    %v241 = vunpack.c.l.b16 %v108
    %v242 = vunpack.c.l.b16 %v109
    %v243 = vunpack.c.l.b16 %v110
    %v244 = vunpack.c.l.b16 %v111
    %v245 = vunpack.c.l.b16 %v112
    %v246 = vunpack.c.l.b16 %v113
    %v247 = vunpack.c.l.b16 %v114
    %v248 = vunpack.c.l.b16 %v115
    %v249 = vunpack.c.l.b16 %v116
    %v250 = vunpack.c.l.b16 %v117
    %v251 = vunpack.c.l.b16 %v118
    %v252 = vunpack.c.l.b16 %v119
    %v253 = vpack.c.b16 %v238, %v237
    %v254 = vpack.c.b16 %v240, %v239
    %v255 = vpack.c.b16 %v242, %v241
    %v256 = vpack.c.b16 %v244, %v243
    %v257 = vpack.c.b16 %v246, %v245
    %v258 = vpack.c.b16 %v248, %v247
    %v259 = vpack.c.b16 %v250, %v249
    %v260 = vpack.c.b16 %v252, %v251
    %269 = vmatprep.subr.bf16.mxu0 0
    %270 = vmatpush1.bf16.msra.mxu0 %v260
    %271 = vmatprep.subr.bf16.mxu0 0
    %272 = vmatpush1.bf16.msra.mxu0 %v259
    %273 = vmatprep.subr.bf16.mxu0 0
    %274 = vmatpush1.bf16.msra.mxu0 %v258
    %275 = vmatprep.subr.bf16.mxu0 0
    %276 = vmatpush1.bf16.msra.mxu0 %v257
    %277 = vmatprep.subr.bf16.mxu0 0
    %278 = vmatpush1.bf16.msra.mxu0 %v256
    %279 = vmatprep.subr.bf16.mxu0 0
    %280 = vmatpush1.bf16.msra.mxu0 %v255
    %281 = vmatprep.subr.bf16.mxu0 0
    %282 = vmatpush1.bf16.msra.mxu0 %v254
    %283 = vmatprep.subr.bf16.mxu0 0
    %284 = vmatpush1.bf16.msra.mxu0 %v253
    %285 = vmatprep.subr.bf16.mxu0 0
    %286 = vmatpush2.bf16.msra.mxu0 0
    %287 = vmatprep.subr.bf16.mxu0 0
    %288 = vmatpush2.bf16.msra.mxu0 0
    %289 = vmatprep.subr.bf16.mxu0 0
    %290 = vmatpush2.bf16.msra.mxu0 0
    %291 = vmatprep.subr.bf16.mxu0 0
    %292 = vmatpush2.bf16.msra.mxu0 0
    %293 = vmatprep.subr.bf16.mxu0 0
    %294 = vmatpush2.bf16.msra.mxu0 0
    %295 = vmatprep.subr.bf16.mxu0 0
    %296 = vmatpush2.bf16.msra.mxu0 0
    %297 = vmatprep.subr.bf16.mxu0 0
    %298 = vmatpush2.bf16.msra.mxu0 0
    %299 = vmatprep.subr.bf16.mxu0 0
    %300 = vmatpush2.bf16.msra.mxu0 0
    %301 = vmatprep.mubr.bf16.mxu0 0
    %302 = vmatmul.mubr.bf16.gmra.mxu0 %v189
    %v303 = vpop.f32.mrf.mxu0
    %v304 = vadd.f32 %v124, %v303
    %v305 = vpop.f32.mrf.mxu0
    %v306 = vpop.f32.mrf.mxu0
    %v307 = vadd.f32 %v124, %v306
    %v308 = vpop.f32.mrf.mxu0
    %309 = vmatprep.mubr.bf16.mxu0 0
    %310 = vmatmul.mubr.bf16.gmra.mxu0 %v190
    %v311 = vpop.f32.mrf.mxu0
    %v312 = vadd.f32 %v124, %v311
    %v313 = vpop.f32.mrf.mxu0
    %v314 = vpop.f32.mrf.mxu0
    %v315 = vadd.f32 %v124, %v314
    %v316 = vpop.f32.mrf.mxu0
    %317 = vmatprep.mubr.bf16.mxu0 0
    %318 = vmatmul.mubr.bf16.gmra.mxu0 %v191
    %v319 = vpop.f32.mrf.mxu0
    %v320 = vadd.f32 %v124, %v319
    %v321 = vpop.f32.mrf.mxu0
    %v322 = vpop.f32.mrf.mxu0
    %v323 = vadd.f32 %v124, %v322
    %v324 = vpop.f32.mrf.mxu0
    %325 = vmatprep.mubr.bf16.mxu0 0
    %326 = vmatmul.mubr.bf16.gmra.mxu0 %v192
    %v327 = vpop.f32.mrf.mxu0
    %v328 = vadd.f32 %v124, %v327
    %v329 = vpop.f32.mrf.mxu0
    %v330 = vpop.f32.mrf.mxu0
    %v331 = vadd.f32 %v124, %v330
    %v332 = vpop.f32.mrf.mxu0
    %333 = vmatprep.mubr.bf16.mxu0 0
    %334 = vmatmul.mubr.bf16.gmra.mxu0 %v193
    %v335 = vpop.f32.mrf.mxu0
    %v336 = vadd.f32 %v124, %v335
    %v337 = vpop.f32.mrf.mxu0
    %v338 = vpop.f32.mrf.mxu0
    %v339 = vadd.f32 %v124, %v338
    %v340 = vpop.f32.mrf.mxu0
    %341 = vmatprep.mubr.bf16.mxu0 0
    %342 = vmatmul.mubr.bf16.gmra.mxu0 %v194
    %v343 = vpop.f32.mrf.mxu0
    %v344 = vadd.f32 %v124, %v343
    %v345 = vpop.f32.mrf.mxu0
    %v346 = vpop.f32.mrf.mxu0
    %v347 = vadd.f32 %v124, %v346
    %v348 = vpop.f32.mrf.mxu0
    %349 = vmatprep.mubr.bf16.mxu0 0
    %350 = vmatmul.mubr.bf16.gmra.mxu0 %v195
    %v351 = vpop.f32.mrf.mxu0
    %v352 = vadd.f32 %v124, %v351
    %v353 = vpop.f32.mrf.mxu0
    %v354 = vpop.f32.mrf.mxu0
    %v355 = vadd.f32 %v124, %v354
    %v356 = vpop.f32.mrf.mxu0
    %357 = vmatprep.mubr.bf16.mxu0 0
    %358 = vmatmul.mubr.bf16.gmra.mxu0 %v196
    %v359 = vpop.f32.mrf.mxu0
    %v360 = vadd.f32 %v124, %v359
    %v361 = vpop.f32.mrf.mxu0
    %v362 = vpop.f32.mrf.mxu0
    %v363 = vadd.f32 %v124, %v362
    %v364 = vpop.f32.mrf.mxu0
    %365 = vmatprep.mubr.bf16.mxu0 0
    %366 = vmatmul.mubr.bf16.gmra.mxu0 %v197
    %v367 = vpop.f32.mrf.mxu0
    %v368 = vadd.f32 %v124, %v367
    %v369 = vpop.f32.mrf.mxu0
    %v370 = vpop.f32.mrf.mxu0
    %v371 = vadd.f32 %v124, %v370
    %v372 = vpop.f32.mrf.mxu0
    %373 = vmatprep.mubr.bf16.mxu0 0
    %374 = vmatmul.mubr.bf16.gmra.mxu0 %v198
    %v375 = vpop.f32.mrf.mxu0
    %v376 = vadd.f32 %v124, %v375
    %v377 = vpop.f32.mrf.mxu0
    %v378 = vpop.f32.mrf.mxu0
    %v379 = vadd.f32 %v124, %v378
    %v380 = vpop.f32.mrf.mxu0
    %381 = vmatprep.mubr.bf16.mxu0 0
    %382 = vmatmul.mubr.bf16.gmra.mxu0 %v199
    %v383 = vpop.f32.mrf.mxu0
    %v384 = vadd.f32 %v124, %v383
    %v385 = vpop.f32.mrf.mxu0
    %v386 = vpop.f32.mrf.mxu0
    %v387 = vadd.f32 %v124, %v386
    %v388 = vpop.f32.mrf.mxu0
    %389 = vmatprep.mubr.bf16.mxu0 0
    %390 = vmatmul.mubr.bf16.gmra.mxu0 %v200
    %v391 = vpop.f32.mrf.mxu0
    %v392 = vadd.f32 %v124, %v391
    %v393 = vpop.f32.mrf.mxu0
    %v394 = vpop.f32.mrf.mxu0
    %v395 = vadd.f32 %v124, %v394
    %v396 = vpop.f32.mrf.mxu0
    %397 = vmatprep.mubr.bf16.mxu0 0
    %398 = vmatmul.mubr.bf16.gmra.mxu0 %v201
    %v399 = vpop.f32.mrf.mxu0
    %v400 = vadd.f32 %v124, %v399
    %v401 = vpop.f32.mrf.mxu0
    %v402 = vpop.f32.mrf.mxu0
    %v403 = vadd.f32 %v124, %v402
    %v404 = vpop.f32.mrf.mxu0
    %405 = vmatprep.mubr.bf16.mxu0 0
    %406 = vmatmul.mubr.bf16.gmra.mxu0 %v202
    %v407 = vpop.f32.mrf.mxu0
    %v408 = vadd.f32 %v124, %v407
    %v409 = vpop.f32.mrf.mxu0
    %v410 = vpop.f32.mrf.mxu0
    %v411 = vadd.f32 %v124, %v410
    %v412 = vpop.f32.mrf.mxu0
    %413 = vmatprep.mubr.bf16.mxu0 0
    %414 = vmatmul.mubr.bf16.gmra.mxu0 %v203
    %v415 = vpop.f32.mrf.mxu0
    %v416 = vadd.f32 %v124, %v415
    %v417 = vpop.f32.mrf.mxu0
    %v418 = vpop.f32.mrf.mxu0
    %v419 = vadd.f32 %v124, %v418
    %v420 = vpop.f32.mrf.mxu0
    %421 = vmatprep.mubr.bf16.mxu0 0
    %422 = vmatmul.mubr.bf16.gmra.mxu0 %v204
    %v423 = vpop.f32.mrf.mxu0
    %v424 = vadd.f32 %v124, %v423
    %v425 = vpop.f32.mrf.mxu0
    %v426 = vpop.f32.mrf.mxu0
    %v427 = vadd.f32 %v124, %v426
    %v428 = vpop.f32.mrf.mxu0
    %429 = vdwg.mxu0
    %v430 = vld [vmem:[#allocation8 + $0x1] sm:$0x1]
    %v431 = vld [vmem:[#allocation8 + $0x2] sm:$0x1]
    %432 = vadd.xlane.f32.xlu0 %v304
    %v433 = vpop.xlane.xlu0 %432
    %434 = vadd.xlane.f32.xlu0 %v307
    %v435 = vpop.xlane.xlu0 %434
    %436 = vadd.xlane.f32.xlu0 %v312
    %v437 = vpop.xlane.xlu0 %436
    %438 = vadd.xlane.f32.xlu0 %v315
    %v439 = vpop.xlane.xlu0 %438
    %440 = vadd.xlane.f32.xlu0 %v320
    %v441 = vpop.xlane.xlu0 %440
    %442 = vadd.xlane.f32.xlu0 %v323
    %v443 = vpop.xlane.xlu0 %442
    %444 = vadd.xlane.f32.xlu0 %v328
    %v445 = vpop.xlane.xlu0 %444
    %446 = vadd.xlane.f32.xlu0 %v331
    %v447 = vpop.xlane.xlu0 %446
    %448 = vadd.xlane.f32.xlu0 %v336
    %v449 = vpop.xlane.xlu0 %448
    %450 = vadd.xlane.f32.xlu0 %v339
    %v451 = vpop.xlane.xlu0 %450
    %452 = vadd.xlane.f32.xlu0 %v344
    %v453 = vpop.xlane.xlu0 %452
    %454 = vadd.xlane.f32.xlu0 %v347
    %v455 = vpop.xlane.xlu0 %454
    %456 = vadd.xlane.f32.xlu0 %v352
    %v457 = vpop.xlane.xlu0 %456
    %458 = vadd.xlane.f32.xlu0 %v355
    %v459 = vpop.xlane.xlu0 %458
    %460 = vadd.xlane.f32.xlu0 %v360
    %v461 = vpop.xlane.xlu0 %460
    %462 = vadd.xlane.f32.xlu0 %v363
    %v463 = vpop.xlane.xlu0 %462
    %464 = vadd.xlane.f32.xlu0 %v368
    %v465 = vpop.xlane.xlu0 %464
    %466 = vadd.xlane.f32.xlu0 %v371
    %v467 = vpop.xlane.xlu0 %466
    %468 = vadd.xlane.f32.xlu0 %v376
    %v469 = vpop.xlane.xlu0 %468
    %470 = vadd.xlane.f32.xlu0 %v379
    %v471 = vpop.xlane.xlu0 %470
    %472 = vadd.xlane.f32.xlu0 %v384
    %v473 = vpop.xlane.xlu0 %472
    %474 = vadd.xlane.f32.xlu0 %v387
    %v475 = vpop.xlane.xlu0 %474
    %476 = vadd.xlane.f32.xlu0 %v392
    %v477 = vpop.xlane.xlu0 %476
    %478 = vadd.xlane.f32.xlu0 %v395
    %v479 = vpop.xlane.xlu0 %478
    %480 = vadd.xlane.f32.xlu0 %v400
    %v481 = vpop.xlane.xlu0 %480
    %482 = vadd.xlane.f32.xlu0 %v403
    %v483 = vpop.xlane.xlu0 %482
    %484 = vadd.xlane.f32.xlu0 %v408
    %v485 = vpop.xlane.xlu0 %484
    %486 = vadd.xlane.f32.xlu0 %v411
    %v487 = vpop.xlane.xlu0 %486
    %488 = vadd.xlane.f32.xlu0 %v416
    %v489 = vpop.xlane.xlu0 %488
    %490 = vadd.xlane.f32.xlu0 %v419
    %v491 = vpop.xlane.xlu0 %490
    %492 = vadd.xlane.f32.xlu0 %v424
    %v493 = vpop.xlane.xlu0 %492
    %494 = vadd.xlane.f32.xlu0 %v427
    %v495 = vpop.xlane.xlu0 %494
    %v496 = vrcp.pop 128.0
    %v497 = vmul.f32 %v433, %v496
    %v498 = vmul.f32 %v435, %v496
    %v499 = vmul.f32 %v437, %v496
    %v500 = vmul.f32 %v439, %v496
    %v501 = vmul.f32 %v441, %v496
    %v502 = vmul.f32 %v443, %v496
    %v503 = vmul.f32 %v445, %v496
    %v504 = vmul.f32 %v447, %v496
    %v505 = vmul.f32 %v449, %v496
    %v506 = vmul.f32 %v451, %v496
    %v507 = vmul.f32 %v453, %v496
    %v508 = vmul.f32 %v455, %v496
    %v509 = vmul.f32 %v457, %v496
    %v510 = vmul.f32 %v459, %v496
    %v511 = vmul.f32 %v461, %v496
    %v512 = vmul.f32 %v463, %v496
    %v513 = vmul.f32 %v465, %v496
    %v514 = vmul.f32 %v467, %v496
    %v515 = vmul.f32 %v469, %v496
    %v516 = vmul.f32 %v471, %v496
    %v517 = vmul.f32 %v473, %v496
    %v518 = vmul.f32 %v475, %v496
    %v519 = vmul.f32 %v477, %v496
    %v520 = vmul.f32 %v479, %v496
    %v521 = vmul.f32 %v481, %v496
    %v522 = vmul.f32 %v483, %v496
    %v523 = vmul.f32 %v485, %v496
    %v524 = vmul.f32 %v487, %v496
    %v525 = vmul.f32 %v489, %v496
    %v526 = vmul.f32 %v491, %v496
    %v527 = vmul.f32 %v493, %v496
    %v528 = vmul.f32 %v495, %v496
    %v529 = vsub.f32 %v304, %v497
    %v530 = vsub.f32 %v307, %v498
    %v531 = vsub.f32 %v312, %v499
    %v532 = vsub.f32 %v315, %v500
    %v533 = vsub.f32 %v320, %v501
    %v534 = vsub.f32 %v323, %v502
    %v535 = vsub.f32 %v328, %v503
    %v536 = vsub.f32 %v331, %v504
    %v537 = vsub.f32 %v336, %v505
    %v538 = vsub.f32 %v339, %v506
    %v539 = vsub.f32 %v344, %v507
    %v540 = vsub.f32 %v347, %v508
    %v541 = vsub.f32 %v352, %v509
    %v542 = vsub.f32 %v355, %v510
    %v543 = vsub.f32 %v360, %v511
    %v544 = vsub.f32 %v363, %v512
    %v545 = vsub.f32 %v368, %v513
    %v546 = vsub.f32 %v371, %v514
    %v547 = vsub.f32 %v376, %v515
    %v548 = vsub.f32 %v379, %v516
    %v549 = vsub.f32 %v384, %v517
    %v550 = vsub.f32 %v387, %v518
    %v551 = vsub.f32 %v392, %v519
    %v552 = vsub.f32 %v395, %v520
    %v553 = vsub.f32 %v400, %v521
    %v554 = vsub.f32 %v403, %v522
    %v555 = vsub.f32 %v408, %v523
    %v556 = vsub.f32 %v411, %v524
    %v557 = vsub.f32 %v416, %v525
    %v558 = vsub.f32 %v419, %v526
    %v559 = vsub.f32 %v424, %v527
    %v560 = vsub.f32 %v427, %v528
    %v561 = vmul.f32 %v529, %v529
    %v562 = vmul.f32 %v530, %v530
    %v563 = vmul.f32 %v531, %v531
    %v564 = vmul.f32 %v532, %v532
    %v565 = vmul.f32 %v533, %v533
    %v566 = vmul.f32 %v534, %v534
    %v567 = vmul.f32 %v535, %v535
    %v568 = vmul.f32 %v536, %v536
    %v569 = vmul.f32 %v537, %v537
    %v570 = vmul.f32 %v538, %v538
    %v571 = vmul.f32 %v539, %v539
    %v572 = vmul.f32 %v540, %v540
    %v573 = vmul.f32 %v541, %v541
    %v574 = vmul.f32 %v542, %v542
    %v575 = vmul.f32 %v543, %v543
    %v576 = vmul.f32 %v544, %v544
    %v577 = vmul.f32 %v545, %v545
    %v578 = vmul.f32 %v546, %v546
    %v579 = vmul.f32 %v547, %v547
    %v580 = vmul.f32 %v548, %v548
    %v581 = vmul.f32 %v549, %v549
    %v582 = vmul.f32 %v550, %v550
    %v583 = vmul.f32 %v551, %v551
    %v584 = vmul.f32 %v552, %v552
    %v585 = vmul.f32 %v553, %v553
    %v586 = vmul.f32 %v554, %v554
    %v587 = vmul.f32 %v555, %v555
    %v588 = vmul.f32 %v556, %v556
    %v589 = vmul.f32 %v557, %v557
    %v590 = vmul.f32 %v558, %v558
    %v591 = vmul.f32 %v559, %v559
    %v592 = vmul.f32 %v560, %v560
    %593 = vadd.xlane.f32.xlu0 %v561
    %v594 = vpop.xlane.xlu0 %593
    %595 = vadd.xlane.f32.xlu0 %v562
    %v596 = vpop.xlane.xlu0 %595
    %597 = vadd.xlane.f32.xlu0 %v563
    %v598 = vpop.xlane.xlu0 %597
    %599 = vadd.xlane.f32.xlu0 %v564
    %v600 = vpop.xlane.xlu0 %599
    %601 = vadd.xlane.f32.xlu0 %v565
    %v602 = vpop.xlane.xlu0 %601
    %603 = vadd.xlane.f32.xlu0 %v566
    %v604 = vpop.xlane.xlu0 %603
    %605 = vadd.xlane.f32.xlu0 %v567
    %v606 = vpop.xlane.xlu0 %605
    %607 = vadd.xlane.f32.xlu0 %v568
    %v608 = vpop.xlane.xlu0 %607
    %609 = vadd.xlane.f32.xlu0 %v569
    %v610 = vpop.xlane.xlu0 %609
    %611 = vadd.xlane.f32.xlu0 %v570
    %v612 = vpop.xlane.xlu0 %611
    %613 = vadd.xlane.f32.xlu0 %v571
    %v614 = vpop.xlane.xlu0 %613
    %615 = vadd.xlane.f32.xlu0 %v572
    %v616 = vpop.xlane.xlu0 %615
    %617 = vadd.xlane.f32.xlu0 %v573
    %v618 = vpop.xlane.xlu0 %617
    %619 = vadd.xlane.f32.xlu0 %v574
    %v620 = vpop.xlane.xlu0 %619
    %621 = vadd.xlane.f32.xlu0 %v575
    %v622 = vpop.xlane.xlu0 %621
    %623 = vadd.xlane.f32.xlu0 %v576
    %v624 = vpop.xlane.xlu0 %623
    %625 = vadd.xlane.f32.xlu0 %v577
    %v626 = vpop.xlane.xlu0 %625
    %627 = vadd.xlane.f32.xlu0 %v578
    %v628 = vpop.xlane.xlu0 %627
    %629 = vadd.xlane.f32.xlu0 %v579
    %v630 = vpop.xlane.xlu0 %629
    %631 = vadd.xlane.f32.xlu0 %v580
    %v632 = vpop.xlane.xlu0 %631
    %633 = vadd.xlane.f32.xlu0 %v581
    %v634 = vpop.xlane.xlu0 %633
    %635 = vadd.xlane.f32.xlu0 %v582
    %v636 = vpop.xlane.xlu0 %635
    %637 = vadd.xlane.f32.xlu0 %v583
    %v638 = vpop.xlane.xlu0 %637
    %639 = vadd.xlane.f32.xlu0 %v584
    %v640 = vpop.xlane.xlu0 %639
    %641 = vadd.xlane.f32.xlu0 %v585
    %v642 = vpop.xlane.xlu0 %641
    %643 = vadd.xlane.f32.xlu0 %v586
    %v644 = vpop.xlane.xlu0 %643
    %645 = vadd.xlane.f32.xlu0 %v587
    %v646 = vpop.xlane.xlu0 %645
    %647 = vadd.xlane.f32.xlu0 %v588
    %v648 = vpop.xlane.xlu0 %647
    %649 = vadd.xlane.f32.xlu0 %v589
    %v650 = vpop.xlane.xlu0 %649
    %651 = vadd.xlane.f32.xlu0 %v590
    %v652 = vpop.xlane.xlu0 %651
    %653 = vadd.xlane.f32.xlu0 %v591
    %v654 = vpop.xlane.xlu0 %653
    %655 = vadd.xlane.f32.xlu0 %v592
    %v656 = vpop.xlane.xlu0 %655
    %v657 = vmul.f32 %v594, %v496
    %v658 = vmul.f32 %v596, %v496
    %v659 = vmul.f32 %v598, %v496
    %v660 = vmul.f32 %v600, %v496
    %v661 = vmul.f32 %v602, %v496
    %v662 = vmul.f32 %v604, %v496
    %v663 = vmul.f32 %v606, %v496
    %v664 = vmul.f32 %v608, %v496
    %v665 = vmul.f32 %v610, %v496
    %v666 = vmul.f32 %v612, %v496
    %v667 = vmul.f32 %v614, %v496
    %v668 = vmul.f32 %v616, %v496
    %v669 = vmul.f32 %v618, %v496
    %v670 = vmul.f32 %v620, %v496
    %v671 = vmul.f32 %v622, %v496
    %v672 = vmul.f32 %v624, %v496
    %v673 = vmul.f32 %v626, %v496
    %v674 = vmul.f32 %v628, %v496
    %v675 = vmul.f32 %v630, %v496
    %v676 = vmul.f32 %v632, %v496
    %v677 = vmul.f32 %v634, %v496
    %v678 = vmul.f32 %v636, %v496
    %v679 = vmul.f32 %v638, %v496
    %v680 = vmul.f32 %v640, %v496
    %v681 = vmul.f32 %v642, %v496
    %v682 = vmul.f32 %v644, %v496
    %v683 = vmul.f32 %v646, %v496
    %v684 = vmul.f32 %v648, %v496
    %v685 = vmul.f32 %v650, %v496
    %v686 = vmul.f32 %v652, %v496
    %v687 = vmul.f32 %v654, %v496
    %v688 = vmul.f32 %v656, %v496
    %v689 = vadd.f32 %v657, 1e-05
    %v690 = vadd.f32 %v658, 1e-05
    %v691 = vadd.f32 %v659, 1e-05
    %v692 = vadd.f32 %v660, 1e-05
    %v693 = vadd.f32 %v661, 1e-05
    %v694 = vadd.f32 %v662, 1e-05
    %v695 = vadd.f32 %v663, 1e-05
    %v696 = vadd.f32 %v664, 1e-05
    %v697 = vadd.f32 %v665, 1e-05
    %v698 = vadd.f32 %v666, 1e-05
    %v699 = vadd.f32 %v667, 1e-05
    %v700 = vadd.f32 %v668, 1e-05
    %v701 = vadd.f32 %v669, 1e-05
    %v702 = vadd.f32 %v670, 1e-05
    %v703 = vadd.f32 %v671, 1e-05
    %v704 = vadd.f32 %v672, 1e-05
    %v705 = vadd.f32 %v673, 1e-05
    %v706 = vadd.f32 %v674, 1e-05
    %v707 = vadd.f32 %v675, 1e-05
    %v708 = vadd.f32 %v676, 1e-05
    %v709 = vadd.f32 %v677, 1e-05
    %v710 = vadd.f32 %v678, 1e-05
    %v711 = vadd.f32 %v679, 1e-05
    %v712 = vadd.f32 %v680, 1e-05
    %v713 = vadd.f32 %v681, 1e-05
    %v714 = vadd.f32 %v682, 1e-05
    %v715 = vadd.f32 %v683, 1e-05
    %v716 = vadd.f32 %v684, 1e-05
    %v717 = vadd.f32 %v685, 1e-05
    %v718 = vadd.f32 %v686, 1e-05
    %v719 = vadd.f32 %v687, 1e-05
    %v720 = vadd.f32 %v688, 1e-05
    %v721 = vrsqrt.pop %v689
    %v722 = vrsqrt.pop %v690
    %v723 = vrsqrt.pop %v691
    %v724 = vrsqrt.pop %v692
    %v725 = vrsqrt.pop %v693
    %v726 = vrsqrt.pop %v694
    %v727 = vrsqrt.pop %v695
    %v728 = vrsqrt.pop %v696
    %v729 = vrsqrt.pop %v697
    %v730 = vrsqrt.pop %v698
    %v731 = vrsqrt.pop %v699
    %v732 = vrsqrt.pop %v700
    %v733 = vrsqrt.pop %v701
    %v734 = vrsqrt.pop %v702
    %v735 = vrsqrt.pop %v703
    %v736 = vrsqrt.pop %v704
    %v737 = vrsqrt.pop %v705
    %v738 = vrsqrt.pop %v706
    %v739 = vrsqrt.pop %v707
    %v740 = vrsqrt.pop %v708
    %v741 = vrsqrt.pop %v709
    %v742 = vrsqrt.pop %v710
    %v743 = vrsqrt.pop %v711
    %v744 = vrsqrt.pop %v712
    %v745 = vrsqrt.pop %v713
    %v746 = vrsqrt.pop %v714
    %v747 = vrsqrt.pop %v715
    %v748 = vrsqrt.pop %v716
    %v749 = vrsqrt.pop %v717
    %v750 = vrsqrt.pop %v718
    %v751 = vrsqrt.pop %v719
    %v752 = vrsqrt.pop %v720
    %v753 = vmul.f32 %v529, %v721
    %v754 = vmul.f32 %v530, %v722
    %v755 = vmul.f32 %v531, %v723
    %v756 = vmul.f32 %v532, %v724
    %v757 = vmul.f32 %v533, %v725
    %v758 = vmul.f32 %v534, %v726
    %v759 = vmul.f32 %v535, %v727
    %v760 = vmul.f32 %v536, %v728
    %v761 = vmul.f32 %v537, %v729
    %v762 = vmul.f32 %v538, %v730
    %v763 = vmul.f32 %v539, %v731
    %v764 = vmul.f32 %v540, %v732
    %v765 = vmul.f32 %v541, %v733
    %v766 = vmul.f32 %v542, %v734
    %v767 = vmul.f32 %v543, %v735
    %v768 = vmul.f32 %v544, %v736
    %v769 = vmul.f32 %v545, %v737
    %v770 = vmul.f32 %v546, %v738
    %v771 = vmul.f32 %v547, %v739
    %v772 = vmul.f32 %v548, %v740
    %v773 = vmul.f32 %v549, %v741
    %v774 = vmul.f32 %v550, %v742
    %v775 = vmul.f32 %v551, %v743
    %v776 = vmul.f32 %v552, %v744
    %v777 = vmul.f32 %v553, %v745
    %v778 = vmul.f32 %v554, %v746
    %v779 = vmul.f32 %v555, %v747
    %v780 = vmul.f32 %v556, %v748
    %v781 = vmul.f32 %v557, %v749
    %v782 = vmul.f32 %v558, %v750
    %v783 = vmul.f32 %v559, %v751
    %v784 = vmul.f32 %v560, %v752
    %v785 = vlaneseq
    %v786 = vshrl.u32 %v785, 7
    %v787 = vsub.s32 0, %v786
    %v788 = vrot.slane %v430, %v787
    %v789 = vmul.f32 %v753, %v788
    %v790 = vmul.f32 %v754, %v788
    %v791 = vmul.f32 %v755, %v788
    %v792 = vmul.f32 %v756, %v788
    %v793 = vmul.f32 %v757, %v788
    %v794 = vmul.f32 %v758, %v788
    %v795 = vmul.f32 %v759, %v788
    %v796 = vmul.f32 %v760, %v788
    %v797 = vmul.f32 %v761, %v788
    %v798 = vmul.f32 %v762, %v788
    %v799 = vmul.f32 %v763, %v788
    %v800 = vmul.f32 %v764, %v788
    %v801 = vmul.f32 %v765, %v788
    %v802 = vmul.f32 %v766, %v788
    %v803 = vmul.f32 %v767, %v788
    %v804 = vmul.f32 %v768, %v788
    %v805 = vmul.f32 %v769, %v788
    %v806 = vmul.f32 %v770, %v788
    %v807 = vmul.f32 %v771, %v788
    %v808 = vmul.f32 %v772, %v788
    %v809 = vmul.f32 %v773, %v788
    %v810 = vmul.f32 %v774, %v788
    %v811 = vmul.f32 %v775, %v788
    %v812 = vmul.f32 %v776, %v788
    %v813 = vmul.f32 %v777, %v788
    %v814 = vmul.f32 %v778, %v788
    %v815 = vmul.f32 %v779, %v788
    %v816 = vmul.f32 %v780, %v788
    %v817 = vmul.f32 %v781, %v788
    %v818 = vmul.f32 %v782, %v788
    %v819 = vmul.f32 %v783, %v788
    %v820 = vmul.f32 %v784, %v788
    %v821 = vlaneseq
    %v822 = vshrl.u32 %v821, 7
    %v823 = vsub.s32 0, %v822
    %v824 = vrot.slane %v431, %v823
    %v825 = vadd.f32 %v789, %v824
    %v826 = vadd.f32 %v790, %v824
    %v827 = vadd.f32 %v791, %v824
    %v828 = vadd.f32 %v792, %v824
    %v829 = vadd.f32 %v793, %v824
    %v830 = vadd.f32 %v794, %v824
    %v831 = vadd.f32 %v795, %v824
    %v832 = vadd.f32 %v796, %v824
    %v833 = vadd.f32 %v797, %v824
    %v834 = vadd.f32 %v798, %v824
    %v835 = vadd.f32 %v799, %v824
    %v836 = vadd.f32 %v800, %v824
    %v837 = vadd.f32 %v801, %v824
    %v838 = vadd.f32 %v802, %v824
    %v839 = vadd.f32 %v803, %v824
    %v840 = vadd.f32 %v804, %v824
    %v841 = vadd.f32 %v805, %v824
    %v842 = vadd.f32 %v806, %v824
    %v843 = vadd.f32 %v807, %v824
    %v844 = vadd.f32 %v808, %v824
    %v845 = vadd.f32 %v809, %v824
    %v846 = vadd.f32 %v810, %v824
    %v847 = vadd.f32 %v811, %v824
    %v848 = vadd.f32 %v812, %v824
    %v849 = vadd.f32 %v813, %v824
    %v850 = vadd.f32 %v814, %v824
    %v851 = vadd.f32 %v815, %v824
    %v852 = vadd.f32 %v816, %v824
    %v853 = vadd.f32 %v817, %v824
    %v854 = vadd.f32 %v818, %v824
    %v855 = vadd.f32 %v819, %v824
    %v856 = vadd.f32 %v820, %v824
    %v857 = vmul.f32 %v825, 0.5
    %v858 = vmul.f32 %v826, 0.5
    %v859 = vmul.f32 %v827, 0.5
    %v860 = vmul.f32 %v828, 0.5
    %v861 = vmul.f32 %v829, 0.5
    %v862 = vmul.f32 %v830, 0.5
    %v863 = vmul.f32 %v831, 0.5
    %v864 = vmul.f32 %v832, 0.5
    %v865 = vmul.f32 %v833, 0.5
    %v866 = vmul.f32 %v834, 0.5
    %v867 = vmul.f32 %v835, 0.5
    %v868 = vmul.f32 %v836, 0.5
    %v869 = vmul.f32 %v837, 0.5
    %v870 = vmul.f32 %v838, 0.5
    %v871 = vmul.f32 %v839, 0.5
    %v872 = vmul.f32 %v840, 0.5
    %v873 = vmul.f32 %v841, 0.5
    %v874 = vmul.f32 %v842, 0.5
    %v875 = vmul.f32 %v843, 0.5
    %v876 = vmul.f32 %v844, 0.5
    %v877 = vmul.f32 %v845, 0.5
    %v878 = vmul.f32 %v846, 0.5
    %v879 = vmul.f32 %v847, 0.5
    %v880 = vmul.f32 %v848, 0.5
    %v881 = vmul.f32 %v849, 0.5
    %v882 = vmul.f32 %v850, 0.5
    %v883 = vmul.f32 %v851, 0.5
    %v884 = vmul.f32 %v852, 0.5
    %v885 = vmul.f32 %v853, 0.5
    %v886 = vmul.f32 %v854, 0.5
    %v887 = vmul.f32 %v855, 0.5
    %v888 = vmul.f32 %v856, 0.5
    %v889 = vmul.f32 %v825, 0.70710677
    %v890 = vmul.f32 %v826, 0.70710677
    %v891 = vmul.f32 %v827, 0.70710677
    %v892 = vmul.f32 %v828, 0.70710677
    %v893 = vmul.f32 %v829, 0.70710677
    %v894 = vmul.f32 %v830, 0.70710677
    %v895 = vmul.f32 %v831, 0.70710677
    %v896 = vmul.f32 %v832, 0.70710677
    %v897 = vmul.f32 %v833, 0.70710677
    %v898 = vmul.f32 %v834, 0.70710677
    %v899 = vmul.f32 %v835, 0.70710677
    %v900 = vmul.f32 %v836, 0.70710677
    %v901 = vmul.f32 %v837, 0.70710677
    %v902 = vmul.f32 %v838, 0.70710677
    %v903 = vmul.f32 %v839, 0.70710677
    %v904 = vmul.f32 %v840, 0.70710677
    %v905 = vmul.f32 %v841, 0.70710677
    %v906 = vmul.f32 %v842, 0.70710677
    %v907 = vmul.f32 %v843, 0.70710677
    %v908 = vmul.f32 %v844, 0.70710677
    %v909 = vmul.f32 %v845, 0.70710677
    %v910 = vmul.f32 %v846, 0.70710677
    %v911 = vmul.f32 %v847, 0.70710677
    %v912 = vmul.f32 %v848, 0.70710677
    %v913 = vmul.f32 %v849, 0.70710677
    %v914 = vmul.f32 %v850, 0.70710677
    %v915 = vmul.f32 %v851, 0.70710677
    %v916 = vmul.f32 %v852, 0.70710677
    %v917 = vmul.f32 %v853, 0.70710677
    %v918 = vmul.f32 %v854, 0.70710677
    %v919 = vmul.f32 %v855, 0.70710677
    %v920 = vmul.f32 %v856, 0.70710677
    %v921 = verf.f32.pop %v889
    %v922 = verf.f32.pop %v890
    %v923 = verf.f32.pop %v891
    %v924 = verf.f32.pop %v892
    %v925 = verf.f32.pop %v893
    %v926 = verf.f32.pop %v894
    %v927 = verf.f32.pop %v895
    %v928 = verf.f32.pop %v896
    %v929 = verf.f32.pop %v897
    %v930 = verf.f32.pop %v898
    %v931 = verf.f32.pop %v899
    %v932 = verf.f32.pop %v900
    %v933 = verf.f32.pop %v901
    %v934 = verf.f32.pop %v902
    %v935 = verf.f32.pop %v903
    %v936 = verf.f32.pop %v904
    %v937 = verf.f32.pop %v905
    %v938 = verf.f32.pop %v906
    %v939 = verf.f32.pop %v907
    %v940 = verf.f32.pop %v908
    %v941 = verf.f32.pop %v909
    %v942 = verf.f32.pop %v910
    %v943 = verf.f32.pop %v911
    %v944 = verf.f32.pop %v912
    %v945 = verf.f32.pop %v913
    %v946 = verf.f32.pop %v914
    %v947 = verf.f32.pop %v915
    %v948 = verf.f32.pop %v916
    %v949 = verf.f32.pop %v917
    %v950 = verf.f32.pop %v918
    %v951 = verf.f32.pop %v919
    %v952 = verf.f32.pop %v920
    %v953 = vadd.f32 %v921, 1.0
    %v954 = vadd.f32 %v922, 1.0
    %v955 = vadd.f32 %v923, 1.0
    %v956 = vadd.f32 %v924, 1.0
    %v957 = vadd.f32 %v925, 1.0
    %v958 = vadd.f32 %v926, 1.0
    %v959 = vadd.f32 %v927, 1.0
    %v960 = vadd.f32 %v928, 1.0
    %v961 = vadd.f32 %v929, 1.0
    %v962 = vadd.f32 %v930, 1.0
    %v963 = vadd.f32 %v931, 1.0
    %v964 = vadd.f32 %v932, 1.0
    %v965 = vadd.f32 %v933, 1.0
    %v966 = vadd.f32 %v934, 1.0
    %v967 = vadd.f32 %v935, 1.0
    %v968 = vadd.f32 %v936, 1.0
    %v969 = vadd.f32 %v937, 1.0
    %v970 = vadd.f32 %v938, 1.0
    %v971 = vadd.f32 %v939, 1.0
    %v972 = vadd.f32 %v940, 1.0
    %v973 = vadd.f32 %v941, 1.0
    %v974 = vadd.f32 %v942, 1.0
    %v975 = vadd.f32 %v943, 1.0
    %v976 = vadd.f32 %v944, 1.0
    %v977 = vadd.f32 %v945, 1.0
    %v978 = vadd.f32 %v946, 1.0
    %v979 = vadd.f32 %v947, 1.0
    %v980 = vadd.f32 %v948, 1.0
    %v981 = vadd.f32 %v949, 1.0
    %v982 = vadd.f32 %v950, 1.0
    %v983 = vadd.f32 %v951, 1.0
    %v984 = vadd.f32 %v952, 1.0
    %v985 = vmul.f32 %v857, %v953
    %v986 = vmul.f32 %v858, %v954
    %v987 = vmul.f32 %v859, %v955
    %v988 = vmul.f32 %v860, %v956
    %v989 = vmul.f32 %v861, %v957
    %v990 = vmul.f32 %v862, %v958
    %v991 = vmul.f32 %v863, %v959
    %v992 = vmul.f32 %v864, %v960
    %v993 = vmul.f32 %v865, %v961
    %v994 = vmul.f32 %v866, %v962
    %v995 = vmul.f32 %v867, %v963
    %v996 = vmul.f32 %v868, %v964
    %v997 = vmul.f32 %v869, %v965
    %v998 = vmul.f32 %v870, %v966
    %v999 = vmul.f32 %v871, %v967
    %v1000 = vmul.f32 %v872, %v968
    %v1001 = vmul.f32 %v873, %v969
    %v1002 = vmul.f32 %v874, %v970
    %v1003 = vmul.f32 %v875, %v971
    %v1004 = vmul.f32 %v876, %v972
    %v1005 = vmul.f32 %v877, %v973
    %v1006 = vmul.f32 %v878, %v974
    %v1007 = vmul.f32 %v879, %v975
    %v1008 = vmul.f32 %v880, %v976
    %v1009 = vmul.f32 %v881, %v977
    %v1010 = vmul.f32 %v882, %v978
    %v1011 = vmul.f32 %v883, %v979
    %v1012 = vmul.f32 %v884, %v980
    %v1013 = vmul.f32 %v885, %v981
    %v1014 = vmul.f32 %v886, %v982
    %v1015 = vmul.f32 %v887, %v983
    %v1016 = vmul.f32 %v888, %v984
    %v1017 = vpack.c.bf16 %v986, %v985
    %v1018 = vpack.c.bf16 %v988, %v987
    %v1019 = vpack.c.bf16 %v990, %v989
    %v1020 = vpack.c.bf16 %v992, %v991
    %v1021 = vpack.c.bf16 %v994, %v993
    %v1022 = vpack.c.bf16 %v996, %v995
    %v1023 = vpack.c.bf16 %v998, %v997
    %v1024 = vpack.c.bf16 %v1000, %v999
    %v1025 = vpack.c.bf16 %v1002, %v1001
    %v1026 = vpack.c.bf16 %v1004, %v1003
    %v1027 = vpack.c.bf16 %v1006, %v1005
    %v1028 = vpack.c.bf16 %v1008, %v1007
    %v1029 = vpack.c.bf16 %v1010, %v1009
    %v1030 = vpack.c.bf16 %v1012, %v1011
    %v1031 = vpack.c.bf16 %v1014, %v1013
    %v1032 = vpack.c.bf16 %v1016, %v1015
    %v1033 = vld [vmem:[#allocation7] sm:$0xf]
    %v1034 = vld [vmem:[#allocation7 + $0x4] sm:$0xf]
    %v1035 = vld [vmem:[#allocation7 + $0x8] sm:$0xf]
    %v1036 = vld [vmem:[#allocation7 + $0xc] sm:$0xf]
    %v1037 = vld [vmem:[#allocation7 + $0x10] sm:$0xf]
    %v1038 = vld [vmem:[#allocation7 + $0x14] sm:$0xf]
    %v1039 = vld [vmem:[#allocation7 + $0x18] sm:$0xf]
    %v1040 = vld [vmem:[#allocation7 + $0x1c] sm:$0xf]
    %v1041 = vld [vmem:[#allocation7 + $0x20] sm:$0xf]
    %v1042 = vld [vmem:[#allocation7 + $0x24] sm:$0xf]
    %v1043 = vld [vmem:[#allocation7 + $0x28] sm:$0xf]
    %v1044 = vld [vmem:[#allocation7 + $0x2c] sm:$0xf]
    %v1045 = vld [vmem:[#allocation7 + $0x30] sm:$0xf]
    %v1046 = vld [vmem:[#allocation7 + $0x34] sm:$0xf]
    %v1047 = vld [vmem:[#allocation7 + $0x38] sm:$0xf]
    %v1048 = vld [vmem:[#allocation7 + $0x3c] sm:$0xf]
    %v1049 = vld [vmem:[#allocation8 + $0x3] sm:$0x1]
    %v1050 = vlaneseq
    %v1051 = vshrl.u32 %v1050, 7
    %v1052 = vsub.s32 0, %v1051
    %v1053 = vrot.slane %v1049, %v1052
    %v1070 = vunpack.c.l.b16 %v1033
    %v1071 = vunpack.c.l.b16 %v1034
    %v1072 = vunpack.c.l.b16 %v1035
    %v1073 = vunpack.c.l.b16 %v1036
    %v1074 = vunpack.c.l.b16 %v1037
    %v1075 = vunpack.c.l.b16 %v1038
    %v1076 = vunpack.c.l.b16 %v1039
    %v1077 = vunpack.c.l.b16 %v1040
    %v1078 = vunpack.c.l.b16 %v1041
    %v1079 = vunpack.c.l.b16 %v1042
    %v1080 = vunpack.c.l.b16 %v1043
    %v1081 = vunpack.c.l.b16 %v1044
    %v1082 = vunpack.c.l.b16 %v1045
    %v1083 = vunpack.c.l.b16 %v1046
    %v1084 = vunpack.c.l.b16 %v1047
    %v1085 = vunpack.c.l.b16 %v1048
    %v1086 = vpack.c.b16 %v1071, %v1070
    %v1087 = vpack.c.b16 %v1073, %v1072
    %v1088 = vpack.c.b16 %v1075, %v1074
    %v1089 = vpack.c.b16 %v1077, %v1076
    %v1090 = vpack.c.b16 %v1079, %v1078
    %v1091 = vpack.c.b16 %v1081, %v1080
    %v1092 = vpack.c.b16 %v1083, %v1082
    %v1093 = vpack.c.b16 %v1085, %v1084
    %1102 = vmatprep.subr.bf16.mxu0 0
    %1103 = vmatpush1.bf16.msra.mxu0 %v1093
    %1104 = vmatprep.subr.bf16.mxu0 0
    %1105 = vmatpush1.bf16.msra.mxu0 %v1092
    %1106 = vmatprep.subr.bf16.mxu0 0
    %1107 = vmatpush1.bf16.msra.mxu0 %v1091
    %1108 = vmatprep.subr.bf16.mxu0 0
    %1109 = vmatpush1.bf16.msra.mxu0 %v1090
    %1110 = vmatprep.subr.bf16.mxu0 0
    %1111 = vmatpush1.bf16.msra.mxu0 %v1089
    %1112 = vmatprep.subr.bf16.mxu0 0
    %1113 = vmatpush1.bf16.msra.mxu0 %v1088
    %1114 = vmatprep.subr.bf16.mxu0 0
    %1115 = vmatpush1.bf16.msra.mxu0 %v1087
    %1116 = vmatprep.subr.bf16.mxu0 0
    %1117 = vmatpush1.bf16.msra.mxu0 %v1086
    %1118 = vmatprep.subr.bf16.mxu0 0
    %1119 = vmatpush2.bf16.msra.mxu0 0
    %1120 = vmatprep.subr.bf16.mxu0 0
    %1121 = vmatpush2.bf16.msra.mxu0 0
    %1122 = vmatprep.subr.bf16.mxu0 0
    %1123 = vmatpush2.bf16.msra.mxu0 0
    %1124 = vmatprep.subr.bf16.mxu0 0
    %1125 = vmatpush2.bf16.msra.mxu0 0
    %1126 = vmatprep.subr.bf16.mxu0 0
    %1127 = vmatpush2.bf16.msra.mxu0 0
    %1128 = vmatprep.subr.bf16.mxu0 0
    %1129 = vmatpush2.bf16.msra.mxu0 0
    %1130 = vmatprep.subr.bf16.mxu0 0
    %1131 = vmatpush2.bf16.msra.mxu0 0
    %1132 = vmatprep.subr.bf16.mxu0 0
    %1133 = vmatpush2.bf16.msra.mxu0 0
    %1134 = vmatprep.mubr.bf16.mxu0 0
    %1135 = vmatmul.mubr.bf16.gmra.mxu0 %v1017
    %v1136 = vpop.f32.mrf.mxu0
    %v1137 = vadd.f32 %v1053, %v1136
    %v1138 = vpop.f32.mrf.mxu0
    %v1139 = vpop.f32.mrf.mxu0
    %v1140 = vadd.f32 %v1053, %v1139
    %v1141 = vpop.f32.mrf.mxu0
    %1142 = vmatprep.mubr.bf16.mxu0 0
    %1143 = vmatmul.mubr.bf16.gmra.mxu0 %v1018
    %v1144 = vpop.f32.mrf.mxu0
    %v1145 = vadd.f32 %v1053, %v1144
    %v1146 = vpop.f32.mrf.mxu0
    %v1147 = vpop.f32.mrf.mxu0
    %v1148 = vadd.f32 %v1053, %v1147
    %v1149 = vpop.f32.mrf.mxu0
    %1150 = vmatprep.mubr.bf16.mxu0 0
    %1151 = vmatmul.mubr.bf16.gmra.mxu0 %v1019
    %v1152 = vpop.f32.mrf.mxu0
    %v1153 = vadd.f32 %v1053, %v1152
    %v1154 = vpop.f32.mrf.mxu0
    %v1155 = vpop.f32.mrf.mxu0
    %v1156 = vadd.f32 %v1053, %v1155
    %v1157 = vpop.f32.mrf.mxu0
    %1158 = vmatprep.mubr.bf16.mxu0 0
    %1159 = vmatmul.mubr.bf16.gmra.mxu0 %v1020
    %v1160 = vpop.f32.mrf.mxu0
    %v1161 = vadd.f32 %v1053, %v1160
    %v1162 = vpop.f32.mrf.mxu0
    %v1163 = vpop.f32.mrf.mxu0
    %v1164 = vadd.f32 %v1053, %v1163
    %v1165 = vpop.f32.mrf.mxu0
    %1166 = vmatprep.mubr.bf16.mxu0 0
    %1167 = vmatmul.mubr.bf16.gmra.mxu0 %v1021
    %v1168 = vpop.f32.mrf.mxu0
    %v1169 = vadd.f32 %v1053, %v1168
    %v1170 = vpop.f32.mrf.mxu0
    %v1171 = vpop.f32.mrf.mxu0
    %v1172 = vadd.f32 %v1053, %v1171
    %v1173 = vpop.f32.mrf.mxu0
    %1174 = vmatprep.mubr.bf16.mxu0 0
    %1175 = vmatmul.mubr.bf16.gmra.mxu0 %v1022
    %v1176 = vpop.f32.mrf.mxu0
    %v1177 = vadd.f32 %v1053, %v1176
    %v1178 = vpop.f32.mrf.mxu0
    %v1179 = vpop.f32.mrf.mxu0
    %v1180 = vadd.f32 %v1053, %v1179
    %v1181 = vpop.f32.mrf.mxu0
    %1182 = vmatprep.mubr.bf16.mxu0 0
    %1183 = vmatmul.mubr.bf16.gmra.mxu0 %v1023
    %v1184 = vpop.f32.mrf.mxu0
    %v1185 = vadd.f32 %v1053, %v1184
    %v1186 = vpop.f32.mrf.mxu0
    %v1187 = vpop.f32.mrf.mxu0
    %v1188 = vadd.f32 %v1053, %v1187
    %v1189 = vpop.f32.mrf.mxu0
    %1190 = vmatprep.mubr.bf16.mxu0 0
    %1191 = vmatmul.mubr.bf16.gmra.mxu0 %v1024
    %v1192 = vpop.f32.mrf.mxu0
    %v1193 = vadd.f32 %v1053, %v1192
    %v1194 = vpop.f32.mrf.mxu0
    %v1195 = vpop.f32.mrf.mxu0
    %v1196 = vadd.f32 %v1053, %v1195
    %v1197 = vpop.f32.mrf.mxu0
    %1198 = vmatprep.mubr.bf16.mxu0 0
    %1199 = vmatmul.mubr.bf16.gmra.mxu0 %v1025
    %v1200 = vpop.f32.mrf.mxu0
    %v1201 = vadd.f32 %v1053, %v1200
    %v1202 = vpop.f32.mrf.mxu0
    %v1203 = vpop.f32.mrf.mxu0
    %v1204 = vadd.f32 %v1053, %v1203
    %v1205 = vpop.f32.mrf.mxu0
    %1206 = vmatprep.mubr.bf16.mxu0 0
    %1207 = vmatmul.mubr.bf16.gmra.mxu0 %v1026
    %v1208 = vpop.f32.mrf.mxu0
    %v1209 = vadd.f32 %v1053, %v1208
    %v1210 = vpop.f32.mrf.mxu0
    %v1211 = vpop.f32.mrf.mxu0
    %v1212 = vadd.f32 %v1053, %v1211
    %v1213 = vpop.f32.mrf.mxu0
    %1214 = vmatprep.mubr.bf16.mxu0 0
    %1215 = vmatmul.mubr.bf16.gmra.mxu0 %v1027
    %v1216 = vpop.f32.mrf.mxu0
    %v1217 = vadd.f32 %v1053, %v1216
    %v1218 = vpop.f32.mrf.mxu0
    %v1219 = vpop.f32.mrf.mxu0
    %v1220 = vadd.f32 %v1053, %v1219
    %v1221 = vpop.f32.mrf.mxu0
    %1222 = vmatprep.mubr.bf16.mxu0 0
    %1223 = vmatmul.mubr.bf16.gmra.mxu0 %v1028
    %v1224 = vpop.f32.mrf.mxu0
    %v1225 = vadd.f32 %v1053, %v1224
    %v1226 = vpop.f32.mrf.mxu0
    %v1227 = vpop.f32.mrf.mxu0
    %v1228 = vadd.f32 %v1053, %v1227
    %v1229 = vpop.f32.mrf.mxu0
    %1230 = vmatprep.mubr.bf16.mxu0 0
    %1231 = vmatmul.mubr.bf16.gmra.mxu0 %v1029
    %v1232 = vpop.f32.mrf.mxu0
    %v1233 = vadd.f32 %v1053, %v1232
    %v1234 = vpop.f32.mrf.mxu0
    %v1235 = vpop.f32.mrf.mxu0
    %v1236 = vadd.f32 %v1053, %v1235
    %v1237 = vpop.f32.mrf.mxu0
    %1238 = vmatprep.mubr.bf16.mxu0 0
    %1239 = vmatmul.mubr.bf16.gmra.mxu0 %v1030
    %v1240 = vpop.f32.mrf.mxu0
    %v1241 = vadd.f32 %v1053, %v1240
    %v1242 = vpop.f32.mrf.mxu0
    %v1243 = vpop.f32.mrf.mxu0
    %v1244 = vadd.f32 %v1053, %v1243
    %v1245 = vpop.f32.mrf.mxu0
    %1246 = vmatprep.mubr.bf16.mxu0 0
    %1247 = vmatmul.mubr.bf16.gmra.mxu0 %v1031
    %v1248 = vpop.f32.mrf.mxu0
    %v1249 = vadd.f32 %v1053, %v1248
    %v1250 = vpop.f32.mrf.mxu0
    %v1251 = vpop.f32.mrf.mxu0
    %v1252 = vadd.f32 %v1053, %v1251
    %v1253 = vpop.f32.mrf.mxu0
    %1254 = vmatprep.mubr.bf16.mxu0 0
    %1255 = vmatmul.mubr.bf16.gmra.mxu0 %v1032
    %v1256 = vpop.f32.mrf.mxu0
    %v1257 = vadd.f32 %v1053, %v1256
    %v1258 = vpop.f32.mrf.mxu0
    %v1259 = vpop.f32.mrf.mxu0
    %v1260 = vadd.f32 %v1053, %v1259
    %v1261 = vpop.f32.mrf.mxu0
    %1262 = vdwg.mxu0
    %v1263 = vld [vmem:[#allocation8 + $0x4] sm:$0x1]
    %v1264 = vld [vmem:[#allocation8 + $0x5] sm:$0x1]
    %1265 = vadd.xlane.f32.xlu0 %v1137
    %v1266 = vpop.xlane.xlu0 %1265
    %1267 = vadd.xlane.f32.xlu0 %v1140
    %v1268 = vpop.xlane.xlu0 %1267
    %1269 = vadd.xlane.f32.xlu0 %v1145
    %v1270 = vpop.xlane.xlu0 %1269
    %1271 = vadd.xlane.f32.xlu0 %v1148
    %v1272 = vpop.xlane.xlu0 %1271
    %1273 = vadd.xlane.f32.xlu0 %v1153
    %v1274 = vpop.xlane.xlu0 %1273
    %1275 = vadd.xlane.f32.xlu0 %v1156
    %v1276 = vpop.xlane.xlu0 %1275
    %1277 = vadd.xlane.f32.xlu0 %v1161
    %v1278 = vpop.xlane.xlu0 %1277
    %1279 = vadd.xlane.f32.xlu0 %v1164
    %v1280 = vpop.xlane.xlu0 %1279
    %1281 = vadd.xlane.f32.xlu0 %v1169
    %v1282 = vpop.xlane.xlu0 %1281
    %1283 = vadd.xlane.f32.xlu0 %v1172
    %v1284 = vpop.xlane.xlu0 %1283
    %1285 = vadd.xlane.f32.xlu0 %v1177
    %v1286 = vpop.xlane.xlu0 %1285
    %1287 = vadd.xlane.f32.xlu0 %v1180
    %v1288 = vpop.xlane.xlu0 %1287
    %1289 = vadd.xlane.f32.xlu0 %v1185
    %v1290 = vpop.xlane.xlu0 %1289
    %1291 = vadd.xlane.f32.xlu0 %v1188
    %v1292 = vpop.xlane.xlu0 %1291
    %1293 = vadd.xlane.f32.xlu0 %v1193
    %v1294 = vpop.xlane.xlu0 %1293
    %1295 = vadd.xlane.f32.xlu0 %v1196
    %v1296 = vpop.xlane.xlu0 %1295
    %1297 = vadd.xlane.f32.xlu0 %v1201
    %v1298 = vpop.xlane.xlu0 %1297
    %1299 = vadd.xlane.f32.xlu0 %v1204
    %v1300 = vpop.xlane.xlu0 %1299
    %1301 = vadd.xlane.f32.xlu0 %v1209
    %v1302 = vpop.xlane.xlu0 %1301
    %1303 = vadd.xlane.f32.xlu0 %v1212
    %v1304 = vpop.xlane.xlu0 %1303
    %1305 = vadd.xlane.f32.xlu0 %v1217
    %v1306 = vpop.xlane.xlu0 %1305
    %1307 = vadd.xlane.f32.xlu0 %v1220
    %v1308 = vpop.xlane.xlu0 %1307
    %1309 = vadd.xlane.f32.xlu0 %v1225
    %v1310 = vpop.xlane.xlu0 %1309
    %1311 = vadd.xlane.f32.xlu0 %v1228
    %v1312 = vpop.xlane.xlu0 %1311
    %1313 = vadd.xlane.f32.xlu0 %v1233
    %v1314 = vpop.xlane.xlu0 %1313
    %1315 = vadd.xlane.f32.xlu0 %v1236
    %v1316 = vpop.xlane.xlu0 %1315
    %1317 = vadd.xlane.f32.xlu0 %v1241
    %v1318 = vpop.xlane.xlu0 %1317
    %1319 = vadd.xlane.f32.xlu0 %v1244
    %v1320 = vpop.xlane.xlu0 %1319
    %1321 = vadd.xlane.f32.xlu0 %v1249
    %v1322 = vpop.xlane.xlu0 %1321
    %1323 = vadd.xlane.f32.xlu0 %v1252
    %v1324 = vpop.xlane.xlu0 %1323
    %1325 = vadd.xlane.f32.xlu0 %v1257
    %v1326 = vpop.xlane.xlu0 %1325
    %1327 = vadd.xlane.f32.xlu0 %v1260
    %v1328 = vpop.xlane.xlu0 %1327
    %v1329 = vmul.f32 %v1266, %v496
    %v1330 = vmul.f32 %v1268, %v496
    %v1331 = vmul.f32 %v1270, %v496
    %v1332 = vmul.f32 %v1272, %v496
    %v1333 = vmul.f32 %v1274, %v496
    %v1334 = vmul.f32 %v1276, %v496
    %v1335 = vmul.f32 %v1278, %v496
    %v1336 = vmul.f32 %v1280, %v496
    %v1337 = vmul.f32 %v1282, %v496
    %v1338 = vmul.f32 %v1284, %v496
    %v1339 = vmul.f32 %v1286, %v496
    %v1340 = vmul.f32 %v1288, %v496
    %v1341 = vmul.f32 %v1290, %v496
    %v1342 = vmul.f32 %v1292, %v496
    %v1343 = vmul.f32 %v1294, %v496
    %v1344 = vmul.f32 %v1296, %v496
    %v1345 = vmul.f32 %v1298, %v496
    %v1346 = vmul.f32 %v1300, %v496
    %v1347 = vmul.f32 %v1302, %v496
    %v1348 = vmul.f32 %v1304, %v496
    %v1349 = vmul.f32 %v1306, %v496
    %v1350 = vmul.f32 %v1308, %v496
    %v1351 = vmul.f32 %v1310, %v496
    %v1352 = vmul.f32 %v1312, %v496
    %v1353 = vmul.f32 %v1314, %v496
    %v1354 = vmul.f32 %v1316, %v496
    %v1355 = vmul.f32 %v1318, %v496
    %v1356 = vmul.f32 %v1320, %v496
    %v1357 = vmul.f32 %v1322, %v496
    %v1358 = vmul.f32 %v1324, %v496
    %v1359 = vmul.f32 %v1326, %v496
    %v1360 = vmul.f32 %v1328, %v496
    %v1361 = vsub.f32 %v1137, %v1329
    %v1362 = vsub.f32 %v1140, %v1330
    %v1363 = vsub.f32 %v1145, %v1331
    %v1364 = vsub.f32 %v1148, %v1332
    %v1365 = vsub.f32 %v1153, %v1333
    %v1366 = vsub.f32 %v1156, %v1334
    %v1367 = vsub.f32 %v1161, %v1335
    %v1368 = vsub.f32 %v1164, %v1336
    %v1369 = vsub.f32 %v1169, %v1337
    %v1370 = vsub.f32 %v1172, %v1338
    %v1371 = vsub.f32 %v1177, %v1339
    %v1372 = vsub.f32 %v1180, %v1340
    %v1373 = vsub.f32 %v1185, %v1341
    %v1374 = vsub.f32 %v1188, %v1342
    %v1375 = vsub.f32 %v1193, %v1343
    %v1376 = vsub.f32 %v1196, %v1344
    %v1377 = vsub.f32 %v1201, %v1345
    %v1378 = vsub.f32 %v1204, %v1346
    %v1379 = vsub.f32 %v1209, %v1347
    %v1380 = vsub.f32 %v1212, %v1348
    %v1381 = vsub.f32 %v1217, %v1349
    %v1382 = vsub.f32 %v1220, %v1350
    %v1383 = vsub.f32 %v1225, %v1351
    %v1384 = vsub.f32 %v1228, %v1352
    %v1385 = vsub.f32 %v1233, %v1353
    %v1386 = vsub.f32 %v1236, %v1354
    %v1387 = vsub.f32 %v1241, %v1355
    %v1388 = vsub.f32 %v1244, %v1356
    %v1389 = vsub.f32 %v1249, %v1357
    %v1390 = vsub.f32 %v1252, %v1358
    %v1391 = vsub.f32 %v1257, %v1359
    %v1392 = vsub.f32 %v1260, %v1360
    %v1393 = vmul.f32 %v1361, %v1361
    %v1394 = vmul.f32 %v1362, %v1362
    %v1395 = vmul.f32 %v1363, %v1363
    %v1396 = vmul.f32 %v1364, %v1364
    %v1397 = vmul.f32 %v1365, %v1365
    %v1398 = vmul.f32 %v1366, %v1366
    %v1399 = vmul.f32 %v1367, %v1367
    %v1400 = vmul.f32 %v1368, %v1368
    %v1401 = vmul.f32 %v1369, %v1369
    %v1402 = vmul.f32 %v1370, %v1370
    %v1403 = vmul.f32 %v1371, %v1371
    %v1404 = vmul.f32 %v1372, %v1372
    %v1405 = vmul.f32 %v1373, %v1373
    %v1406 = vmul.f32 %v1374, %v1374
    %v1407 = vmul.f32 %v1375, %v1375
    %v1408 = vmul.f32 %v1376, %v1376
    %v1409 = vmul.f32 %v1377, %v1377
    %v1410 = vmul.f32 %v1378, %v1378
    %v1411 = vmul.f32 %v1379, %v1379
    %v1412 = vmul.f32 %v1380, %v1380
    %v1413 = vmul.f32 %v1381, %v1381
    %v1414 = vmul.f32 %v1382, %v1382
    %v1415 = vmul.f32 %v1383, %v1383
    %v1416 = vmul.f32 %v1384, %v1384
    %v1417 = vmul.f32 %v1385, %v1385
    %v1418 = vmul.f32 %v1386, %v1386
    %v1419 = vmul.f32 %v1387, %v1387
    %v1420 = vmul.f32 %v1388, %v1388
    %v1421 = vmul.f32 %v1389, %v1389
    %v1422 = vmul.f32 %v1390, %v1390
    %v1423 = vmul.f32 %v1391, %v1391
    %v1424 = vmul.f32 %v1392, %v1392
    %1425 = vadd.xlane.f32.xlu0 %v1393
    %v1426 = vpop.xlane.xlu0 %1425
    %1427 = vadd.xlane.f32.xlu0 %v1394
    %v1428 = vpop.xlane.xlu0 %1427
    %1429 = vadd.xlane.f32.xlu0 %v1395
    %v1430 = vpop.xlane.xlu0 %1429
    %1431 = vadd.xlane.f32.xlu0 %v1396
    %v1432 = vpop.xlane.xlu0 %1431
    %1433 = vadd.xlane.f32.xlu0 %v1397
    %v1434 = vpop.xlane.xlu0 %1433
    %1435 = vadd.xlane.f32.xlu0 %v1398
    %v1436 = vpop.xlane.xlu0 %1435
    %1437 = vadd.xlane.f32.xlu0 %v1399
    %v1438 = vpop.xlane.xlu0 %1437
    %1439 = vadd.xlane.f32.xlu0 %v1400
    %v1440 = vpop.xlane.xlu0 %1439
    %1441 = vadd.xlane.f32.xlu0 %v1401
    %v1442 = vpop.xlane.xlu0 %1441
    %1443 = vadd.xlane.f32.xlu0 %v1402
    %v1444 = vpop.xlane.xlu0 %1443
    %1445 = vadd.xlane.f32.xlu0 %v1403
    %v1446 = vpop.xlane.xlu0 %1445
    %1447 = vadd.xlane.f32.xlu0 %v1404
    %v1448 = vpop.xlane.xlu0 %1447
    %1449 = vadd.xlane.f32.xlu0 %v1405
    %v1450 = vpop.xlane.xlu0 %1449
    %1451 = vadd.xlane.f32.xlu0 %v1406
    %v1452 = vpop.xlane.xlu0 %1451
    %1453 = vadd.xlane.f32.xlu0 %v1407
    %v1454 = vpop.xlane.xlu0 %1453
    %1455 = vadd.xlane.f32.xlu0 %v1408
    %v1456 = vpop.xlane.xlu0 %1455
    %1457 = vadd.xlane.f32.xlu0 %v1409
    %v1458 = vpop.xlane.xlu0 %1457
    %1459 = vadd.xlane.f32.xlu0 %v1410
    %v1460 = vpop.xlane.xlu0 %1459
    %1461 = vadd.xlane.f32.xlu0 %v1411
    %v1462 = vpop.xlane.xlu0 %1461
    %1463 = vadd.xlane.f32.xlu0 %v1412
    %v1464 = vpop.xlane.xlu0 %1463
    %1465 = vadd.xlane.f32.xlu0 %v1413
    %v1466 = vpop.xlane.xlu0 %1465
    %1467 = vadd.xlane.f32.xlu0 %v1414
    %v1468 = vpop.xlane.xlu0 %1467
    %1469 = vadd.xlane.f32.xlu0 %v1415
    %v1470 = vpop.xlane.xlu0 %1469
    %1471 = vadd.xlane.f32.xlu0 %v1416
    %v1472 = vpop.xlane.xlu0 %1471
    %1473 = vadd.xlane.f32.xlu0 %v1417
    %v1474 = vpop.xlane.xlu0 %1473
    %1475 = vadd.xlane.f32.xlu0 %v1418
    %v1476 = vpop.xlane.xlu0 %1475
    %1477 = vadd.xlane.f32.xlu0 %v1419
    %v1478 = vpop.xlane.xlu0 %1477
    %1479 = vadd.xlane.f32.xlu0 %v1420
    %v1480 = vpop.xlane.xlu0 %1479
    %1481 = vadd.xlane.f32.xlu0 %v1421
    %v1482 = vpop.xlane.xlu0 %1481
    %1483 = vadd.xlane.f32.xlu0 %v1422
    %v1484 = vpop.xlane.xlu0 %1483
    %1485 = vadd.xlane.f32.xlu0 %v1423
    %v1486 = vpop.xlane.xlu0 %1485
    %1487 = vadd.xlane.f32.xlu0 %v1424
    %v1488 = vpop.xlane.xlu0 %1487
    %v1489 = vmul.f32 %v1426, %v496
    %v1490 = vmul.f32 %v1428, %v496
    %v1491 = vmul.f32 %v1430, %v496
    %v1492 = vmul.f32 %v1432, %v496
    %v1493 = vmul.f32 %v1434, %v496
    %v1494 = vmul.f32 %v1436, %v496
    %v1495 = vmul.f32 %v1438, %v496
    %v1496 = vmul.f32 %v1440, %v496
    %v1497 = vmul.f32 %v1442, %v496
    %v1498 = vmul.f32 %v1444, %v496
    %v1499 = vmul.f32 %v1446, %v496
    %v1500 = vmul.f32 %v1448, %v496
    %v1501 = vmul.f32 %v1450, %v496
    %v1502 = vmul.f32 %v1452, %v496
    %v1503 = vmul.f32 %v1454, %v496
    %v1504 = vmul.f32 %v1456, %v496
    %v1505 = vmul.f32 %v1458, %v496
    %v1506 = vmul.f32 %v1460, %v496
    %v1507 = vmul.f32 %v1462, %v496
    %v1508 = vmul.f32 %v1464, %v496
    %v1509 = vmul.f32 %v1466, %v496
    %v1510 = vmul.f32 %v1468, %v496
    %v1511 = vmul.f32 %v1470, %v496
    %v1512 = vmul.f32 %v1472, %v496
    %v1513 = vmul.f32 %v1474, %v496
    %v1514 = vmul.f32 %v1476, %v496
    %v1515 = vmul.f32 %v1478, %v496
    %v1516 = vmul.f32 %v1480, %v496
    %v1517 = vmul.f32 %v1482, %v496
    %v1518 = vmul.f32 %v1484, %v496
    %v1519 = vmul.f32 %v1486, %v496
    %v1520 = vmul.f32 %v1488, %v496
    %v1521 = vadd.f32 %v1489, 1e-05
    %v1522 = vadd.f32 %v1490, 1e-05
    %v1523 = vadd.f32 %v1491, 1e-05
    %v1524 = vadd.f32 %v1492, 1e-05
    %v1525 = vadd.f32 %v1493, 1e-05
    %v1526 = vadd.f32 %v1494, 1e-05
    %v1527 = vadd.f32 %v1495, 1e-05
    %v1528 = vadd.f32 %v1496, 1e-05
    %v1529 = vadd.f32 %v1497, 1e-05
    %v1530 = vadd.f32 %v1498, 1e-05
    %v1531 = vadd.f32 %v1499, 1e-05
    %v1532 = vadd.f32 %v1500, 1e-05
    %v1533 = vadd.f32 %v1501, 1e-05
    %v1534 = vadd.f32 %v1502, 1e-05
    %v1535 = vadd.f32 %v1503, 1e-05
    %v1536 = vadd.f32 %v1504, 1e-05
    %v1537 = vadd.f32 %v1505, 1e-05
    %v1538 = vadd.f32 %v1506, 1e-05
    %v1539 = vadd.f32 %v1507, 1e-05
    %v1540 = vadd.f32 %v1508, 1e-05
    %v1541 = vadd.f32 %v1509, 1e-05
    %v1542 = vadd.f32 %v1510, 1e-05
    %v1543 = vadd.f32 %v1511, 1e-05
    %v1544 = vadd.f32 %v1512, 1e-05
    %v1545 = vadd.f32 %v1513, 1e-05
    %v1546 = vadd.f32 %v1514, 1e-05
    %v1547 = vadd.f32 %v1515, 1e-05
    %v1548 = vadd.f32 %v1516, 1e-05
    %v1549 = vadd.f32 %v1517, 1e-05
    %v1550 = vadd.f32 %v1518, 1e-05
    %v1551 = vadd.f32 %v1519, 1e-05
    %v1552 = vadd.f32 %v1520, 1e-05
    %v1553 = vrsqrt.pop %v1521
    %v1554 = vrsqrt.pop %v1522
    %v1555 = vrsqrt.pop %v1523
    %v1556 = vrsqrt.pop %v1524
    %v1557 = vrsqrt.pop %v1525
    %v1558 = vrsqrt.pop %v1526
    %v1559 = vrsqrt.pop %v1527
    %v1560 = vrsqrt.pop %v1528
    %v1561 = vrsqrt.pop %v1529
    %v1562 = vrsqrt.pop %v1530
    %v1563 = vrsqrt.pop %v1531
    %v1564 = vrsqrt.pop %v1532
    %v1565 = vrsqrt.pop %v1533
    %v1566 = vrsqrt.pop %v1534
    %v1567 = vrsqrt.pop %v1535
    %v1568 = vrsqrt.pop %v1536
    %v1569 = vrsqrt.pop %v1537
    %v1570 = vrsqrt.pop %v1538
    %v1571 = vrsqrt.pop %v1539
    %v1572 = vrsqrt.pop %v1540
    %v1573 = vrsqrt.pop %v1541
    %v1574 = vrsqrt.pop %v1542
    %v1575 = vrsqrt.pop %v1543
    %v1576 = vrsqrt.pop %v1544
    %v1577 = vrsqrt.pop %v1545
    %v1578 = vrsqrt.pop %v1546
    %v1579 = vrsqrt.pop %v1547
    %v1580 = vrsqrt.pop %v1548
    %v1581 = vrsqrt.pop %v1549
    %v1582 = vrsqrt.pop %v1550
    %v1583 = vrsqrt.pop %v1551
    %v1584 = vrsqrt.pop %v1552
    %v1585 = vmul.f32 %v1361, %v1553
    %v1586 = vmul.f32 %v1362, %v1554
    %v1587 = vmul.f32 %v1363, %v1555
    %v1588 = vmul.f32 %v1364, %v1556
    %v1589 = vmul.f32 %v1365, %v1557
    %v1590 = vmul.f32 %v1366, %v1558
    %v1591 = vmul.f32 %v1367, %v1559
    %v1592 = vmul.f32 %v1368, %v1560
    %v1593 = vmul.f32 %v1369, %v1561
    %v1594 = vmul.f32 %v1370, %v1562
    %v1595 = vmul.f32 %v1371, %v1563
    %v1596 = vmul.f32 %v1372, %v1564
    %v1597 = vmul.f32 %v1373, %v1565
    %v1598 = vmul.f32 %v1374, %v1566
    %v1599 = vmul.f32 %v1375, %v1567
    %v1600 = vmul.f32 %v1376, %v1568
    %v1601 = vmul.f32 %v1377, %v1569
    %v1602 = vmul.f32 %v1378, %v1570
    %v1603 = vmul.f32 %v1379, %v1571
    %v1604 = vmul.f32 %v1380, %v1572
    %v1605 = vmul.f32 %v1381, %v1573
    %v1606 = vmul.f32 %v1382, %v1574
    %v1607 = vmul.f32 %v1383, %v1575
    %v1608 = vmul.f32 %v1384, %v1576
    %v1609 = vmul.f32 %v1385, %v1577
    %v1610 = vmul.f32 %v1386, %v1578
    %v1611 = vmul.f32 %v1387, %v1579
    %v1612 = vmul.f32 %v1388, %v1580
    %v1613 = vmul.f32 %v1389, %v1581
    %v1614 = vmul.f32 %v1390, %v1582
    %v1615 = vmul.f32 %v1391, %v1583
    %v1616 = vmul.f32 %v1392, %v1584
    %v1617 = vlaneseq
    %v1618 = vshrl.u32 %v1617, 7
    %v1619 = vsub.s32 0, %v1618
    %v1620 = vrot.slane %v1263, %v1619
    %v1621 = vmul.f32 %v1585, %v1620
    %v1622 = vmul.f32 %v1586, %v1620
    %v1623 = vmul.f32 %v1587, %v1620
    %v1624 = vmul.f32 %v1588, %v1620
    %v1625 = vmul.f32 %v1589, %v1620
    %v1626 = vmul.f32 %v1590, %v1620
    %v1627 = vmul.f32 %v1591, %v1620
    %v1628 = vmul.f32 %v1592, %v1620
    %v1629 = vmul.f32 %v1593, %v1620
    %v1630 = vmul.f32 %v1594, %v1620
    %v1631 = vmul.f32 %v1595, %v1620
    %v1632 = vmul.f32 %v1596, %v1620
    %v1633 = vmul.f32 %v1597, %v1620
    %v1634 = vmul.f32 %v1598, %v1620
    %v1635 = vmul.f32 %v1599, %v1620
    %v1636 = vmul.f32 %v1600, %v1620
    %v1637 = vmul.f32 %v1601, %v1620
    %v1638 = vmul.f32 %v1602, %v1620
    %v1639 = vmul.f32 %v1603, %v1620
    %v1640 = vmul.f32 %v1604, %v1620
    %v1641 = vmul.f32 %v1605, %v1620
    %v1642 = vmul.f32 %v1606, %v1620
    %v1643 = vmul.f32 %v1607, %v1620
    %v1644 = vmul.f32 %v1608, %v1620
    %v1645 = vmul.f32 %v1609, %v1620
    %v1646 = vmul.f32 %v1610, %v1620
    %v1647 = vmul.f32 %v1611, %v1620
    %v1648 = vmul.f32 %v1612, %v1620
    %v1649 = vmul.f32 %v1613, %v1620
    %v1650 = vmul.f32 %v1614, %v1620
    %v1651 = vmul.f32 %v1615, %v1620
    %v1652 = vmul.f32 %v1616, %v1620
    %v1653 = vlaneseq
    %v1654 = vshrl.u32 %v1653, 7
    %v1655 = vsub.s32 0, %v1654
    %v1656 = vrot.slane %v1264, %v1655
    %v1657 = vadd.f32 %v1621, %v1656
    %v1658 = vadd.f32 %v1622, %v1656
    %v1659 = vadd.f32 %v1623, %v1656
    %v1660 = vadd.f32 %v1624, %v1656
    %v1661 = vadd.f32 %v1625, %v1656
    %v1662 = vadd.f32 %v1626, %v1656
    %v1663 = vadd.f32 %v1627, %v1656
    %v1664 = vadd.f32 %v1628, %v1656
    %v1665 = vadd.f32 %v1629, %v1656
    %v1666 = vadd.f32 %v1630, %v1656
    %v1667 = vadd.f32 %v1631, %v1656
    %v1668 = vadd.f32 %v1632, %v1656
    %v1669 = vadd.f32 %v1633, %v1656
    %v1670 = vadd.f32 %v1634, %v1656
    %v1671 = vadd.f32 %v1635, %v1656
    %v1672 = vadd.f32 %v1636, %v1656
    %v1673 = vadd.f32 %v1637, %v1656
    %v1674 = vadd.f32 %v1638, %v1656
    %v1675 = vadd.f32 %v1639, %v1656
    %v1676 = vadd.f32 %v1640, %v1656
    %v1677 = vadd.f32 %v1641, %v1656
    %v1678 = vadd.f32 %v1642, %v1656
    %v1679 = vadd.f32 %v1643, %v1656
    %v1680 = vadd.f32 %v1644, %v1656
    %v1681 = vadd.f32 %v1645, %v1656
    %v1682 = vadd.f32 %v1646, %v1656
    %v1683 = vadd.f32 %v1647, %v1656
    %v1684 = vadd.f32 %v1648, %v1656
    %v1685 = vadd.f32 %v1649, %v1656
    %v1686 = vadd.f32 %v1650, %v1656
    %v1687 = vadd.f32 %v1651, %v1656
    %v1688 = vadd.f32 %v1652, %v1656
    %v1689 = vmul.f32 %v1657, 0.5
    %v1690 = vmul.f32 %v1658, 0.5
    %v1691 = vmul.f32 %v1659, 0.5
    %v1692 = vmul.f32 %v1660, 0.5
    %v1693 = vmul.f32 %v1661, 0.5
    %v1694 = vmul.f32 %v1662, 0.5
    %v1695 = vmul.f32 %v1663, 0.5
    %v1696 = vmul.f32 %v1664, 0.5
    %v1697 = vmul.f32 %v1665, 0.5
    %v1698 = vmul.f32 %v1666, 0.5
    %v1699 = vmul.f32 %v1667, 0.5
    %v1700 = vmul.f32 %v1668, 0.5
    %v1701 = vmul.f32 %v1669, 0.5
    %v1702 = vmul.f32 %v1670, 0.5
    %v1703 = vmul.f32 %v1671, 0.5
    %v1704 = vmul.f32 %v1672, 0.5
    %v1705 = vmul.f32 %v1673, 0.5
    %v1706 = vmul.f32 %v1674, 0.5
    %v1707 = vmul.f32 %v1675, 0.5
    %v1708 = vmul.f32 %v1676, 0.5
    %v1709 = vmul.f32 %v1677, 0.5
    %v1710 = vmul.f32 %v1678, 0.5
    %v1711 = vmul.f32 %v1679, 0.5
    %v1712 = vmul.f32 %v1680, 0.5
    %v1713 = vmul.f32 %v1681, 0.5
    %v1714 = vmul.f32 %v1682, 0.5
    %v1715 = vmul.f32 %v1683, 0.5
    %v1716 = vmul.f32 %v1684, 0.5
    %v1717 = vmul.f32 %v1685, 0.5
    %v1718 = vmul.f32 %v1686, 0.5
    %v1719 = vmul.f32 %v1687, 0.5
    %v1720 = vmul.f32 %v1688, 0.5
    %v1721 = vmul.f32 %v1657, 0.70710677
    %v1722 = vmul.f32 %v1658, 0.70710677
    %v1723 = vmul.f32 %v1659, 0.70710677
    %v1724 = vmul.f32 %v1660, 0.70710677
    %v1725 = vmul.f32 %v1661, 0.70710677
    %v1726 = vmul.f32 %v1662, 0.70710677
    %v1727 = vmul.f32 %v1663, 0.70710677
    %v1728 = vmul.f32 %v1664, 0.70710677
    %v1729 = vmul.f32 %v1665, 0.70710677
    %v1730 = vmul.f32 %v1666, 0.70710677
    %v1731 = vmul.f32 %v1667, 0.70710677
    %v1732 = vmul.f32 %v1668, 0.70710677
    %v1733 = vmul.f32 %v1669, 0.70710677
    %v1734 = vmul.f32 %v1670, 0.70710677
    %v1735 = vmul.f32 %v1671, 0.70710677
    %v1736 = vmul.f32 %v1672, 0.70710677
    %v1737 = vmul.f32 %v1673, 0.70710677
    %v1738 = vmul.f32 %v1674, 0.70710677
    %v1739 = vmul.f32 %v1675, 0.70710677
    %v1740 = vmul.f32 %v1676, 0.70710677
    %v1741 = vmul.f32 %v1677, 0.70710677
    %v1742 = vmul.f32 %v1678, 0.70710677
    %v1743 = vmul.f32 %v1679, 0.70710677
    %v1744 = vmul.f32 %v1680, 0.70710677
    %v1745 = vmul.f32 %v1681, 0.70710677
    %v1746 = vmul.f32 %v1682, 0.70710677
    %v1747 = vmul.f32 %v1683, 0.70710677
    %v1748 = vmul.f32 %v1684, 0.70710677
    %v1749 = vmul.f32 %v1685, 0.70710677
    %v1750 = vmul.f32 %v1686, 0.70710677
    %v1751 = vmul.f32 %v1687, 0.70710677
    %v1752 = vmul.f32 %v1688, 0.70710677
    %v1753 = verf.f32.pop %v1721
    %v1754 = verf.f32.pop %v1722
    %v1755 = verf.f32.pop %v1723
    %v1756 = verf.f32.pop %v1724
    %v1757 = verf.f32.pop %v1725
    %v1758 = verf.f32.pop %v1726
    %v1759 = verf.f32.pop %v1727
    %v1760 = verf.f32.pop %v1728
    %v1761 = verf.f32.pop %v1729
    %v1762 = verf.f32.pop %v1730
    %v1763 = verf.f32.pop %v1731
    %v1764 = verf.f32.pop %v1732
    %v1765 = verf.f32.pop %v1733
    %v1766 = verf.f32.pop %v1734
    %v1767 = verf.f32.pop %v1735
    %v1768 = verf.f32.pop %v1736
    %v1769 = verf.f32.pop %v1737
    %v1770 = verf.f32.pop %v1738
    %v1771 = verf.f32.pop %v1739
    %v1772 = verf.f32.pop %v1740
    %v1773 = verf.f32.pop %v1741
    %v1774 = verf.f32.pop %v1742
    %v1775 = verf.f32.pop %v1743
    %v1776 = verf.f32.pop %v1744
    %v1777 = verf.f32.pop %v1745
    %v1778 = verf.f32.pop %v1746
    %v1779 = verf.f32.pop %v1747
    %v1780 = verf.f32.pop %v1748
    %v1781 = verf.f32.pop %v1749
    %v1782 = verf.f32.pop %v1750
    %v1783 = verf.f32.pop %v1751
    %v1784 = verf.f32.pop %v1752
    %v1785 = vadd.f32 %v1753, 1.0
    %v1786 = vadd.f32 %v1754, 1.0
    %v1787 = vadd.f32 %v1755, 1.0
    %v1788 = vadd.f32 %v1756, 1.0
    %v1789 = vadd.f32 %v1757, 1.0
    %v1790 = vadd.f32 %v1758, 1.0
    %v1791 = vadd.f32 %v1759, 1.0
    %v1792 = vadd.f32 %v1760, 1.0
    %v1793 = vadd.f32 %v1761, 1.0
    %v1794 = vadd.f32 %v1762, 1.0
    %v1795 = vadd.f32 %v1763, 1.0
    %v1796 = vadd.f32 %v1764, 1.0
    %v1797 = vadd.f32 %v1765, 1.0
    %v1798 = vadd.f32 %v1766, 1.0
    %v1799 = vadd.f32 %v1767, 1.0
    %v1800 = vadd.f32 %v1768, 1.0
    %v1801 = vadd.f32 %v1769, 1.0
    %v1802 = vadd.f32 %v1770, 1.0
    %v1803 = vadd.f32 %v1771, 1.0
    %v1804 = vadd.f32 %v1772, 1.0
    %v1805 = vadd.f32 %v1773, 1.0
    %v1806 = vadd.f32 %v1774, 1.0
    %v1807 = vadd.f32 %v1775, 1.0
    %v1808 = vadd.f32 %v1776, 1.0
    %v1809 = vadd.f32 %v1777, 1.0
    %v1810 = vadd.f32 %v1778, 1.0
    %v1811 = vadd.f32 %v1779, 1.0
    %v1812 = vadd.f32 %v1780, 1.0
    %v1813 = vadd.f32 %v1781, 1.0
    %v1814 = vadd.f32 %v1782, 1.0
    %v1815 = vadd.f32 %v1783, 1.0
    %v1816 = vadd.f32 %v1784, 1.0
    %v1817 = vmul.f32 %v1689, %v1785
    %v1818 = vmul.f32 %v1690, %v1786
    %v1819 = vmul.f32 %v1691, %v1787
    %v1820 = vmul.f32 %v1692, %v1788
    %v1821 = vmul.f32 %v1693, %v1789
    %v1822 = vmul.f32 %v1694, %v1790
    %v1823 = vmul.f32 %v1695, %v1791
    %v1824 = vmul.f32 %v1696, %v1792
    %v1825 = vmul.f32 %v1697, %v1793
    %v1826 = vmul.f32 %v1698, %v1794
    %v1827 = vmul.f32 %v1699, %v1795
    %v1828 = vmul.f32 %v1700, %v1796
    %v1829 = vmul.f32 %v1701, %v1797
    %v1830 = vmul.f32 %v1702, %v1798
    %v1831 = vmul.f32 %v1703, %v1799
    %v1832 = vmul.f32 %v1704, %v1800
    %v1833 = vmul.f32 %v1705, %v1801
    %v1834 = vmul.f32 %v1706, %v1802
    %v1835 = vmul.f32 %v1707, %v1803
    %v1836 = vmul.f32 %v1708, %v1804
    %v1837 = vmul.f32 %v1709, %v1805
    %v1838 = vmul.f32 %v1710, %v1806
    %v1839 = vmul.f32 %v1711, %v1807
    %v1840 = vmul.f32 %v1712, %v1808
    %v1841 = vmul.f32 %v1713, %v1809
    %v1842 = vmul.f32 %v1714, %v1810
    %v1843 = vmul.f32 %v1715, %v1811
    %v1844 = vmul.f32 %v1716, %v1812
    %v1845 = vmul.f32 %v1717, %v1813
    %v1846 = vmul.f32 %v1718, %v1814
    %v1847 = vmul.f32 %v1719, %v1815
    %v1848 = vmul.f32 %v1720, %v1816
    %v1849 = vunpack.c.l.bf16 %v72
    %v1850 = vunpack.c.l.bf16 %v73
    %v1851 = vunpack.c.l.bf16 %v74
    %v1852 = vunpack.c.l.bf16 %v75
    %v1853 = vunpack.c.l.bf16 %v76
    %v1854 = vunpack.c.l.bf16 %v77
    %v1855 = vunpack.c.l.bf16 %v78
    %v1856 = vunpack.c.l.bf16 %v79
    %v1857 = vunpack.c.l.bf16 %v80
    %v1858 = vunpack.c.l.bf16 %v81
    %v1859 = vunpack.c.l.bf16 %v82
    %v1860 = vunpack.c.l.bf16 %v83
    %v1861 = vunpack.c.l.bf16 %v84
    %v1862 = vunpack.c.l.bf16 %v85
    %v1863 = vunpack.c.l.bf16 %v86
    %v1864 = vunpack.c.l.bf16 %v87
    %v1865 = vunpack.c.l.bf16 %v88
    %v1866 = vunpack.c.l.bf16 %v89
    %v1867 = vunpack.c.l.bf16 %v90
    %v1868 = vunpack.c.l.bf16 %v91
    %v1869 = vunpack.c.l.bf16 %v92
    %v1870 = vunpack.c.l.bf16 %v93
    %v1871 = vunpack.c.l.bf16 %v94
    %v1872 = vunpack.c.l.bf16 %v95
    %v1873 = vunpack.c.l.bf16 %v96
    %v1874 = vunpack.c.l.bf16 %v97
    %v1875 = vunpack.c.l.bf16 %v98
    %v1876 = vunpack.c.l.bf16 %v99
    %v1877 = vunpack.c.l.bf16 %v100
    %v1878 = vunpack.c.l.bf16 %v101
    %v1879 = vunpack.c.l.bf16 %v102
    %v1880 = vunpack.c.l.bf16 %v103
    %v1881 = vadd.f32 %v1849, %v1817
    %v1882 = vadd.f32 %v1850, %v1818
    %v1883 = vadd.f32 %v1851, %v1819
    %v1884 = vadd.f32 %v1852, %v1820
    %v1885 = vadd.f32 %v1853, %v1821
    %v1886 = vadd.f32 %v1854, %v1822
    %v1887 = vadd.f32 %v1855, %v1823
    %v1888 = vadd.f32 %v1856, %v1824
    %v1889 = vadd.f32 %v1857, %v1825
    %v1890 = vadd.f32 %v1858, %v1826
    %v1891 = vadd.f32 %v1859, %v1827
    %v1892 = vadd.f32 %v1860, %v1828
    %v1893 = vadd.f32 %v1861, %v1829
    %v1894 = vadd.f32 %v1862, %v1830
    %v1895 = vadd.f32 %v1863, %v1831
    %v1896 = vadd.f32 %v1864, %v1832
    %v1897 = vadd.f32 %v1865, %v1833
    %v1898 = vadd.f32 %v1866, %v1834
    %v1899 = vadd.f32 %v1867, %v1835
    %v1900 = vadd.f32 %v1868, %v1836
    %v1901 = vadd.f32 %v1869, %v1837
    %v1902 = vadd.f32 %v1870, %v1838
    %v1903 = vadd.f32 %v1871, %v1839
    %v1904 = vadd.f32 %v1872, %v1840
    %v1905 = vadd.f32 %v1873, %v1841
    %v1906 = vadd.f32 %v1874, %v1842
    %v1907 = vadd.f32 %v1875, %v1843
    %v1908 = vadd.f32 %v1876, %v1844
    %v1909 = vadd.f32 %v1877, %v1845
    %v1910 = vadd.f32 %v1878, %v1846
    %v1911 = vadd.f32 %v1879, %v1847
    %v1912 = vadd.f32 %v1880, %v1848
    %v1913 = vmul.f32 %v1881, 0.7072136
    %v1914 = vmul.f32 %v1882, 0.7072136
    %v1915 = vmul.f32 %v1883, 0.7072136
    %v1916 = vmul.f32 %v1884, 0.7072136
    %v1917 = vmul.f32 %v1885, 0.7072136
    %v1918 = vmul.f32 %v1886, 0.7072136
    %v1919 = vmul.f32 %v1887, 0.7072136
    %v1920 = vmul.f32 %v1888, 0.7072136
    %v1921 = vmul.f32 %v1889, 0.7072136
    %v1922 = vmul.f32 %v1890, 0.7072136
    %v1923 = vmul.f32 %v1891, 0.7072136
    %v1924 = vmul.f32 %v1892, 0.7072136
    %v1925 = vmul.f32 %v1893, 0.7072136
    %v1926 = vmul.f32 %v1894, 0.7072136
    %v1927 = vmul.f32 %v1895, 0.7072136
    %v1928 = vmul.f32 %v1896, 0.7072136
    %v1929 = vmul.f32 %v1897, 0.7072136
    %v1930 = vmul.f32 %v1898, 0.7072136
    %v1931 = vmul.f32 %v1899, 0.7072136
    %v1932 = vmul.f32 %v1900, 0.7072136
    %v1933 = vmul.f32 %v1901, 0.7072136
    %v1934 = vmul.f32 %v1902, 0.7072136
    %v1935 = vmul.f32 %v1903, 0.7072136
    %v1936 = vmul.f32 %v1904, 0.7072136
    %v1937 = vmul.f32 %v1905, 0.7072136
    %v1938 = vmul.f32 %v1906, 0.7072136
    %v1939 = vmul.f32 %v1907, 0.7072136
    %v1940 = vmul.f32 %v1908, 0.7072136
    %v1941 = vmul.f32 %v1909, 0.7072136
    %v1942 = vmul.f32 %v1910, 0.7072136
    %v1943 = vmul.f32 %v1911, 0.7072136
    %v1944 = vmul.f32 %v1912, 0.7072136
    %1945 = vst [vmem:[#allocation10] sm:$0xff] %v1913
    %1946 = vst [vmem:[#allocation10 + $0x8] sm:$0xff] %v1914
    %1947 = vst [vmem:[#allocation10 + $0x10] sm:$0xff] %v1915
    %1948 = vst [vmem:[#allocation10 + $0x18] sm:$0xff] %v1916
    %1949 = vst [vmem:[#allocation10 + $0x20] sm:$0xff] %v1917
    %1950 = vst [vmem:[#allocation10 + $0x28] sm:$0xff] %v1918
    %1951 = vst [vmem:[#allocation10 + $0x30] sm:$0xff] %v1919
    %1952 = vst [vmem:[#allocation10 + $0x38] sm:$0xff] %v1920
    %1953 = vst [vmem:[#allocation10 + $0x40] sm:$0xff] %v1921
    %1954 = vst [vmem:[#allocation10 + $0x48] sm:$0xff] %v1922
    %1955 = vst [vmem:[#allocation10 + $0x50] sm:$0xff] %v1923
    %1956 = vst [vmem:[#allocation10 + $0x58] sm:$0xff] %v1924
    %1957 = vst [vmem:[#allocation10 + $0x60] sm:$0xff] %v1925
    %1958 = vst [vmem:[#allocation10 + $0x68] sm:$0xff] %v1926
    %1959 = vst [vmem:[#allocation10 + $0x70] sm:$0xff] %v1927
    %1960 = vst [vmem:[#allocation10 + $0x78] sm:$0xff] %v1928
    %1961 = vst [vmem:[#allocation10 + $0x80] sm:$0xff] %v1929
    %1962 = vst [vmem:[#allocation10 + $0x88] sm:$0xff] %v1930
    %1963 = vst [vmem:[#allocation10 + $0x90] sm:$0xff] %v1931
    %1964 = vst [vmem:[#allocation10 + $0x98] sm:$0xff] %v1932
    %1965 = vst [vmem:[#allocation10 + $0xa0] sm:$0xff] %v1933
    %1966 = vst [vmem:[#allocation10 + $0xa8] sm:$0xff] %v1934
    %1967 = vst [vmem:[#allocation10 + $0xb0] sm:$0xff] %v1935
    %1968 = vst [vmem:[#allocation10 + $0xb8] sm:$0xff] %v1936
    %1969 = vst [vmem:[#allocation10 + $0xc0] sm:$0xff] %v1937
    %1970 = vst [vmem:[#allocation10 + $0xc8] sm:$0xff] %v1938
    %1971 = vst [vmem:[#allocation10 + $0xd0] sm:$0xff] %v1939
    %1972 = vst [vmem:[#allocation10 + $0xd8] sm:$0xff] %v1940
    %1973 = vst [vmem:[#allocation10 + $0xe0] sm:$0xff] %v1941
    %1974 = vst [vmem:[#allocation10 + $0xe8] sm:$0xff] %v1942
    %1975 = vst [vmem:[#allocation10 + $0xf0] sm:$0xff] %v1943
    %1976 = vst [vmem:[#allocation10 + $0xf8] sm:$0xff] %v1944
    // Predicated region
    $region34: #{tpu_custom_call.1} parent=1 // pred_check
      _
    $region35: #{tpu_custom_call.1} parent=1 // pred_check_branch
      %1978 = sbr.rel (0) target = $region37
    $region36: #{tpu_custom_call.1} parent=1 // pred_region
      %s1980 = ssub.s32 4096, 4096
      %1981 = vsyncadd [#allocation4], %s1980
      %s1982 = sshll.u32 [#allocation10], 4
      %s1983 = int_to_ptr.vmem [resolvable:$true] %s1982
      %1988 = dma.vmem_to_hbm [thread:$0]  %s1983, 4096, %s4, [#allocation4], 128, 128, 8
    $region37: #{tpu_custom_call.1} parent=1 // pred_fallthru
      _
    // Predicated region
    $region38: #{tpu_custom_call.1} parent=1 // pred_check
      _
    $region39: #{tpu_custom_call.1} parent=1 // pred_check_branch
      %1990 = sbr.rel (0) target = $region41
    $region40: #{tpu_custom_call.1} parent=1 // pred_region
      %1991 = dma.done [#allocation4], 4096
    $region41: #{tpu_custom_call.1} parent=1 // pred_fallthru
      _
    %1992 = vsyncpa [#allocation3], 1
    %1993 = vsyncpa [#allocation6], 1
    %1994 = vsyncpa [#allocation9], 1
    %1995 = vsyncpa [#allocation4], 1

</llo_original>
